<compile_context>
chip_gen: v7x
topology: tpu7x:2x2x1
jax: 0.10.0
libtpu: 0.0.40
codegen_flags: <defaults>
</compile_context>

<pallas_src>
import math

import jax
import jax.numpy as jnp
from jax.experimental import pallas as pl
from jax.experimental.pallas import tpu as pltpu

# ----------------------------- model dimensions -----------------------------
B, T, F = 2, 512, 80         # batch, mel frames, mel bins
SUB = 4                      # subsampling factor (emulated by frame stacking)
T4 = T // SUB                # 128 encoder frames per batch element
F4 = F * SUB                 # 320 stacked-feature dim
BT = B * T4                  # 256 total activation rows
TM = T4                      # row-tile = one utterance (per-tile attention)
D = 128                      # encoder d_model
FF = 256                     # feed-forward hidden dim
V = 128                      # vocab size (index 0 = CTC blank)
EPS = 1e-5

# Row layout of the packed small-vector array `vecs` (shape (8, 256), f32):
#   0: b1[:D]     1: ln1_g[:D]   2: ln1_b[:D]   3: ln2_g[:D]
#   4: ln2_b[:D]  5: bff2[:D]    6: b_vocab[:V] 7: bff1[:FF]


# ------------------------------- fused kernel --------------------------------
def fused_asr_kernel(x_ref,
                     w1_ref, wq_ref, wk_ref, wv_ref, wo_ref,
                     wff1_ref, wff2_ref, w_vocab_ref,
                     vecs_ref,
                     logp_ref):
    """One utterance tile: stacked mel -> encoder block -> CTC log-probs."""
    x = x_ref[...]                                            # (TM, F4) bf16

    # packed per-layer vectors (static, lane-aligned slices)
    b1      = vecs_ref[0:1, :D]
    ln1_g   = vecs_ref[1:2, :D]
    ln1_b   = vecs_ref[2:3, :D]
    ln2_g   = vecs_ref[3:4, :D]
    ln2_b   = vecs_ref[4:5, :D]
    bff2    = vecs_ref[5:6, :D]
    b_vocab = vecs_ref[6:7, :V]
    bff1    = vecs_ref[7:8, :FF]

    # --- emulated conv subsampling: stacked-frame projection + ReLU ---
    h = jnp.dot(x, w1_ref[...], preferred_element_type=jnp.float32) + b1
    h = jnp.maximum(h, 0.0)                                   # (TM, D) f32

    # --- layer norm 1 (one-pass stats, f32 VPU math) ---
    mu = jnp.mean(h, axis=-1, keepdims=True)
    msq = jnp.mean(h * h, axis=-1, keepdims=True)
    xn = (h - mu) * jax.lax.rsqrt(msq - mu * mu + EPS)
    xn = xn * ln1_g + ln1_b
    xn_bf = xn.astype(jnp.bfloat16)

    # --- single-head self-attention within the utterance (no cross-batch) ---
    q = jnp.dot(xn_bf, wq_ref[...], preferred_element_type=jnp.float32)
    k = jnp.dot(xn_bf, wk_ref[...], preferred_element_type=jnp.float32)
    v = jnp.dot(xn_bf, wv_ref[...], preferred_element_type=jnp.float32)

    # q @ k^T with the transpose folded into the contraction (no XLU transpose),
    # bf16 operands so the MXU runs a native bf16 pass.
    s = jax.lax.dot_general(
        q.astype(jnp.bfloat16), k.astype(jnp.bfloat16),
        (((1,), (1,)), ((), ())),
        preferred_element_type=jnp.float32) * (1.0 / math.sqrt(D))

    s_max = jnp.max(s, axis=-1, keepdims=True)
    p = jnp.exp(s - s_max)
    # approx reciprocal runs on the EUP slot; use approx=False for bit parity.
    p = p * pl.reciprocal(jnp.sum(p, axis=-1, keepdims=True), approx=True)
    att = jnp.dot(p.astype(jnp.bfloat16), v.astype(jnp.bfloat16),
                  preferred_element_type=jnp.float32)
    h = h + jnp.dot(att.astype(jnp.bfloat16), wo_ref[...],
                    preferred_element_type=jnp.float32)

    # --- layer norm 2 (one-pass stats) ---
    mu2 = jnp.mean(h, axis=-1, keepdims=True)
    msq2 = jnp.mean(h * h, axis=-1, keepdims=True)
    xn2 = (h - mu2) * jax.lax.rsqrt(msq2 - mu2 * mu2 + EPS)
    xn2 = xn2 * ln2_g + ln2_b

    # --- feed-forward ---
    ff = jnp.dot(xn2.astype(jnp.bfloat16), wff1_ref[...],
                 preferred_element_type=jnp.float32) + bff1
    ff = jnp.maximum(ff, 0.0)
    ff = jnp.dot(ff.astype(jnp.bfloat16), wff2_ref[...],
                 preferred_element_type=jnp.float32) + bff2
    h = h + ff

    # --- CTC head: logits -> exact log_softmax (lane-dense (TM, V) output) ---
    logits = jnp.dot(h.astype(jnp.bfloat16), w_vocab_ref[...],
                     preferred_element_type=jnp.float32) + b_vocab
    m = jnp.max(logits, axis=-1, keepdims=True)
    e = jnp.exp(logits - m)
    logp_ref[...] = logits - m - jnp.log(jnp.sum(e, axis=-1, keepdims=True))


# ------------------------------ pallas wrapper --------------------------------
def _resident(shape):
    """Weight block: constant index_map -> fetched once, VMEM-resident."""
    return pl.BlockSpec(shape, lambda i: (0,) * len(shape))


def _cost_estimate():
    mm_k = F4 * D + 4 * D * D + D * FF + FF * D + D * V
    flops = 2 * BT * mm_k + 2 * B * (2 * T4 * T4 * D)          # proj + attn dots
    transcendentals = B * T4 * T4 + BT * V + 3 * BT            # exp / rsqrt / log
    bytes_accessed = (BT * F4 * 2            # bf16 activations in
                      + mm_k * 2             # bf16 weights
                      + 8 * 256 * 4          # packed vectors
                      + BT * V * 4)          # f32 log-probs out
    return pl.CostEstimate(flops=flops, transcendentals=transcendentals,
                           bytes_accessed=bytes_accessed)


def fused_forward(x_stacked, params):
    n_tiles = BT // TM                                          # == B
    return pl.pallas_call(
        fused_asr_kernel,
        out_shape=jax.ShapeDtypeStruct((BT, V), jnp.float32),
        grid=(n_tiles,),
        in_specs=[pl.BlockSpec((TM, F4), lambda i: (i, 0)),     # activation tile
                  _resident((F4, D)),
                  _resident((D, D)), _resident((D, D)),
                  _resident((D, D)), _resident((D, D)),
                  _resident((D, FF)), _resident((FF, D)),
                  _resident((D, V)),
                  _resident((8, 256))],
        out_specs=pl.BlockSpec((TM, V), lambda i: (i, 0)),
        compiler_params=pltpu.CompilerParams(
            dimension_semantics=("parallel",)),                 # 2 TCs on v7x
        cost_estimate=_cost_estimate(),
    )(x_stacked,
      params["w1"],
      params["wq"], params["wk"], params["wv"], params["wo"],
      params["wff1"], params["wff2"],
      params["w_vocab"],
      params["vecs"])


# ------------------------------- parameters ---------------------------------
def init_params(key):
    ks = jax.random.split(key, 8)
    s = 0.02
    bf = jnp.bfloat16

    def w(k, shape):
        return (s * jax.random.normal(k, shape, jnp.float32)).astype(bf)

    # packed small vectors (f32): biases zero, LN gammas one.
    vecs = jnp.zeros((8, 256), jnp.float32)
    vecs = vecs.at[1, :D].set(1.0)   # ln1_g
    vecs = vecs.at[3, :D].set(1.0)   # ln2_g

    return {
        "w1": w(ks[0], (F4, D)),
        "wq": w(ks[1], (D, D)),
        "wk": w(ks[2], (D, D)),
        "wv": w(ks[3], (D, D)),
        "wo": w(ks[4], (D, D)),
        "wff1": w(ks[5], (D, FF)),
        "wff2": w(ks[6], (FF, D)),
        "w_vocab": w(ks[7], (D, V)),
        "vecs": vecs,
    }


# ------------------------------- forward pass --------------------------------
def nemo_forward(mel_features, params):
    """mel_features: [B, T, F] float32 (time-major).  Returns greedy CTC tokens."""
    # Emulated conv subsampling: stack SUB consecutive frames and fold batch
    # into the matmul row axis; cast to bf16 (first dot consumes bf16 anyway,
    # halves the input DMA).
    x_stacked = mel_features.reshape(BT, F4).astype(jnp.bfloat16)

    log_probs = fused_forward(x_stacked, params).reshape(B, T4, V)

    # Greedy argmax + CTC collapse mask (remove blanks and repeats) — JAX glue,
    # keeps the kernel output lane-dense.
    tok = jnp.argmax(log_probs, axis=-1).astype(jnp.int32)    # [B, T4]
    prev = jnp.concatenate([jnp.full((B, 1), -1, jnp.int32), tok[:, :-1]], axis=1)
    keep = (tok != 0) & (tok != prev)

    # TODO(synk): BPE detokenization of token ids to a text string is host-side
    # string processing and has no Pallas equivalent.
    return {"transcription": tok, "keep_mask": keep, "log_probs": log_probs}


# --------------------------------- main --------------------------------------
if __name__ == "__main__":
    key = jax.random.PRNGKey(0)
    k_params, k_feat = jax.random.split(key)
    params = init_params(k_params)

    # Synthetic mel features standing in for the preprocessed audio at `path`.
    mel = jax.random.normal(k_feat, (B, T, F), jnp.float32)

    out = nemo_forward(mel, params)
    jax.block_until_ready(out["transcription"])
    jax.block_until_ready(out["log_probs"])

    assert out["transcription"].shape == (B, T4)
    assert out["keep_mask"].shape == (B, T4)
    assert out["log_probs"].shape == (B, T4, V)
    assert bool(jnp.all(jnp.isfinite(out["log_probs"])))
    print("KERNEL_OK")
</pallas_src>

<mosaic_0001>
module attributes {stable_mosaic.version = 11 : i64} {
  func.func @fused_asr_kernel(%arg0: i32, %arg1: memref<128x320xbf16, #tpu.memory_space<vmem>>, %arg2: memref<320x128xbf16, #tpu.memory_space<vmem>>, %arg3: memref<128x128xbf16, #tpu.memory_space<vmem>>, %arg4: memref<128x128xbf16, #tpu.memory_space<vmem>>, %arg5: memref<128x128xbf16, #tpu.memory_space<vmem>>, %arg6: memref<128x128xbf16, #tpu.memory_space<vmem>>, %arg7: memref<128x256xbf16, #tpu.memory_space<vmem>>, %arg8: memref<256x128xbf16, #tpu.memory_space<vmem>>, %arg9: memref<128x128xbf16, #tpu.memory_space<vmem>>, %arg10: memref<8x256xf32, #tpu.memory_space<vmem>>, %arg11: memref<128x128xf32, #tpu.memory_space<vmem>>) attributes {dimension_semantics = [#tpu.dimension_semantics<parallel>], iteration_bounds = array<i64: 2>, scalar_prefetch = 0 : i64, scratch_operands = 0 : i64, tpu.core_type = #tpu.core_type<tc>, window_params = [{transform_indices = @transform_0, window_bounds = array<i64: 128, 320>}, {pipeline_mode = #tpu.pipeline_mode<synchronous>, transform_indices = @transform_1, window_bounds = array<i64: 320, 128>}, {pipeline_mode = #tpu.pipeline_mode<synchronous>, transform_indices = @transform_2, window_bounds = array<i64: 128, 128>}, {pipeline_mode = #tpu.pipeline_mode<synchronous>, transform_indices = @transform_3, window_bounds = array<i64: 128, 128>}, {pipeline_mode = #tpu.pipeline_mode<synchronous>, transform_indices = @transform_4, window_bounds = array<i64: 128, 128>}, {pipeline_mode = #tpu.pipeline_mode<synchronous>, transform_indices = @transform_5, window_bounds = array<i64: 128, 128>}, {pipeline_mode = #tpu.pipeline_mode<synchronous>, transform_indices = @transform_6, window_bounds = array<i64: 128, 256>}, {pipeline_mode = #tpu.pipeline_mode<synchronous>, transform_indices = @transform_7, window_bounds = array<i64: 256, 128>}, {pipeline_mode = #tpu.pipeline_mode<synchronous>, transform_indices = @transform_8, window_bounds = array<i64: 128, 128>}, {pipeline_mode = #tpu.pipeline_mode<synchronous>, transform_indices = @transform_9, window_bounds = array<i64: 8, 256>}, {transform_indices = @transform_10, window_bounds = array<i64: 128, 128>}]} {
    %c0 = arith.constant 0 : index
    %c0_0 = arith.constant 0 : index
    %0 = vector.load %arg1[%c0, %c0_0] : memref<128x320xbf16, #tpu.memory_space<vmem>>, vector<128x320xbf16>
    %c0_1 = arith.constant 0 : index
    %c0_2 = arith.constant 0 : index
    %1 = vector.load %arg10[%c0_1, %c0_2] : memref<8x256xf32, #tpu.memory_space<vmem>>, vector<1x128xf32>
    %c1 = arith.constant 1 : index
    %c0_3 = arith.constant 0 : index
    %2 = vector.load %arg10[%c1, %c0_3] : memref<8x256xf32, #tpu.memory_space<vmem>>, vector<1x128xf32>
    %c2 = arith.constant 2 : index
    %c0_4 = arith.constant 0 : index
    %3 = vector.load %arg10[%c2, %c0_4] : memref<8x256xf32, #tpu.memory_space<vmem>>, vector<1x128xf32>
    %c3 = arith.constant 3 : index
    %c0_5 = arith.constant 0 : index
    %4 = vector.load %arg10[%c3, %c0_5] : memref<8x256xf32, #tpu.memory_space<vmem>>, vector<1x128xf32>
    %c4 = arith.constant 4 : index
    %c0_6 = arith.constant 0 : index
    %5 = vector.load %arg10[%c4, %c0_6] : memref<8x256xf32, #tpu.memory_space<vmem>>, vector<1x128xf32>
    %c5 = arith.constant 5 : index
    %c0_7 = arith.constant 0 : index
    %6 = vector.load %arg10[%c5, %c0_7] : memref<8x256xf32, #tpu.memory_space<vmem>>, vector<1x128xf32>
    %c6 = arith.constant 6 : index
    %c0_8 = arith.constant 0 : index
    %7 = vector.load %arg10[%c6, %c0_8] : memref<8x256xf32, #tpu.memory_space<vmem>>, vector<1x128xf32>
    %c7 = arith.constant 7 : index
    %c0_9 = arith.constant 0 : index
    %8 = vector.load %arg10[%c7, %c0_9] : memref<8x256xf32, #tpu.memory_space<vmem>>, vector<1x256xf32>
    %c0_10 = arith.constant 0 : index
    %c0_11 = arith.constant 0 : index
    %9 = vector.load %arg2[%c0_10, %c0_11] : memref<320x128xbf16, #tpu.memory_space<vmem>>, vector<320x128xbf16>
    %cst = arith.constant dense<0.000000e+00> : vector<128x128xf32>
    %10 = tpu.matmul %0, %9, %cst {dimension_numbers = #tpu.dot_dimension_numbers<[1], [0], [0], [1], [0, 0, 1, 1], [], []>} : vector<128x320xbf16>, vector<320x128xbf16>, vector<128x128xf32> -> vector<128x128xf32>
    %11 = vector.broadcast %1 : vector<1x128xf32> to vector<128x128xf32>
    %12 = arith.addf %10, %11 : vector<128x128xf32>
    %cst_12 = arith.constant 0.000000e+00 : f32
    %13 = vector.broadcast %cst_12 : f32 to vector<128x128xf32>
    %14 = arith.maximumf %12, %13 : vector<128x128xf32>
    %cst_13 = arith.constant dense<0.000000e+00> : vector<128xf32>
    %15 = vector.multi_reduction <add>, %14, %cst_13 [1] : vector<128x128xf32> to vector<128xf32>
    %16 = vector.shape_cast %15 : vector<128xf32> to vector<128x1xf32>
    %cst_14 = arith.constant 1.280000e+02 : f32
    %17 = vector.broadcast %cst_14 : f32 to vector<128x1xf32>
    %18 = arith.divf %16, %17 : vector<128x1xf32>
    %19 = arith.mulf %14, %14 : vector<128x128xf32>
    %cst_15 = arith.constant dense<0.000000e+00> : vector<128xf32>
    %20 = vector.multi_reduction <add>, %19, %cst_15 [1] : vector<128x128xf32> to vector<128xf32>
    %21 = vector.shape_cast %20 : vector<128xf32> to vector<128x1xf32>
    %cst_16 = arith.constant 1.280000e+02 : f32
    %22 = vector.broadcast %cst_16 : f32 to vector<128x1xf32>
    %23 = arith.divf %21, %22 : vector<128x1xf32>
    %24 = vector.broadcast %18 : vector<128x1xf32> to vector<128x128xf32>
    %25 = arith.subf %14, %24 : vector<128x128xf32>
    %26 = arith.mulf %18, %18 : vector<128x1xf32>
    %27 = arith.subf %23, %26 : vector<128x1xf32>
    %cst_17 = arith.constant 9.99999974E-6 : f32
    %28 = vector.broadcast %cst_17 : f32 to vector<128x1xf32>
    %29 = arith.addf %27, %28 : vector<128x1xf32>
    %30 = math.rsqrt %29 : vector<128x1xf32>
    %31 = vector.broadcast %30 : vector<128x1xf32> to vector<128x128xf32>
    %32 = arith.mulf %25, %31 : vector<128x128xf32>
    %33 = vector.broadcast %2 : vector<1x128xf32> to vector<128x128xf32>
    %34 = arith.mulf %32, %33 : vector<128x128xf32>
    %35 = vector.broadcast %3 : vector<1x128xf32> to vector<128x128xf32>
    %36 = arith.addf %34, %35 : vector<128x128xf32>
    %37 = arith.truncf %36 : vector<128x128xf32> to vector<128x128xbf16>
    %c0_18 = arith.constant 0 : index
    %c0_19 = arith.constant 0 : index
    %38 = vector.load %arg3[%c0_18, %c0_19] : memref<128x128xbf16, #tpu.memory_space<vmem>>, vector<128x128xbf16>
    %cst_20 = arith.constant dense<0.000000e+00> : vector<128x128xf32>
    %39 = tpu.matmul %37, %38, %cst_20 {dimension_numbers = #tpu.dot_dimension_numbers<[1], [0], [0], [1], [0, 0, 1, 1], [], []>} : vector<128x128xbf16>, vector<128x128xbf16>, vector<128x128xf32> -> vector<128x128xf32>
    %c0_21 = arith.constant 0 : index
    %c0_22 = arith.constant 0 : index
    %40 = vector.load %arg4[%c0_21, %c0_22] : memref<128x128xbf16, #tpu.memory_space<vmem>>, vector<128x128xbf16>
    %cst_23 = arith.constant dense<0.000000e+00> : vector<128x128xf32>
    %41 = tpu.matmul %37, %40, %cst_23 {dimension_numbers = #tpu.dot_dimension_numbers<[1], [0], [0], [1], [0, 0, 1, 1], [], []>} : vector<128x128xbf16>, vector<128x128xbf16>, vector<128x128xf32> -> vector<128x128xf32>
    %c0_24 = arith.constant 0 : index
    %c0_25 = arith.constant 0 : index
    %42 = vector.load %arg5[%c0_24, %c0_25] : memref<128x128xbf16, #tpu.memory_space<vmem>>, vector<128x128xbf16>
    %cst_26 = arith.constant dense<0.000000e+00> : vector<128x128xf32>
    %43 = tpu.matmul %37, %42, %cst_26 {dimension_numbers = #tpu.dot_dimension_numbers<[1], [0], [0], [1], [0, 0, 1, 1], [], []>} : vector<128x128xbf16>, vector<128x128xbf16>, vector<128x128xf32> -> vector<128x128xf32>
    %44 = arith.truncf %39 : vector<128x128xf32> to vector<128x128xbf16>
    %45 = arith.truncf %41 : vector<128x128xf32> to vector<128x128xbf16>
    %cst_27 = arith.constant dense<0.000000e+00> : vector<128x128xf32>
    %46 = tpu.matmul %44, %45, %cst_27 {dimension_numbers = #tpu.dot_dimension_numbers<[1], [1], [0], [0], [0, 0, 1, 0], [], []>} : vector<128x128xbf16>, vector<128x128xbf16>, vector<128x128xf32> -> vector<128x128xf32>
    %cst_28 = arith.constant 0.0883883461 : f32
    %47 = vector.broadcast %cst_28 : f32 to vector<128x128xf32>
    %48 = arith.mulf %46, %47 : vector<128x128xf32>
    %cst_29 = arith.constant dense<0xFF800000> : vector<128xf32>
    %49 = vector.multi_reduction <maximumf>, %48, %cst_29 [1] : vector<128x128xf32> to vector<128xf32>
    %50 = vector.shape_cast %49 : vector<128xf32> to vector<128x1xf32>
    %51 = vector.broadcast %50 : vector<128x1xf32> to vector<128x128xf32>
    %52 = arith.subf %48, %51 : vector<128x128xf32>
    %53 = math.exp %52 : vector<128x128xf32>
    %cst_30 = arith.constant dense<0.000000e+00> : vector<128xf32>
    %54 = vector.multi_reduction <add>, %53, %cst_30 [1] : vector<128x128xf32> to vector<128xf32>
    %55 = vector.shape_cast %54 : vector<128xf32> to vector<128x1xf32>
    %56 = tpu.reciprocal %55 {approx = true} : vector<128x1xf32> -> vector<128x1xf32>
    %57 = vector.broadcast %56 : vector<128x1xf32> to vector<128x128xf32>
    %58 = arith.mulf %53, %57 : vector<128x128xf32>
    %59 = arith.truncf %58 : vector<128x128xf32> to vector<128x128xbf16>
    %60 = arith.truncf %43 : vector<128x128xf32> to vector<128x128xbf16>
    %cst_31 = arith.constant dense<0.000000e+00> : vector<128x128xf32>
    %61 = tpu.matmul %59, %60, %cst_31 {dimension_numbers = #tpu.dot_dimension_numbers<[1], [0], [0], [1], [0, 0, 1, 1], [], []>} : vector<128x128xbf16>, vector<128x128xbf16>, vector<128x128xf32> -> vector<128x128xf32>
    %62 = arith.truncf %61 : vector<128x128xf32> to vector<128x128xbf16>
    %c0_32 = arith.constant 0 : index
    %c0_33 = arith.constant 0 : index
    %63 = vector.load %arg6[%c0_32, %c0_33] : memref<128x128xbf16, #tpu.memory_space<vmem>>, vector<128x128xbf16>
    %cst_34 = arith.constant dense<0.000000e+00> : vector<128x128xf32>
    %64 = tpu.matmul %62, %63, %cst_34 {dimension_numbers = #tpu.dot_dimension_numbers<[1], [0], [0], [1], [0, 0, 1, 1], [], []>} : vector<128x128xbf16>, vector<128x128xbf16>, vector<128x128xf32> -> vector<128x128xf32>
    %65 = arith.addf %14, %64 : vector<128x128xf32>
    %cst_35 = arith.constant dense<0.000000e+00> : vector<128xf32>
    %66 = vector.multi_reduction <add>, %65, %cst_35 [1] : vector<128x128xf32> to vector<128xf32>
    %67 = vector.shape_cast %66 : vector<128xf32> to vector<128x1xf32>
    %cst_36 = arith.constant 1.280000e+02 : f32
    %68 = vector.broadcast %cst_36 : f32 to vector<128x1xf32>
    %69 = arith.divf %67, %68 : vector<128x1xf32>
    %70 = arith.mulf %65, %65 : vector<128x128xf32>
    %cst_37 = arith.constant dense<0.000000e+00> : vector<128xf32>
    %71 = vector.multi_reduction <add>, %70, %cst_37 [1] : vector<128x128xf32> to vector<128xf32>
    %72 = vector.shape_cast %71 : vector<128xf32> to vector<128x1xf32>
    %cst_38 = arith.constant 1.280000e+02 : f32
    %73 = vector.broadcast %cst_38 : f32 to vector<128x1xf32>
    %74 = arith.divf %72, %73 : vector<128x1xf32>
    %75 = vector.broadcast %69 : vector<128x1xf32> to vector<128x128xf32>
    %76 = arith.subf %65, %75 : vector<128x128xf32>
    %77 = arith.mulf %69, %69 : vector<128x1xf32>
    %78 = arith.subf %74, %77 : vector<128x1xf32>
    %cst_39 = arith.constant 9.99999974E-6 : f32
    %79 = vector.broadcast %cst_39 : f32 to vector<128x1xf32>
    %80 = arith.addf %78, %79 : vector<128x1xf32>
    %81 = math.rsqrt %80 : vector<128x1xf32>
    %82 = vector.broadcast %81 : vector<128x1xf32> to vector<128x128xf32>
    %83 = arith.mulf %76, %82 : vector<128x128xf32>
    %84 = vector.broadcast %4 : vector<1x128xf32> to vector<128x128xf32>
    %85 = arith.mulf %83, %84 : vector<128x128xf32>
    %86 = vector.broadcast %5 : vector<1x128xf32> to vector<128x128xf32>
    %87 = arith.addf %85, %86 : vector<128x128xf32>
    %88 = arith.truncf %87 : vector<128x128xf32> to vector<128x128xbf16>
    %c0_40 = arith.constant 0 : index
    %c0_41 = arith.constant 0 : index
    %89 = vector.load %arg7[%c0_40, %c0_41] : memref<128x256xbf16, #tpu.memory_space<vmem>>, vector<128x256xbf16>
    %cst_42 = arith.constant dense<0.000000e+00> : vector<128x256xf32>
    %90 = tpu.matmul %88, %89, %cst_42 {dimension_numbers = #tpu.dot_dimension_numbers<[1], [0], [0], [1], [0, 0, 1, 1], [], []>} : vector<128x128xbf16>, vector<128x256xbf16>, vector<128x256xf32> -> vector<128x256xf32>
    %91 = vector.broadcast %8 : vector<1x256xf32> to vector<128x256xf32>
    %92 = arith.addf %90, %91 : vector<128x256xf32>
    %cst_43 = arith.constant 0.000000e+00 : f32
    %93 = vector.broadcast %cst_43 : f32 to vector<128x256xf32>
    %94 = arith.maximumf %92, %93 : vector<128x256xf32>
    %95 = arith.truncf %94 : vector<128x256xf32> to vector<128x256xbf16>
    %c0_44 = arith.constant 0 : index
    %c0_45 = arith.constant 0 : index
    %96 = vector.load %arg8[%c0_44, %c0_45] : memref<256x128xbf16, #tpu.memory_space<vmem>>, vector<256x128xbf16>
    %cst_46 = arith.constant dense<0.000000e+00> : vector<128x128xf32>
    %97 = tpu.matmul %95, %96, %cst_46 {dimension_numbers = #tpu.dot_dimension_numbers<[1], [0], [0], [1], [0, 0, 1, 1], [], []>} : vector<128x256xbf16>, vector<256x128xbf16>, vector<128x128xf32> -> vector<128x128xf32>
    %98 = vector.broadcast %6 : vector<1x128xf32> to vector<128x128xf32>
    %99 = arith.addf %97, %98 : vector<128x128xf32>
    %100 = arith.addf %65, %99 : vector<128x128xf32>
    %101 = arith.truncf %100 : vector<128x128xf32> to vector<128x128xbf16>
    %c0_47 = arith.constant 0 : index
    %c0_48 = arith.constant 0 : index
    %102 = vector.load %arg9[%c0_47, %c0_48] : memref<128x128xbf16, #tpu.memory_space<vmem>>, vector<128x128xbf16>
    %cst_49 = arith.constant dense<0.000000e+00> : vector<128x128xf32>
    %103 = tpu.matmul %101, %102, %cst_49 {dimension_numbers = #tpu.dot_dimension_numbers<[1], [0], [0], [1], [0, 0, 1, 1], [], []>} : vector<128x128xbf16>, vector<128x128xbf16>, vector<128x128xf32> -> vector<128x128xf32>
    %104 = vector.broadcast %7 : vector<1x128xf32> to vector<128x128xf32>
    %105 = arith.addf %103, %104 : vector<128x128xf32>
    %cst_50 = arith.constant dense<0xFF800000> : vector<128xf32>
    %106 = vector.multi_reduction <maximumf>, %105, %cst_50 [1] : vector<128x128xf32> to vector<128xf32>
    %107 = vector.shape_cast %106 : vector<128xf32> to vector<128x1xf32>
    %108 = vector.broadcast %107 : vector<128x1xf32> to vector<128x128xf32>
    %109 = arith.subf %105, %108 : vector<128x128xf32>
    %110 = math.exp %109 : vector<128x128xf32>
    %111 = vector.broadcast %107 : vector<128x1xf32> to vector<128x128xf32>
    %112 = arith.subf %105, %111 : vector<128x128xf32>
    %cst_51 = arith.constant dense<0.000000e+00> : vector<128xf32>
    %113 = vector.multi_reduction <add>, %110, %cst_51 [1] : vector<128x128xf32> to vector<128xf32>
    %114 = vector.shape_cast %113 : vector<128xf32> to vector<128x1xf32>
    %115 = math.log %114 : vector<128x1xf32>
    %116 = vector.broadcast %115 : vector<128x1xf32> to vector<128x128xf32>
    %117 = arith.subf %112, %116 : vector<128x128xf32>
    %c0_52 = arith.constant 0 : index
    %c0_53 = arith.constant 0 : index
    %118 = vector.load %arg11[%c0_52, %c0_53] : memref<128x128xf32, #tpu.memory_space<vmem>>, vector<128x128xf32>
    tpu.vector_store %arg11[%c0_52, %c0_53], %117 {strides = array<i32>} : memref<128x128xf32, #tpu.memory_space<vmem>>, vector<128x128xf32>,
    return
  }
  func.func @transform_0(%arg0: i32) -> (i32, i32) {
    %c0_i32 = arith.constant 0 : i32
    %c0_i32_0 = arith.constant 0 : i32
    return %arg0, %c0_i32 : i32, i32
  }
  func.func @transform_1(%arg0: i32) -> (i32, i32) {
    %c0_i32 = arith.constant 0 : i32
    %c0_i32_0 = arith.constant 0 : i32
    %c0_i32_1 = arith.constant 0 : i32
    return %c0_i32, %c0_i32_0 : i32, i32
  }
  func.func @transform_2(%arg0: i32) -> (i32, i32) {
    %c0_i32 = arith.constant 0 : i32
    %c0_i32_0 = arith.constant 0 : i32
    %c0_i32_1 = arith.constant 0 : i32
    return %c0_i32, %c0_i32_0 : i32, i32
  }
  func.func @transform_3(%arg0: i32) -> (i32, i32) {
    %c0_i32 = arith.constant 0 : i32
    %c0_i32_0 = arith.constant 0 : i32
    %c0_i32_1 = arith.constant 0 : i32
    return %c0_i32, %c0_i32_0 : i32, i32
  }
  func.func @transform_4(%arg0: i32) -> (i32, i32) {
    %c0_i32 = arith.constant 0 : i32
    %c0_i32_0 = arith.constant 0 : i32
    %c0_i32_1 = arith.constant 0 : i32
    return %c0_i32, %c0_i32_0 : i32, i32
  }
  func.func @transform_5(%arg0: i32) -> (i32, i32) {
    %c0_i32 = arith.constant 0 : i32
    %c0_i32_0 = arith.constant 0 : i32
    %c0_i32_1 = arith.constant 0 : i32
    return %c0_i32, %c0_i32_0 : i32, i32
  }
  func.func @transform_6(%arg0: i32) -> (i32, i32) {
    %c0_i32 = arith.constant 0 : i32
    %c0_i32_0 = arith.constant 0 : i32
    %c0_i32_1 = arith.constant 0 : i32
    return %c0_i32, %c0_i32_0 : i32, i32
  }
  func.func @transform_7(%arg0: i32) -> (i32, i32) {
    %c0_i32 = arith.constant 0 : i32
    %c0_i32_0 = arith.constant 0 : i32
    %c0_i32_1 = arith.constant 0 : i32
    return %c0_i32, %c0_i32_0 : i32, i32
  }
  func.func @transform_8(%arg0: i32) -> (i32, i32) {
    %c0_i32 = arith.constant 0 : i32
    %c0_i32_0 = arith.constant 0 : i32
    %c0_i32_1 = arith.constant 0 : i32
    return %c0_i32, %c0_i32_0 : i32, i32
  }
  func.func @transform_9(%arg0: i32) -> (i32, i32) {
    %c0_i32 = arith.constant 0 : i32
    %c0_i32_0 = arith.constant 0 : i32
    %c0_i32_1 = arith.constant 0 : i32
    return %c0_i32, %c0_i32_0 : i32, i32
  }
  func.func @transform_10(%arg0: i32) -> (i32, i32) {
    %c0_i32 = arith.constant 0 : i32
    %c0_i32_0 = arith.constant 0 : i32
    return %arg0, %c0_i32 : i32, i32
  }
}

</mosaic_0001>

<llo_original>
// kernel: tpu_custom_call.1
$region0: #{tpu_custom_call.1}
  #allocation0 [shape = 'u32[]', space=smem, size = 0x4, offset = 0x4, fixed_abs, tag = 'smem constant byte address 0x4 - core index']
  #allocation1 [shape = 'u32[144,128]{1,0:T(1,128)}', space=vmem, size = 0x12000, scoped, tag = 'internal scratch']
  %s0 = inlined_call_operand.vmem [shape: bf16[256,320], index: 0, kind: input, shape index: {}]
  %s1 = inlined_call_operand.vmem [shape: bf16[320,128], index: 1, kind: input, shape index: {}]
  %s2 = inlined_call_operand.vmem [shape: bf16[128,128], index: 2, kind: input, shape index: {}]
  %s3 = inlined_call_operand.vmem [shape: bf16[128,128], index: 3, kind: input, shape index: {}]
  %s4 = inlined_call_operand.vmem [shape: bf16[128,128], index: 4, kind: input, shape index: {}]
  %s5 = inlined_call_operand.vmem [shape: bf16[128,128], index: 5, kind: input, shape index: {}]
  %s6 = inlined_call_operand.vmem [shape: bf16[128,256], index: 6, kind: input, shape index: {}]
  %s7 = inlined_call_operand.vmem [shape: bf16[256,128], index: 7, kind: input, shape index: {}]
  %s8 = inlined_call_operand.hbm [shape: bf16[128,128], index: 8, kind: input, shape index: {}]
  %s9 = inlined_call_operand.vmem [shape: f32[8,256], index: 9, kind: input, shape index: {}]
  %s10 = inlined_call_operand.hbm [shape: f32[256,128], index: 10, kind: output, shape index: {}]
  %s11 = sld [smem:[#allocation0]]
  $region77: #{tpu_custom_call.1} parent=0
    _
  %s13 = ssub.s32 1, %s11
  %s14 = scalar_select 0, %s13, %s11
  $region1: #{tpu_custom_call.1} parent=0
    #allocation2 [shape = 'u8[32768]{0}', space=vmem, size = 0x8000, scoped, tag = 'input window, operand 8, single buffered']
    #allocation3 [shape = 's32[2]{0}', space=sflag, size = 0x8, scoped, tag = 'scoped memory for tpu_custom_call.1']
    #allocation4 [shape = 's32[2]{0}', space=sflag, size = 0x8, scoped, tag = 'scoped memory for tpu_custom_call.1']
    #allocation5 [shape = 'u8[131072]{0}', space=vmem, size = 0x20000, scoped, tag = 'output window, operand 0']
    %15 = vsyncpa [#allocation3], 0
    %16 = vsyncpa [#allocation4], 0
    %s17 = scalar_lea.sflag [#allocation4], 1
    %18 = vsyncpa %s17, 0
    loop: start=0, step=1, limit=4
    $region2: #{tpu_custom_call.1} parent=1 // loop_pre_header
      _
    $region3: #{tpu_custom_call.1} parent=1 // loop_header
      %s20 = sphi 0, %s24
      %p21 = scmp.ge.s32.totalorder %s20, 4
      %s30 = sphi 0, %s32
      %s33 = sphi 0, %s30
      %s34 = sphi 0, %s33
      %s50 = sphi 0, %s34
      %s54 = sphi 0, %s54
      %s56 = sphi 0, %s54
      %s57 = sphi 0, %s56
      %s71 = sphi 0, %s57
      %s75 = sphi 0, %s75
      %s77 = sphi 0, %s75
      %s78 = sphi 0, %s77
      %s92 = sphi 0, %s78
      %s96 = sphi 0, %s96
      %s98 = sphi 0, %s96
      %s99 = sphi 0, %s98
      %s113 = sphi 0, %s99
      %s117 = sphi 0, %s117
      %s119 = sphi 0, %s117
      %s120 = sphi 0, %s119
      %s134 = sphi 0, %s120
      %s138 = sphi 0, %s138
      %s140 = sphi 0, %s138
      %s141 = sphi 0, %s140
      %s155 = sphi 0, %s141
      %s159 = sphi 0, %s159
      %s161 = sphi 0, %s159
      %s162 = sphi 0, %s161
      %s176 = sphi 0, %s162
      %s180 = sphi 0, %s180
      %s182 = sphi 0, %s180
      %s183 = sphi 0, %s182
      %s197 = sphi 0, %s183
      %s201 = sphi 0, %s201
      %s203 = sphi 0, %s201
      %s204 = sphi 0, %s203
      %s218 = sphi 0, %s204
      %s222 = sphi 0, %s222
      %s224 = sphi 0, %s222
      %s225 = sphi 0, %s224
      %s239 = sphi 0, %s225
      %s245 = sphi 0, %s247
      %s248 = sphi 0, %s245
      %s249 = sphi 0, %s248
      %s265 = sphi 0, %s249
    $region4: #{tpu_custom_call.1} parent=1 // loop_header_branch
      %23 = sbr.rel (%p21) target = $region8
    $region5: #{tpu_custom_call.1} parent=1 // loop_body
      %s25 = ssub.s32 %s20, 1
      %s26 = ssub.s32 %s20, 2
      %s27 = sadd.s32 %s20, 1
      %s28 = ssub.s32 %s20, %s27
      %p29 = scmp.eq.s32.totalorder %s28, 0
      %s31 = sadd.s32 %s30, 1
      %s32 = scalar_select %p29, %s30, %s31
      %p35 = pneg %p29
      %p36 = scmp.eq.s32.totalorder %s20, 1
      %p37 = por %p35, %p36
      %p38 = scmp.ne.s32.totalorder %s30, %s33
      %p39 = scmp.eq.s32.totalorder %s20, 0
      %p40 = por %p38, %p39
      %p41 = scmp.ne.s32.totalorder %s30, %s33
      %p42 = scmp.eq.s32.totalorder %s25, 1
      %p43 = por %p41, %p42
      %p44 = scmp.ne.s32.totalorder %s33, %s34
      %p45 = scmp.eq.s32.totalorder %s25, 0
      %p46 = por %p44, %p45
      %p47 = scmp.ne.s32.totalorder %s33, %s34
      %p48 = scmp.eq.s32.totalorder %s26, 1
      %p49 = por %p47, %p48
      %p51 = scmp.ne.s32.totalorder %s34, %s50
      %p52 = scmp.eq.s32.totalorder %s26, 0
      %p53 = por %p51, %p52
      %s55 = sadd.s32 %s54, 1
      %p58 = scmp.eq.s32.totalorder %s20, 1
      %p59 = scmp.ne.s32.totalorder %s54, %s56
      %p60 = scmp.eq.s32.totalorder %s20, 0
      %p61 = por %p59, %p60
      %p62 = scmp.ne.s32.totalorder %s54, %s56
      %p63 = scmp.eq.s32.totalorder %s25, 1
      %p64 = por %p62, %p63
      %p65 = scmp.ne.s32.totalorder %s56, %s57
      %p66 = scmp.eq.s32.totalorder %s25, 0
      %p67 = por %p65, %p66
      %p68 = scmp.ne.s32.totalorder %s56, %s57
      %p69 = scmp.eq.s32.totalorder %s26, 1
      %p70 = por %p68, %p69
      %p72 = scmp.ne.s32.totalorder %s57, %s71
      %p73 = scmp.eq.s32.totalorder %s26, 0
      %p74 = por %p72, %p73
      %s76 = sadd.s32 %s75, 1
      %p79 = scmp.eq.s32.totalorder %s20, 1
      %p80 = scmp.ne.s32.totalorder %s75, %s77
      %p81 = scmp.eq.s32.totalorder %s20, 0
      %p82 = por %p80, %p81
      %p83 = scmp.ne.s32.totalorder %s75, %s77
      %p84 = scmp.eq.s32.totalorder %s25, 1
      %p85 = por %p83, %p84
      %p86 = scmp.ne.s32.totalorder %s77, %s78
      %p87 = scmp.eq.s32.totalorder %s25, 0
      %p88 = por %p86, %p87
      %p89 = scmp.ne.s32.totalorder %s77, %s78
      %p90 = scmp.eq.s32.totalorder %s26, 1
      %p91 = por %p89, %p90
      %p93 = scmp.ne.s32.totalorder %s78, %s92
      %p94 = scmp.eq.s32.totalorder %s26, 0
      %p95 = por %p93, %p94
      %s97 = sadd.s32 %s96, 1
      %p100 = scmp.eq.s32.totalorder %s20, 1
      %p101 = scmp.ne.s32.totalorder %s96, %s98
      %p102 = scmp.eq.s32.totalorder %s20, 0
      %p103 = por %p101, %p102
      %p104 = scmp.ne.s32.totalorder %s96, %s98
      %p105 = scmp.eq.s32.totalorder %s25, 1
      %p106 = por %p104, %p105
      %p107 = scmp.ne.s32.totalorder %s98, %s99
      %p108 = scmp.eq.s32.totalorder %s25, 0
      %p109 = por %p107, %p108
      %p110 = scmp.ne.s32.totalorder %s98, %s99
      %p111 = scmp.eq.s32.totalorder %s26, 1
      %p112 = por %p110, %p111
      %p114 = scmp.ne.s32.totalorder %s99, %s113
      %p115 = scmp.eq.s32.totalorder %s26, 0
      %p116 = por %p114, %p115
      %s118 = sadd.s32 %s117, 1
      %p121 = scmp.eq.s32.totalorder %s20, 1
      %p122 = scmp.ne.s32.totalorder %s117, %s119
      %p123 = scmp.eq.s32.totalorder %s20, 0
      %p124 = por %p122, %p123
      %p125 = scmp.ne.s32.totalorder %s117, %s119
      %p126 = scmp.eq.s32.totalorder %s25, 1
      %p127 = por %p125, %p126
      %p128 = scmp.ne.s32.totalorder %s119, %s120
      %p129 = scmp.eq.s32.totalorder %s25, 0
      %p130 = por %p128, %p129
      %p131 = scmp.ne.s32.totalorder %s119, %s120
      %p132 = scmp.eq.s32.totalorder %s26, 1
      %p133 = por %p131, %p132
      %p135 = scmp.ne.s32.totalorder %s120, %s134
      %p136 = scmp.eq.s32.totalorder %s26, 0
      %p137 = por %p135, %p136
      %s139 = sadd.s32 %s138, 1
      %p142 = scmp.eq.s32.totalorder %s20, 1
      %p143 = scmp.ne.s32.totalorder %s138, %s140
      %p144 = scmp.eq.s32.totalorder %s20, 0
      %p145 = por %p143, %p144
      %p146 = scmp.ne.s32.totalorder %s138, %s140
      %p147 = scmp.eq.s32.totalorder %s25, 1
      %p148 = por %p146, %p147
      %p149 = scmp.ne.s32.totalorder %s140, %s141
      %p150 = scmp.eq.s32.totalorder %s25, 0
      %p151 = por %p149, %p150
      %p152 = scmp.ne.s32.totalorder %s140, %s141
      %p153 = scmp.eq.s32.totalorder %s26, 1
      %p154 = por %p152, %p153
      %p156 = scmp.ne.s32.totalorder %s141, %s155
      %p157 = scmp.eq.s32.totalorder %s26, 0
      %p158 = por %p156, %p157
      %s160 = sadd.s32 %s159, 1
      %p163 = scmp.eq.s32.totalorder %s20, 1
      %p164 = scmp.ne.s32.totalorder %s159, %s161
      %p165 = scmp.eq.s32.totalorder %s20, 0
      %p166 = por %p164, %p165
      %p167 = scmp.ne.s32.totalorder %s159, %s161
      %p168 = scmp.eq.s32.totalorder %s25, 1
      %p169 = por %p167, %p168
      %p170 = scmp.ne.s32.totalorder %s161, %s162
      %p171 = scmp.eq.s32.totalorder %s25, 0
      %p172 = por %p170, %p171
      %p173 = scmp.ne.s32.totalorder %s161, %s162
      %p174 = scmp.eq.s32.totalorder %s26, 1
      %p175 = por %p173, %p174
      %p177 = scmp.ne.s32.totalorder %s162, %s176
      %p178 = scmp.eq.s32.totalorder %s26, 0
      %p179 = por %p177, %p178
      %s181 = sadd.s32 %s180, 1
      %p184 = scmp.eq.s32.totalorder %s20, 1
      %p185 = scmp.ne.s32.totalorder %s180, %s182
      %p186 = scmp.eq.s32.totalorder %s20, 0
      %p187 = por %p185, %p186
      %p188 = scmp.ne.s32.totalorder %s180, %s182
      %p189 = scmp.eq.s32.totalorder %s25, 1
      %p190 = por %p188, %p189
      %p191 = scmp.ne.s32.totalorder %s182, %s183
      %p192 = scmp.eq.s32.totalorder %s25, 0
      %p193 = por %p191, %p192
      %p194 = scmp.ne.s32.totalorder %s182, %s183
      %p195 = scmp.eq.s32.totalorder %s26, 1
      %p196 = por %p194, %p195
      %p198 = scmp.ne.s32.totalorder %s183, %s197
      %p199 = scmp.eq.s32.totalorder %s26, 0
      %p200 = por %p198, %p199
      %s202 = sadd.s32 %s201, 1
      %p205 = scmp.eq.s32.totalorder %s20, 1
      %p206 = scmp.ne.s32.totalorder %s201, %s203
      %p207 = scmp.eq.s32.totalorder %s20, 0
      %p208 = por %p206, %p207
      %p209 = scmp.ne.s32.totalorder %s201, %s203
      %p210 = scmp.eq.s32.totalorder %s25, 1
      %p211 = por %p209, %p210
      %p212 = scmp.ne.s32.totalorder %s203, %s204
      %p213 = scmp.eq.s32.totalorder %s25, 0
      %p214 = por %p212, %p213
      %p215 = scmp.ne.s32.totalorder %s203, %s204
      %p216 = scmp.eq.s32.totalorder %s26, 1
      %p217 = por %p215, %p216
      %p219 = scmp.ne.s32.totalorder %s204, %s218
      %p220 = scmp.eq.s32.totalorder %s26, 0
      %p221 = por %p219, %p220
      %s223 = sadd.s32 %s222, 1
      %p226 = scmp.eq.s32.totalorder %s20, 1
      %p227 = scmp.ne.s32.totalorder %s222, %s224
      %p228 = scmp.eq.s32.totalorder %s20, 0
      %p229 = por %p227, %p228
      %p230 = scmp.ne.s32.totalorder %s222, %s224
      %p231 = scmp.eq.s32.totalorder %s25, 1
      %p232 = por %p230, %p231
      %p233 = scmp.ne.s32.totalorder %s224, %s225
      %p234 = scmp.eq.s32.totalorder %s25, 0
      %p235 = por %p233, %p234
      %p236 = scmp.ne.s32.totalorder %s224, %s225
      %p237 = scmp.eq.s32.totalorder %s26, 1
      %p238 = por %p236, %p237
      %p240 = scmp.ne.s32.totalorder %s225, %s239
      %p241 = scmp.eq.s32.totalorder %s26, 0
      %p242 = por %p240, %p241
      %s243 = ssub.s32 %s20, %s27
      %p244 = scmp.eq.s32.totalorder %s243, 0
      %s246 = sadd.s32 %s245, 1
      %s247 = scalar_select %p244, %s245, %s246
      %p250 = pneg %p244
      %p251 = scmp.eq.s32.totalorder %s20, 1
      %p252 = por %p250, %p251
      %p253 = scmp.ne.s32.totalorder %s245, %s248
      %p254 = scmp.eq.s32.totalorder %s20, 0
      %p255 = por %p253, %p254
      %p256 = scmp.ne.s32.totalorder %s245, %s248
      %p257 = scmp.eq.s32.totalorder %s25, 1
      %p258 = por %p256, %p257
      %p259 = scmp.ne.s32.totalorder %s248, %s249
      %p260 = scmp.eq.s32.totalorder %s25, 0
      %p261 = por %p259, %p260
      %p262 = scmp.ne.s32.totalorder %s248, %s249
      %p263 = scmp.eq.s32.totalorder %s26, 1
      %p264 = por %p262, %p263
      %p266 = scmp.ne.s32.totalorder %s249, %s265
      %p267 = scmp.eq.s32.totalorder %s26, 0
      %p268 = por %p266, %p267
      %p269 = scmp.le.s32.totalorder 1, %s20
      %p270 = scmp.lt.s32.totalorder %s20, 3
      %p271 = pnand %p269, %p270
      %p272 = pneg %p271
      // Predicated region
      $region9: #{tpu_custom_call.1} parent=5 // pred_check
        _
      $region10: #{tpu_custom_call.1} parent=5 // pred_check_branch
        %274 = sbr.rel (%p271) target = $region12
      $region11: #{tpu_custom_call.1} parent=5 // pred_region
        %s275 = ssub.s32 %s20, 1
        // Predicated region
        $region13: #{tpu_custom_call.1} parent=11 // pred_check
          %p276 = pneg %p67
        $region14: #{tpu_custom_call.1} parent=11 // pred_check_branch
          %278 = sbr.rel (%p276) target = $region16
        $region15: #{tpu_custom_call.1} parent=11 // pred_region
          _
        $region16: #{tpu_custom_call.1} parent=11 // pred_fallthru
          _
        // Predicated region
        $region17: #{tpu_custom_call.1} parent=11 // pred_check
          %p279 = pneg %p88
        $region18: #{tpu_custom_call.1} parent=11 // pred_check_branch
          %281 = sbr.rel (%p279) target = $region20
        $region19: #{tpu_custom_call.1} parent=11 // pred_region
          _
        $region20: #{tpu_custom_call.1} parent=11 // pred_fallthru
          _
        // Predicated region
        $region21: #{tpu_custom_call.1} parent=11 // pred_check
          %p282 = pneg %p109
        $region22: #{tpu_custom_call.1} parent=11 // pred_check_branch
          %284 = sbr.rel (%p282) target = $region24
        $region23: #{tpu_custom_call.1} parent=11 // pred_region
          _
        $region24: #{tpu_custom_call.1} parent=11 // pred_fallthru
          _
        // Predicated region
        $region25: #{tpu_custom_call.1} parent=11 // pred_check
          %p285 = pneg %p130
        $region26: #{tpu_custom_call.1} parent=11 // pred_check_branch
          %287 = sbr.rel (%p285) target = $region28
        $region27: #{tpu_custom_call.1} parent=11 // pred_region
          _
        $region28: #{tpu_custom_call.1} parent=11 // pred_fallthru
          _
        // Predicated region
        $region29: #{tpu_custom_call.1} parent=11 // pred_check
          %p288 = pneg %p151
        $region30: #{tpu_custom_call.1} parent=11 // pred_check_branch
          %290 = sbr.rel (%p288) target = $region32
        $region31: #{tpu_custom_call.1} parent=11 // pred_region
          _
        $region32: #{tpu_custom_call.1} parent=11 // pred_fallthru
          _
        // Predicated region
        $region33: #{tpu_custom_call.1} parent=11 // pred_check
          %p291 = pneg %p172
        $region34: #{tpu_custom_call.1} parent=11 // pred_check_branch
          %293 = sbr.rel (%p291) target = $region36
        $region35: #{tpu_custom_call.1} parent=11 // pred_region
          _
        $region36: #{tpu_custom_call.1} parent=11 // pred_fallthru
          _
        // Predicated region
        $region37: #{tpu_custom_call.1} parent=11 // pred_check
          %p294 = pneg %p193
        $region38: #{tpu_custom_call.1} parent=11 // pred_check_branch
          %296 = sbr.rel (%p294) target = $region40
        $region39: #{tpu_custom_call.1} parent=11 // pred_region
          _
        $region40: #{tpu_custom_call.1} parent=11 // pred_fallthru
          _
        // Predicated region
        $region41: #{tpu_custom_call.1} parent=11 // pred_check
          %p297 = pneg %p214
        $region42: #{tpu_custom_call.1} parent=11 // pred_check_branch
          %299 = sbr.rel (%p297) target = $region44
        $region43: #{tpu_custom_call.1} parent=11 // pred_region
          %s301 = ssub.s32 1024, 1024
          %302 = vsyncadd [#allocation3], %s301
          %s303 = sshll.u32 [#allocation2], 4
          %s304 = int_to_ptr.vmem [resolvable:$true] %s303
          %309 = dma.hbm_to_vmem [thread:$0]  %s8, 1024, %s304, [#allocation3], 64, 64, 4
        $region44: #{tpu_custom_call.1} parent=11 // pred_fallthru
          _
        // Predicated region
        $region45: #{tpu_custom_call.1} parent=11 // pred_check
          %p310 = pneg %p235
        $region46: #{tpu_custom_call.1} parent=11 // pred_check_branch
          %312 = sbr.rel (%p310) target = $region48
        $region47: #{tpu_custom_call.1} parent=11 // pred_region
          _
        $region48: #{tpu_custom_call.1} parent=11 // pred_fallthru
          _
      $region12: #{tpu_custom_call.1} parent=5 // pred_fallthru
        _
      %p313 = scmp.lt.s32.totalorder %s20, 2
      // Predicated region
      $region49: #{tpu_custom_call.1} parent=5 // pred_check
        %p314 = pneg %p313
      $region50: #{tpu_custom_call.1} parent=5 // pred_check_branch
        %316 = sbr.rel (%p314) target = $region52
      $region51: #{tpu_custom_call.1} parent=5 // pred_region
        // Predicated region
        $region53: #{tpu_custom_call.1} parent=51 // pred_check
          %p317 = pneg %p40
        $region54: #{tpu_custom_call.1} parent=51 // pred_check_branch
          %319 = sbr.rel (%p317) target = $region56
        $region55: #{tpu_custom_call.1} parent=51 // pred_region
          %s320 = smul.u32 16, %s20
          %p321 = scmp.lt.s32.totalorder %s320, 31
          %s322 = scalar_select %p321, %s320, 31
          %s323 = smul.addr %s322, 3
          %s324 = smul.addr %s323, 4
          %s325 = scalar_lea.vmem %s0, %s324
          %s326 = smul.u32 16, %s20
        $region56: #{tpu_custom_call.1} parent=51 // pred_fallthru
          _
      $region52: #{tpu_custom_call.1} parent=5 // pred_fallthru
        _
      %p327 = scmp.le.s32.totalorder 1, %s20
      %p328 = scmp.lt.s32.totalorder %s20, 3
      %p329 = pnand %p327, %p328
      %p330 = pneg %p329
      // Predicated region
      $region57: #{tpu_custom_call.1} parent=5 // pred_check
        _
      $region58: #{tpu_custom_call.1} parent=5 // pred_check_branch
        %332 = sbr.rel (%p329) target = $region60
      $region59: #{tpu_custom_call.1} parent=5 // pred_region
        %s333 = ssub.s32 %s20, 1
        // Predicated region
        $region61: #{tpu_custom_call.1} parent=59 // pred_check
          %p334 = pneg %p214
        $region62: #{tpu_custom_call.1} parent=59 // pred_check_branch
          %336 = sbr.rel (%p334) target = $region64
        $region63: #{tpu_custom_call.1} parent=59 // pred_region
          %337 = dma.done [#allocation3], 1024
        $region64: #{tpu_custom_call.1} parent=59 // pred_fallthru
          _
        %s338 = smul.u32 16, %s25
        %p339 = scmp.lt.s32.totalorder %s338, 31
        %s340 = scalar_select %p339, %s338, 31
        %s341 = smul.addr %s340, 3
        %s342 = smul.addr %s341, 4
        %s343 = scalar_lea.vmem %s0, %s342
        %p344 = pneg %p46
        %p345 = pneg %p43
        %p346 = pneg %p67
        %p347 = pneg %p64
        %p348 = pneg %p88
        %p349 = pneg %p85
        %p350 = pneg %p109
        %p351 = pneg %p106
        %p352 = pneg %p130
        %p353 = pneg %p127
        %p354 = pneg %p151
        %p355 = pneg %p148
        %p356 = pneg %p172
        %p357 = pneg %p169
        %p358 = pneg %p193
        %p359 = pneg %p190
        %p360 = pneg %p214
        %p361 = pneg %p211
        %p362 = pneg %p235
        %p363 = pneg %p232
        %p364 = pneg %p261
        %p365 = pneg %p258
        %s366 = sand.u32 %s248, 1
        %s367 = scalar_lea.sflag [#allocation4], %s366
        %s368 = sand.u32 %s248, 1
        %s369 = smul.addr %s368, 128
        %s370 = scalar_lea.vmem [#allocation5], %s369
        %s371 = smul.u32 16, %s25
        %p372 = scmp.lt.s32.totalorder %s371, 31
        %s373 = scalar_select %p372, %s371, 31
        %s374 = smul.addr %s373, 3
        %s375 = smul.addr %s374, 4
        %s376 = scalar_lea.vmem %s0, %s375
        %s377 = smul.u32 16, %s25
        %s378 = smul.u32 16, %s25
        %v380 = vld [vmem:[%s376] sm:$0xff]
        %v381 = vld [vmem:[%s376 + $0x8] sm:$0xf]
        %v382 = vld [vmem:[%s376 + $0xc] sm:$0xff]
        %v383 = vld [vmem:[%s376 + $0x14] sm:$0xf]
        %v384 = vld [vmem:[%s376 + $0x18] sm:$0xff]
        %v385 = vld [vmem:[%s376 + $0x20] sm:$0xf]
        %v386 = vld [vmem:[%s376 + $0x24] sm:$0xff]
        %v387 = vld [vmem:[%s376 + $0x2c] sm:$0xf]
        %v388 = vld [vmem:[%s376 + $0x30] sm:$0xff]
        %v389 = vld [vmem:[%s376 + $0x38] sm:$0xf]
        %v390 = vld [vmem:[%s376 + $0x3c] sm:$0xff]
        %v391 = vld [vmem:[%s376 + $0x44] sm:$0xf]
        %v392 = vld [vmem:[%s376 + $0x48] sm:$0xff]
        %v393 = vld [vmem:[%s376 + $0x50] sm:$0xf]
        %v394 = vld [vmem:[%s376 + $0x54] sm:$0xff]
        %v395 = vld [vmem:[%s376 + $0x5c] sm:$0xf]
        %v396 = vld [vmem:[%s376 + $0x60] sm:$0xff]
        %v397 = vld [vmem:[%s376 + $0x68] sm:$0xf]
        %v398 = vld [vmem:[%s376 + $0x6c] sm:$0xff]
        %v399 = vld [vmem:[%s376 + $0x74] sm:$0xf]
        %v400 = vld [vmem:[%s376 + $0x78] sm:$0xff]
        %v401 = vld [vmem:[%s376 + $0x80] sm:$0xf]
        %v402 = vld [vmem:[%s376 + $0x84] sm:$0xff]
        %v403 = vld [vmem:[%s376 + $0x8c] sm:$0xf]
        %v404 = vld [vmem:[%s376 + $0x90] sm:$0xff]
        %v405 = vld [vmem:[%s376 + $0x98] sm:$0xf]
        %v406 = vld [vmem:[%s376 + $0x9c] sm:$0xff]
        %v407 = vld [vmem:[%s376 + $0xa4] sm:$0xf]
        %v408 = vld [vmem:[%s376 + $0xa8] sm:$0xff]
        %v409 = vld [vmem:[%s376 + $0xb0] sm:$0xf]
        %v410 = vld [vmem:[%s376 + $0xb4] sm:$0xff]
        %v411 = vld [vmem:[%s376 + $0xbc] sm:$0xf]
        %v412 = vld [vmem:[%s9] ss:$0 sm:$0xff]
        %v413 = vld [vmem:[%s9 + $0x1] ss:$0 sm:$0xff]
        %v414 = vld [vmem:[%s9 + $0x2] ss:$0 sm:$0xff]
        %v415 = vld [vmem:[%s9 + $0x3] ss:$0 sm:$0xff]
        %v416 = vld [vmem:[%s9 + $0x4] ss:$0 sm:$0xff]
        %v417 = vld [vmem:[%s9 + $0x5] ss:$0 sm:$0xff]
        %v418 = vld [vmem:[%s9 + $0x6] ss:$0 sm:$0xff]
        %s419 = scalar_lea.vmem %s9, 7
        %v420 = vld [vmem:[%s419] ss:$8 sm:$0x3]
        %v421 = vld [vmem:[%s1] sm:$0xf]
        %v422 = vld [vmem:[%s1 + $0x4] sm:$0xf]
        %v423 = vld [vmem:[%s1 + $0x8] sm:$0xf]
        %v424 = vld [vmem:[%s1 + $0xc] sm:$0xf]
        %v425 = vld [vmem:[%s1 + $0x10] sm:$0xf]
        %v426 = vld [vmem:[%s1 + $0x14] sm:$0xf]
        %v427 = vld [vmem:[%s1 + $0x18] sm:$0xf]
        %v428 = vld [vmem:[%s1 + $0x1c] sm:$0xf]
        %v429 = vld [vmem:[%s1 + $0x20] sm:$0xf]
        %v430 = vld [vmem:[%s1 + $0x24] sm:$0xf]
        %v431 = vld [vmem:[%s1 + $0x28] sm:$0xf]
        %v432 = vld [vmem:[%s1 + $0x2c] sm:$0xf]
        %v433 = vld [vmem:[%s1 + $0x30] sm:$0xf]
        %v434 = vld [vmem:[%s1 + $0x34] sm:$0xf]
        %v435 = vld [vmem:[%s1 + $0x38] sm:$0xf]
        %v436 = vld [vmem:[%s1 + $0x3c] sm:$0xf]
        %v437 = vld [vmem:[%s1 + $0x40] sm:$0xf]
        %v438 = vld [vmem:[%s1 + $0x44] sm:$0xf]
        %v439 = vld [vmem:[%s1 + $0x48] sm:$0xf]
        %v440 = vld [vmem:[%s1 + $0x4c] sm:$0xf]
        %v441 = vld [vmem:[%s1 + $0x50] sm:$0xf]
        %v442 = vld [vmem:[%s1 + $0x54] sm:$0xf]
        %v443 = vld [vmem:[%s1 + $0x58] sm:$0xf]
        %v444 = vld [vmem:[%s1 + $0x5c] sm:$0xf]
        %v445 = vld [vmem:[%s1 + $0x60] sm:$0xf]
        %v446 = vld [vmem:[%s1 + $0x64] sm:$0xf]
        %v447 = vld [vmem:[%s1 + $0x68] sm:$0xf]
        %v448 = vld [vmem:[%s1 + $0x6c] sm:$0xf]
        %v449 = vld [vmem:[%s1 + $0x70] sm:$0xf]
        %v450 = vld [vmem:[%s1 + $0x74] sm:$0xf]
        %v451 = vld [vmem:[%s1 + $0x78] sm:$0xf]
        %v452 = vld [vmem:[%s1 + $0x7c] sm:$0xf]
        %v453 = vld [vmem:[%s1 + $0x80] sm:$0xf]
        %v454 = vld [vmem:[%s1 + $0x84] sm:$0xf]
        %v455 = vld [vmem:[%s1 + $0x88] sm:$0xf]
        %v456 = vld [vmem:[%s1 + $0x8c] sm:$0xf]
        %v457 = vld [vmem:[%s1 + $0x90] sm:$0xf]
        %v458 = vld [vmem:[%s1 + $0x94] sm:$0xf]
        %v459 = vld [vmem:[%s1 + $0x98] sm:$0xf]
        %v460 = vld [vmem:[%s1 + $0x9c] sm:$0xf]
        %v493 = vunpack.c.l.b16 %v380
        %v494 = vunpack.c.h.b16 %v380
        %v495 = vunpack.c.l.b16 %v381
        %v496 = vunpack.c.l.b16 %v382
        %v497 = vunpack.c.h.b16 %v382
        %v498 = vunpack.c.l.b16 %v383
        %v499 = vunpack.c.l.b16 %v384
        %v500 = vunpack.c.h.b16 %v384
        %v501 = vunpack.c.l.b16 %v385
        %v502 = vunpack.c.l.b16 %v386
        %v503 = vunpack.c.h.b16 %v386
        %v504 = vunpack.c.l.b16 %v387
        %v505 = vunpack.c.l.b16 %v388
        %v506 = vunpack.c.h.b16 %v388
        %v507 = vunpack.c.l.b16 %v389
        %v508 = vunpack.c.l.b16 %v390
        %v509 = vunpack.c.h.b16 %v390
        %v510 = vunpack.c.l.b16 %v391
        %v511 = vunpack.c.l.b16 %v392
        %v512 = vunpack.c.h.b16 %v392
        %v513 = vunpack.c.l.b16 %v393
        %v514 = vunpack.c.l.b16 %v394
        %v515 = vunpack.c.h.b16 %v394
        %v516 = vunpack.c.l.b16 %v395
        %v517 = vunpack.c.l.b16 %v396
        %v518 = vunpack.c.h.b16 %v396
        %v519 = vunpack.c.l.b16 %v397
        %v520 = vunpack.c.l.b16 %v398
        %v521 = vunpack.c.h.b16 %v398
        %v522 = vunpack.c.l.b16 %v399
        %v523 = vunpack.c.l.b16 %v400
        %v524 = vunpack.c.h.b16 %v400
        %v525 = vunpack.c.l.b16 %v401
        %v526 = vunpack.c.l.b16 %v402
        %v527 = vunpack.c.h.b16 %v402
        %v528 = vunpack.c.l.b16 %v403
        %v529 = vunpack.c.l.b16 %v404
        %v530 = vunpack.c.h.b16 %v404
        %v531 = vunpack.c.l.b16 %v405
        %v532 = vunpack.c.l.b16 %v406
        %v533 = vunpack.c.h.b16 %v406
        %v534 = vunpack.c.l.b16 %v407
        %v535 = vunpack.c.l.b16 %v408
        %v536 = vunpack.c.h.b16 %v408
        %v537 = vunpack.c.l.b16 %v409
        %v538 = vunpack.c.l.b16 %v410
        %v539 = vunpack.c.h.b16 %v410
        %v540 = vunpack.c.l.b16 %v411
        %v541 = vpack.c.b16 %v496, %v493
        %v542 = vpack.c.b16 %v497, %v494
        %v543 = vpack.c.b16 %v498, %v495
        %v544 = vpack.c.b16 %v502, %v499
        %v545 = vpack.c.b16 %v503, %v500
        %v546 = vpack.c.b16 %v504, %v501
        %v547 = vpack.c.b16 %v508, %v505
        %v548 = vpack.c.b16 %v509, %v506
        %v549 = vpack.c.b16 %v510, %v507
        %v550 = vpack.c.b16 %v514, %v511
        %v551 = vpack.c.b16 %v515, %v512
        %v552 = vpack.c.b16 %v516, %v513
        %v553 = vpack.c.b16 %v520, %v517
        %v554 = vpack.c.b16 %v521, %v518
        %v555 = vpack.c.b16 %v522, %v519
        %v556 = vpack.c.b16 %v526, %v523
        %v557 = vpack.c.b16 %v527, %v524
        %v558 = vpack.c.b16 %v528, %v525
        %v559 = vpack.c.b16 %v532, %v529
        %v560 = vpack.c.b16 %v533, %v530
        %v561 = vpack.c.b16 %v534, %v531
        %v562 = vpack.c.b16 %v538, %v535
        %v563 = vpack.c.b16 %v539, %v536
        %v564 = vpack.c.b16 %v540, %v537
        %v621 = vunpack.c.l.b16 %v421
        %v622 = vunpack.c.l.b16 %v422
        %v623 = vunpack.c.l.b16 %v423
        %v624 = vunpack.c.l.b16 %v424
        %v625 = vunpack.c.l.b16 %v425
        %v626 = vunpack.c.l.b16 %v426
        %v627 = vunpack.c.l.b16 %v427
        %v628 = vunpack.c.l.b16 %v428
        %v629 = vunpack.c.l.b16 %v429
        %v630 = vunpack.c.l.b16 %v430
        %v631 = vunpack.c.l.b16 %v431
        %v632 = vunpack.c.l.b16 %v432
        %v633 = vunpack.c.l.b16 %v433
        %v634 = vunpack.c.l.b16 %v434
        %v635 = vunpack.c.l.b16 %v435
        %v636 = vunpack.c.l.b16 %v436
        %v637 = vunpack.c.l.b16 %v437
        %v638 = vunpack.c.l.b16 %v438
        %v639 = vunpack.c.l.b16 %v439
        %v640 = vunpack.c.l.b16 %v440
        %v641 = vunpack.c.l.b16 %v441
        %v642 = vunpack.c.l.b16 %v442
        %v643 = vunpack.c.l.b16 %v443
        %v644 = vunpack.c.l.b16 %v444
        %v645 = vunpack.c.l.b16 %v445
        %v646 = vunpack.c.l.b16 %v446
        %v647 = vunpack.c.l.b16 %v447
        %v648 = vunpack.c.l.b16 %v448
        %v649 = vunpack.c.l.b16 %v449
        %v650 = vunpack.c.l.b16 %v450
        %v651 = vunpack.c.l.b16 %v451
        %v652 = vunpack.c.l.b16 %v452
        %v653 = vunpack.c.l.b16 %v453
        %v654 = vunpack.c.l.b16 %v454
        %v655 = vunpack.c.l.b16 %v455
        %v656 = vunpack.c.l.b16 %v456
        %v657 = vunpack.c.l.b16 %v457
        %v658 = vunpack.c.l.b16 %v458
        %v659 = vunpack.c.l.b16 %v459
        %v660 = vunpack.c.l.b16 %v460
        %v661 = vpack.c.b16 %v622, %v621
        %v662 = vpack.c.b16 %v624, %v623
        %v663 = vpack.c.b16 %v626, %v625
        %v664 = vpack.c.b16 %v628, %v627
        %v665 = vpack.c.b16 %v630, %v629
        %v666 = vpack.c.b16 %v632, %v631
        %v667 = vpack.c.b16 %v634, %v633
        %v668 = vpack.c.b16 %v636, %v635
        %v669 = vpack.c.b16 %v638, %v637
        %v670 = vpack.c.b16 %v640, %v639
        %v671 = vpack.c.b16 %v642, %v641
        %v672 = vpack.c.b16 %v644, %v643
        %v673 = vpack.c.b16 %v646, %v645
        %v674 = vpack.c.b16 %v648, %v647
        %v675 = vpack.c.b16 %v650, %v649
        %v676 = vpack.c.b16 %v652, %v651
        %v677 = vpack.c.b16 %v654, %v653
        %v678 = vpack.c.b16 %v656, %v655
        %v679 = vpack.c.b16 %v658, %v657
        %v680 = vpack.c.b16 %v660, %v659
        %vm701 = vcmask 523264
        %v703 = vsel %vm701, %v543, 0
        %v706 = vsel %vm701, %v546, 0
        %v709 = vsel %vm701, %v549, 0
        %v712 = vsel %vm701, %v552, 0
        %v715 = vsel %vm701, %v555, 0
        %v718 = vsel %vm701, %v558, 0
        %v721 = vsel %vm701, %v561, 0
        %v724 = vsel %vm701, %v564, 0
        %726 = vmatprep.subr.bf16.mxu0 0
        %727 = vmatpush1.bf16.msra.mxu0 %v661
        %728 = vmatprep.subr.bf16.mxu0 0
        %729 = vmatpush1.bf16.msra.mxu0 %v662
        %730 = vmatprep.subr.bf16.mxu0 0
        %731 = vmatpush1.bf16.msra.mxu0 %v663
        %732 = vmatprep.subr.bf16.mxu0 0
        %733 = vmatpush1.bf16.msra.mxu0 %v664
        %734 = vmatprep.subr.bf16.mxu0 0
        %735 = vmatpush1.bf16.msra.mxu0 %v665
        %736 = vmatprep.subr.bf16.mxu0 0
        %737 = vmatpush1.bf16.msra.mxu0 %v666
        %738 = vmatprep.subr.bf16.mxu0 0
        %739 = vmatpush1.bf16.msra.mxu0 %v667
        %740 = vmatprep.subr.bf16.mxu0 0
        %741 = vmatpush1.bf16.msra.mxu0 %v668
        %742 = vmatprep.subr.bf16.mxu0 0
        %743 = vmatpush1.bf16.msra.mxu0 %v669
        %744 = vmatprep.subr.bf16.mxu0 0
        %745 = vmatpush1.bf16.msra.mxu0 %v670
        %746 = vmatprep.subr.bf16.mxu0 0
        %747 = vmatpush1.bf16.msra.mxu0 %v671
        %748 = vmatprep.subr.bf16.mxu0 0
        %749 = vmatpush1.bf16.msra.mxu0 %v672
        %750 = vmatprep.subr.bf16.mxu0 0
        %751 = vmatpush1.bf16.msra.mxu0 %v673
        %752 = vmatprep.subr.bf16.mxu0 0
        %753 = vmatpush1.bf16.msra.mxu0 %v674
        %754 = vmatprep.subr.bf16.mxu0 0
        %755 = vmatpush1.bf16.msra.mxu0 %v675
        %756 = vmatprep.subr.bf16.mxu0 0
        %757 = vmatpush1.bf16.msra.mxu0 %v676
        %758 = vmatprep.mubr.bf16.mxu0 %v542
        %759 = vmatmul.mubr.bf16.gmra.mrb[0].mxu0 %v541
        %v760 = vpop.f32.mrb[0].mxu0
        %v761 = vadd.f32 %v412, %v760
        %v762 = vpop.f32.mrb[0].mxu0
        %v763 = vpop.f32.mrb[0].mxu0
        %v764 = vadd.f32 %v412, %v763
        %v765 = vpop.f32.mrb[0].mxu0
        %766 = vmatprep.mubr.bf16.mxu0 %v545
        %767 = vmatmul.mubr.bf16.gmra.mrb[0].mxu0 %v544
        %v768 = vpop.f32.mrb[0].mxu0
        %v769 = vadd.f32 %v412, %v768
        %v770 = vpop.f32.mrb[0].mxu0
        %v771 = vpop.f32.mrb[0].mxu0
        %v772 = vadd.f32 %v412, %v771
        %v773 = vpop.f32.mrb[0].mxu0
        %774 = vmatprep.mubr.bf16.mxu0 %v548
        %775 = vmatmul.mubr.bf16.gmra.mrb[0].mxu0 %v547
        %v776 = vpop.f32.mrb[0].mxu0
        %v777 = vadd.f32 %v412, %v776
        %v778 = vpop.f32.mrb[0].mxu0
        %v779 = vpop.f32.mrb[0].mxu0
        %v780 = vadd.f32 %v412, %v779
        %v781 = vpop.f32.mrb[0].mxu0
        %782 = vmatprep.mubr.bf16.mxu0 %v551
        %783 = vmatmul.mubr.bf16.gmra.mrb[0].mxu0 %v550
        %v784 = vpop.f32.mrb[0].mxu0
        %v785 = vadd.f32 %v412, %v784
        %v786 = vpop.f32.mrb[0].mxu0
        %v787 = vpop.f32.mrb[0].mxu0
        %v788 = vadd.f32 %v412, %v787
        %v789 = vpop.f32.mrb[0].mxu0
        %790 = vmatprep.mubr.bf16.mxu0 %v554
        %791 = vmatmul.mubr.bf16.gmra.mrb[0].mxu0 %v553
        %v792 = vpop.f32.mrb[0].mxu0
        %v793 = vadd.f32 %v412, %v792
        %v794 = vpop.f32.mrb[0].mxu0
        %v795 = vpop.f32.mrb[0].mxu0
        %v796 = vadd.f32 %v412, %v795
        %v797 = vpop.f32.mrb[0].mxu0
        %798 = vmatprep.mubr.bf16.mxu0 %v557
        %799 = vmatmul.mubr.bf16.gmra.mrb[0].mxu0 %v556
        %v800 = vpop.f32.mrb[0].mxu0
        %v801 = vadd.f32 %v412, %v800
        %v802 = vpop.f32.mrb[0].mxu0
        %v803 = vpop.f32.mrb[0].mxu0
        %v804 = vadd.f32 %v412, %v803
        %v805 = vpop.f32.mrb[0].mxu0
        %806 = vmatprep.mubr.bf16.mxu0 %v560
        %807 = vmatmul.mubr.bf16.gmra.mrb[0].mxu0 %v559
        %v808 = vpop.f32.mrb[0].mxu0
        %v809 = vadd.f32 %v412, %v808
        %v810 = vpop.f32.mrb[0].mxu0
        %v811 = vpop.f32.mrb[0].mxu0
        %v812 = vadd.f32 %v412, %v811
        %v813 = vpop.f32.mrb[0].mxu0
        %814 = vmatprep.mubr.bf16.mxu0 %v563
        %815 = vmatmul.mubr.bf16.gmra.mrb[0].mxu0 %v562
        %v816 = vpop.f32.mrb[0].mxu0
        %v817 = vadd.f32 %v412, %v816
        %v818 = vpop.f32.mrb[0].mxu0
        %v819 = vpop.f32.mrb[0].mxu0
        %v820 = vadd.f32 %v412, %v819
        %v821 = vpop.f32.mrb[0].mxu0
        %822 = vdwg.mxu0
        %823 = vmatprep.subr.bf16.mxu0 0
        %824 = vmatpush1.bf16.msra.mxu0 %v677
        %825 = vmatprep.subr.bf16.mxu0 0
        %826 = vmatpush1.bf16.msra.mxu0 %v678
        %827 = vmatprep.subr.bf16.mxu0 0
        %828 = vmatpush1.bf16.msra.mxu0 %v679
        %829 = vmatprep.subr.bf16.mxu0 0
        %830 = vmatpush1.bf16.msra.mxu0 %v680
        %831 = vmatprep.subr.bf16.mxu0 0
        %832 = vmatpush1.bf16.msra.mxu0 0
        %833 = vmatprep.subr.bf16.mxu0 0
        %834 = vmatpush1.bf16.msra.mxu0 0
        %835 = vmatprep.subr.bf16.mxu0 0
        %836 = vmatpush1.bf16.msra.mxu0 0
        %837 = vmatprep.subr.bf16.mxu0 0
        %838 = vmatpush1.bf16.msra.mxu0 0
        %839 = vmatprep.subr.bf16.mxu0 0
        %840 = vmatpush1.bf16.msra.mxu0 0
        %841 = vmatprep.subr.bf16.mxu0 0
        %842 = vmatpush1.bf16.msra.mxu0 0
        %843 = vmatprep.subr.bf16.mxu0 0
        %844 = vmatpush1.bf16.msra.mxu0 0
        %845 = vmatprep.subr.bf16.mxu0 0
        %846 = vmatpush1.bf16.msra.mxu0 0
        %847 = vmatprep.subr.bf16.mxu0 0
        %848 = vmatpush1.bf16.msra.mxu0 0
        %849 = vmatprep.subr.bf16.mxu0 0
        %850 = vmatpush1.bf16.msra.mxu0 0
        %851 = vmatprep.subr.bf16.mxu0 0
        %852 = vmatpush1.bf16.msra.mxu0 0
        %853 = vmatprep.subr.bf16.mxu0 0
        %854 = vmatpush1.bf16.msra.mxu0 0
        %855 = vmatprep.mubr.bf16.mxu0 0
        %856 = vmatmul.mubr.bf16.gmra.mrb[0].mxu0 %v703
        %v857 = vpop.f32.mrb[0].mxu0
        %v858 = vadd.f32 %v761, %v857
        %v859 = vpop.f32.mrb[0].mxu0
        %v860 = vpop.f32.mrb[0].mxu0
        %v861 = vadd.f32 %v764, %v860
        %v862 = vpop.f32.mrb[0].mxu0
        %863 = vmatprep.mubr.bf16.mxu0 0
        %864 = vmatmul.mubr.bf16.gmra.mrb[0].mxu0 %v706
        %v865 = vpop.f32.mrb[0].mxu0
        %v866 = vadd.f32 %v769, %v865
        %v867 = vpop.f32.mrb[0].mxu0
        %v868 = vpop.f32.mrb[0].mxu0
        %v869 = vadd.f32 %v772, %v868
        %v870 = vpop.f32.mrb[0].mxu0
        %871 = vmatprep.mubr.bf16.mxu0 0
        %872 = vmatmul.mubr.bf16.gmra.mrb[0].mxu0 %v709
        %v873 = vpop.f32.mrb[0].mxu0
        %v874 = vadd.f32 %v777, %v873
        %v875 = vpop.f32.mrb[0].mxu0
        %v876 = vpop.f32.mrb[0].mxu0
        %v877 = vadd.f32 %v780, %v876
        %v878 = vpop.f32.mrb[0].mxu0
        %879 = vmatprep.mubr.bf16.mxu0 0
        %880 = vmatmul.mubr.bf16.gmra.mrb[0].mxu0 %v712
        %v881 = vpop.f32.mrb[0].mxu0
        %v882 = vadd.f32 %v785, %v881
        %v883 = vpop.f32.mrb[0].mxu0
        %v884 = vpop.f32.mrb[0].mxu0
        %v885 = vadd.f32 %v788, %v884
        %v886 = vpop.f32.mrb[0].mxu0
        %887 = vmatprep.mubr.bf16.mxu0 0
        %888 = vmatmul.mubr.bf16.gmra.mrb[0].mxu0 %v715
        %v889 = vpop.f32.mrb[0].mxu0
        %v890 = vadd.f32 %v793, %v889
        %v891 = vpop.f32.mrb[0].mxu0
        %v892 = vpop.f32.mrb[0].mxu0
        %v893 = vadd.f32 %v796, %v892
        %v894 = vpop.f32.mrb[0].mxu0
        %895 = vmatprep.mubr.bf16.mxu0 0
        %896 = vmatmul.mubr.bf16.gmra.mrb[0].mxu0 %v718
        %v897 = vpop.f32.mrb[0].mxu0
        %v898 = vadd.f32 %v801, %v897
        %v899 = vpop.f32.mrb[0].mxu0
        %v900 = vpop.f32.mrb[0].mxu0
        %v901 = vadd.f32 %v804, %v900
        %v902 = vpop.f32.mrb[0].mxu0
        %903 = vmatprep.mubr.bf16.mxu0 0
        %904 = vmatmul.mubr.bf16.gmra.mrb[0].mxu0 %v721
        %v905 = vpop.f32.mrb[0].mxu0
        %v906 = vadd.f32 %v809, %v905
        %v907 = vpop.f32.mrb[0].mxu0
        %v908 = vpop.f32.mrb[0].mxu0
        %v909 = vadd.f32 %v812, %v908
        %v910 = vpop.f32.mrb[0].mxu0
        %911 = vmatprep.mubr.bf16.mxu0 0
        %912 = vmatmul.mubr.bf16.gmra.mrb[0].mxu0 %v724
        %v913 = vpop.f32.mrb[0].mxu0
        %v914 = vadd.f32 %v817, %v913
        %v915 = vpop.f32.mrb[0].mxu0
        %v916 = vpop.f32.mrb[0].mxu0
        %v917 = vadd.f32 %v820, %v916
        %v918 = vpop.f32.mrb[0].mxu0
        %919 = vdwg.mxu0
        %v920 = vmax.f32 %v858, 0.0
        %v921 = vmax.f32 %v861, 0.0
        %v922 = vmax.f32 %v866, 0.0
        %v923 = vmax.f32 %v869, 0.0
        %v924 = vmax.f32 %v874, 0.0
        %v925 = vmax.f32 %v877, 0.0
        %v926 = vmax.f32 %v882, 0.0
        %v927 = vmax.f32 %v885, 0.0
        %v928 = vmax.f32 %v890, 0.0
        %v929 = vmax.f32 %v893, 0.0
        %v930 = vmax.f32 %v898, 0.0
        %v931 = vmax.f32 %v901, 0.0
        %v932 = vmax.f32 %v906, 0.0
        %v933 = vmax.f32 %v909, 0.0
        %v934 = vmax.f32 %v914, 0.0
        %v935 = vmax.f32 %v917, 0.0
        %936 = vadd.xlane.f32.xlu0 %v920
        %v937 = vpop.xlane.xlu0 %936
        %938 = vadd.xlane.f32.xlu0 %v921
        %v939 = vpop.xlane.xlu0 %938
        %940 = vadd.xlane.f32.xlu0 %v922
        %v941 = vpop.xlane.xlu0 %940
        %942 = vadd.xlane.f32.xlu0 %v923
        %v943 = vpop.xlane.xlu0 %942
        %944 = vadd.xlane.f32.xlu0 %v924
        %v945 = vpop.xlane.xlu0 %944
        %946 = vadd.xlane.f32.xlu0 %v925
        %v947 = vpop.xlane.xlu0 %946
        %948 = vadd.xlane.f32.xlu0 %v926
        %v949 = vpop.xlane.xlu0 %948
        %950 = vadd.xlane.f32.xlu0 %v927
        %v951 = vpop.xlane.xlu0 %950
        %952 = vadd.xlane.f32.xlu0 %v928
        %v953 = vpop.xlane.xlu0 %952
        %954 = vadd.xlane.f32.xlu0 %v929
        %v955 = vpop.xlane.xlu0 %954
        %956 = vadd.xlane.f32.xlu0 %v930
        %v957 = vpop.xlane.xlu0 %956
        %958 = vadd.xlane.f32.xlu0 %v931
        %v959 = vpop.xlane.xlu0 %958
        %960 = vadd.xlane.f32.xlu0 %v932
        %v961 = vpop.xlane.xlu0 %960
        %962 = vadd.xlane.f32.xlu0 %v933
        %v963 = vpop.xlane.xlu0 %962
        %964 = vadd.xlane.f32.xlu0 %v934
        %v965 = vpop.xlane.xlu0 %964
        %966 = vadd.xlane.f32.xlu0 %v935
        %v967 = vpop.xlane.xlu0 %966
        %v968 = vrcp.pop 128.0
        %v969 = vmul.f32 %v937, %v968
        %v970 = vmul.f32 %v939, %v968
        %v971 = vmul.f32 %v941, %v968
        %v972 = vmul.f32 %v943, %v968
        %v973 = vmul.f32 %v945, %v968
        %v974 = vmul.f32 %v947, %v968
        %v975 = vmul.f32 %v949, %v968
        %v976 = vmul.f32 %v951, %v968
        %v977 = vmul.f32 %v953, %v968
        %v978 = vmul.f32 %v955, %v968
        %v979 = vmul.f32 %v957, %v968
        %v980 = vmul.f32 %v959, %v968
        %v981 = vmul.f32 %v961, %v968
        %v982 = vmul.f32 %v963, %v968
        %v983 = vmul.f32 %v965, %v968
        %v984 = vmul.f32 %v967, %v968
        %v985 = vmul.f32 %v920, %v920
        %v986 = vmul.f32 %v921, %v921
        %v987 = vmul.f32 %v922, %v922
        %v988 = vmul.f32 %v923, %v923
        %v989 = vmul.f32 %v924, %v924
        %v990 = vmul.f32 %v925, %v925
        %v991 = vmul.f32 %v926, %v926
        %v992 = vmul.f32 %v927, %v927
        %v993 = vmul.f32 %v928, %v928
        %v994 = vmul.f32 %v929, %v929
        %v995 = vmul.f32 %v930, %v930
        %v996 = vmul.f32 %v931, %v931
        %v997 = vmul.f32 %v932, %v932
        %v998 = vmul.f32 %v933, %v933
        %v999 = vmul.f32 %v934, %v934
        %v1000 = vmul.f32 %v935, %v935
        %1001 = vadd.xlane.f32.xlu0 %v985
        %v1002 = vpop.xlane.xlu0 %1001
        %1003 = vadd.xlane.f32.xlu0 %v986
        %v1004 = vpop.xlane.xlu0 %1003
        %1005 = vadd.xlane.f32.xlu0 %v987
        %v1006 = vpop.xlane.xlu0 %1005
        %1007 = vadd.xlane.f32.xlu0 %v988
        %v1008 = vpop.xlane.xlu0 %1007
        %1009 = vadd.xlane.f32.xlu0 %v989
        %v1010 = vpop.xlane.xlu0 %1009
        %1011 = vadd.xlane.f32.xlu0 %v990
        %v1012 = vpop.xlane.xlu0 %1011
        %1013 = vadd.xlane.f32.xlu0 %v991
        %v1014 = vpop.xlane.xlu0 %1013
        %1015 = vadd.xlane.f32.xlu0 %v992
        %v1016 = vpop.xlane.xlu0 %1015
        %1017 = vadd.xlane.f32.xlu0 %v993
        %v1018 = vpop.xlane.xlu0 %1017
        %1019 = vadd.xlane.f32.xlu0 %v994
        %v1020 = vpop.xlane.xlu0 %1019
        %1021 = vadd.xlane.f32.xlu0 %v995
        %v1022 = vpop.xlane.xlu0 %1021
        %1023 = vadd.xlane.f32.xlu0 %v996
        %v1024 = vpop.xlane.xlu0 %1023
        %1025 = vadd.xlane.f32.xlu0 %v997
        %v1026 = vpop.xlane.xlu0 %1025
        %1027 = vadd.xlane.f32.xlu0 %v998
        %v1028 = vpop.xlane.xlu0 %1027
        %1029 = vadd.xlane.f32.xlu0 %v999
        %v1030 = vpop.xlane.xlu0 %1029
        %1031 = vadd.xlane.f32.xlu0 %v1000
        %v1032 = vpop.xlane.xlu0 %1031
        %v1033 = vmul.f32 %v1002, %v968
        %v1034 = vmul.f32 %v1004, %v968
        %v1035 = vmul.f32 %v1006, %v968
        %v1036 = vmul.f32 %v1008, %v968
        %v1037 = vmul.f32 %v1010, %v968
        %v1038 = vmul.f32 %v1012, %v968
        %v1039 = vmul.f32 %v1014, %v968
        %v1040 = vmul.f32 %v1016, %v968
        %v1041 = vmul.f32 %v1018, %v968
        %v1042 = vmul.f32 %v1020, %v968
        %v1043 = vmul.f32 %v1022, %v968
        %v1044 = vmul.f32 %v1024, %v968
        %v1045 = vmul.f32 %v1026, %v968
        %v1046 = vmul.f32 %v1028, %v968
        %v1047 = vmul.f32 %v1030, %v968
        %v1048 = vmul.f32 %v1032, %v968
        %v1049 = vsub.f32 %v920, %v969
        %v1050 = vsub.f32 %v921, %v970
        %v1051 = vsub.f32 %v922, %v971
        %v1052 = vsub.f32 %v923, %v972
        %v1053 = vsub.f32 %v924, %v973
        %v1054 = vsub.f32 %v925, %v974
        %v1055 = vsub.f32 %v926, %v975
        %v1056 = vsub.f32 %v927, %v976
        %v1057 = vsub.f32 %v928, %v977
        %v1058 = vsub.f32 %v929, %v978
        %v1059 = vsub.f32 %v930, %v979
        %v1060 = vsub.f32 %v931, %v980
        %v1061 = vsub.f32 %v932, %v981
        %v1062 = vsub.f32 %v933, %v982
        %v1063 = vsub.f32 %v934, %v983
        %v1064 = vsub.f32 %v935, %v984
        %v1065 = vmul.f32 %v969, %v969
        %v1066 = vmul.f32 %v970, %v970
        %v1067 = vmul.f32 %v971, %v971
        %v1068 = vmul.f32 %v972, %v972
        %v1069 = vmul.f32 %v973, %v973
        %v1070 = vmul.f32 %v974, %v974
        %v1071 = vmul.f32 %v975, %v975
        %v1072 = vmul.f32 %v976, %v976
        %v1073 = vmul.f32 %v977, %v977
        %v1074 = vmul.f32 %v978, %v978
        %v1075 = vmul.f32 %v979, %v979
        %v1076 = vmul.f32 %v980, %v980
        %v1077 = vmul.f32 %v981, %v981
        %v1078 = vmul.f32 %v982, %v982
        %v1079 = vmul.f32 %v983, %v983
        %v1080 = vmul.f32 %v984, %v984
        %v1081 = vsub.f32 %v1033, %v1065
        %v1082 = vsub.f32 %v1034, %v1066
        %v1083 = vsub.f32 %v1035, %v1067
        %v1084 = vsub.f32 %v1036, %v1068
        %v1085 = vsub.f32 %v1037, %v1069
        %v1086 = vsub.f32 %v1038, %v1070
        %v1087 = vsub.f32 %v1039, %v1071
        %v1088 = vsub.f32 %v1040, %v1072
        %v1089 = vsub.f32 %v1041, %v1073
        %v1090 = vsub.f32 %v1042, %v1074
        %v1091 = vsub.f32 %v1043, %v1075
        %v1092 = vsub.f32 %v1044, %v1076
        %v1093 = vsub.f32 %v1045, %v1077
        %v1094 = vsub.f32 %v1046, %v1078
        %v1095 = vsub.f32 %v1047, %v1079
        %v1096 = vsub.f32 %v1048, %v1080
        %v1097 = vadd.f32 %v1081, 1e-05
        %v1098 = vadd.f32 %v1082, 1e-05
        %v1099 = vadd.f32 %v1083, 1e-05
        %v1100 = vadd.f32 %v1084, 1e-05
        %v1101 = vadd.f32 %v1085, 1e-05
        %v1102 = vadd.f32 %v1086, 1e-05
        %v1103 = vadd.f32 %v1087, 1e-05
        %v1104 = vadd.f32 %v1088, 1e-05
        %v1105 = vadd.f32 %v1089, 1e-05
        %v1106 = vadd.f32 %v1090, 1e-05
        %v1107 = vadd.f32 %v1091, 1e-05
        %v1108 = vadd.f32 %v1092, 1e-05
        %v1109 = vadd.f32 %v1093, 1e-05
        %v1110 = vadd.f32 %v1094, 1e-05
        %v1111 = vadd.f32 %v1095, 1e-05
        %v1112 = vadd.f32 %v1096, 1e-05
        %v1113 = vrsqrt.pop %v1097
        %v1114 = vrsqrt.pop %v1098
        %v1115 = vrsqrt.pop %v1099
        %v1116 = vrsqrt.pop %v1100
        %v1117 = vrsqrt.pop %v1101
        %v1118 = vrsqrt.pop %v1102
        %v1119 = vrsqrt.pop %v1103
        %v1120 = vrsqrt.pop %v1104
        %v1121 = vrsqrt.pop %v1105
        %v1122 = vrsqrt.pop %v1106
        %v1123 = vrsqrt.pop %v1107
        %v1124 = vrsqrt.pop %v1108
        %v1125 = vrsqrt.pop %v1109
        %v1126 = vrsqrt.pop %v1110
        %v1127 = vrsqrt.pop %v1111
        %v1128 = vrsqrt.pop %v1112
        %v1129 = vmul.f32 %v1049, %v1113
        %v1130 = vmul.f32 %v1050, %v1114
        %v1131 = vmul.f32 %v1051, %v1115
        %v1132 = vmul.f32 %v1052, %v1116
        %v1133 = vmul.f32 %v1053, %v1117
        %v1134 = vmul.f32 %v1054, %v1118
        %v1135 = vmul.f32 %v1055, %v1119
        %v1136 = vmul.f32 %v1056, %v1120
        %v1137 = vmul.f32 %v1057, %v1121
        %v1138 = vmul.f32 %v1058, %v1122
        %v1139 = vmul.f32 %v1059, %v1123
        %v1140 = vmul.f32 %v1060, %v1124
        %v1141 = vmul.f32 %v1061, %v1125
        %v1142 = vmul.f32 %v1062, %v1126
        %v1143 = vmul.f32 %v1063, %v1127
        %v1144 = vmul.f32 %v1064, %v1128
        %v1145 = vmul.f32 %v1129, %v413
        %v1146 = vmul.f32 %v1130, %v413
        %v1147 = vmul.f32 %v1131, %v413
        %v1148 = vmul.f32 %v1132, %v413
        %v1149 = vmul.f32 %v1133, %v413
        %v1150 = vmul.f32 %v1134, %v413
        %v1151 = vmul.f32 %v1135, %v413
        %v1152 = vmul.f32 %v1136, %v413
        %v1153 = vmul.f32 %v1137, %v413
        %v1154 = vmul.f32 %v1138, %v413
        %v1155 = vmul.f32 %v1139, %v413
        %v1156 = vmul.f32 %v1140, %v413
        %v1157 = vmul.f32 %v1141, %v413
        %v1158 = vmul.f32 %v1142, %v413
        %v1159 = vmul.f32 %v1143, %v413
        %v1160 = vmul.f32 %v1144, %v413
        %v1161 = vadd.f32 %v1145, %v414
        %v1162 = vadd.f32 %v1146, %v414
        %v1163 = vadd.f32 %v1147, %v414
        %v1164 = vadd.f32 %v1148, %v414
        %v1165 = vadd.f32 %v1149, %v414
        %v1166 = vadd.f32 %v1150, %v414
        %v1167 = vadd.f32 %v1151, %v414
        %v1168 = vadd.f32 %v1152, %v414
        %v1169 = vadd.f32 %v1153, %v414
        %v1170 = vadd.f32 %v1154, %v414
        %v1171 = vadd.f32 %v1155, %v414
        %v1172 = vadd.f32 %v1156, %v414
        %v1173 = vadd.f32 %v1157, %v414
        %v1174 = vadd.f32 %v1158, %v414
        %v1175 = vadd.f32 %v1159, %v414
        %v1176 = vadd.f32 %v1160, %v414
        %v1177 = vpack.c.bf16 %v1162, %v1161
        %v1178 = vpack.c.bf16 %v1164, %v1163
        %v1179 = vpack.c.bf16 %v1166, %v1165
        %v1180 = vpack.c.bf16 %v1168, %v1167
        %v1181 = vpack.c.bf16 %v1170, %v1169
        %v1182 = vpack.c.bf16 %v1172, %v1171
        %v1183 = vpack.c.bf16 %v1174, %v1173
        %v1184 = vpack.c.bf16 %v1176, %v1175
        %v1185 = vld [vmem:[%s2] sm:$0xf]
        %v1186 = vld [vmem:[%s2 + $0x4] sm:$0xf]
        %v1187 = vld [vmem:[%s2 + $0x8] sm:$0xf]
        %v1188 = vld [vmem:[%s2 + $0xc] sm:$0xf]
        %v1189 = vld [vmem:[%s2 + $0x10] sm:$0xf]
        %v1190 = vld [vmem:[%s2 + $0x14] sm:$0xf]
        %v1191 = vld [vmem:[%s2 + $0x18] sm:$0xf]
        %v1192 = vld [vmem:[%s2 + $0x1c] sm:$0xf]
        %v1193 = vld [vmem:[%s2 + $0x20] sm:$0xf]
        %v1194 = vld [vmem:[%s2 + $0x24] sm:$0xf]
        %v1195 = vld [vmem:[%s2 + $0x28] sm:$0xf]
        %v1196 = vld [vmem:[%s2 + $0x2c] sm:$0xf]
        %v1197 = vld [vmem:[%s2 + $0x30] sm:$0xf]
        %v1198 = vld [vmem:[%s2 + $0x34] sm:$0xf]
        %v1199 = vld [vmem:[%s2 + $0x38] sm:$0xf]
        %v1200 = vld [vmem:[%s2 + $0x3c] sm:$0xf]
        %v1217 = vunpack.c.l.b16 %v1185
        %v1218 = vunpack.c.l.b16 %v1186
        %v1219 = vunpack.c.l.b16 %v1187
        %v1220 = vunpack.c.l.b16 %v1188
        %v1221 = vunpack.c.l.b16 %v1189
        %v1222 = vunpack.c.l.b16 %v1190
        %v1223 = vunpack.c.l.b16 %v1191
        %v1224 = vunpack.c.l.b16 %v1192
        %v1225 = vunpack.c.l.b16 %v1193
        %v1226 = vunpack.c.l.b16 %v1194
        %v1227 = vunpack.c.l.b16 %v1195
        %v1228 = vunpack.c.l.b16 %v1196
        %v1229 = vunpack.c.l.b16 %v1197
        %v1230 = vunpack.c.l.b16 %v1198
        %v1231 = vunpack.c.l.b16 %v1199
        %v1232 = vunpack.c.l.b16 %v1200
        %v1233 = vpack.c.b16 %v1218, %v1217
        %v1234 = vpack.c.b16 %v1220, %v1219
        %v1235 = vpack.c.b16 %v1222, %v1221
        %v1236 = vpack.c.b16 %v1224, %v1223
        %v1237 = vpack.c.b16 %v1226, %v1225
        %v1238 = vpack.c.b16 %v1228, %v1227
        %v1239 = vpack.c.b16 %v1230, %v1229
        %v1240 = vpack.c.b16 %v1232, %v1231
        %1249 = vmatprep.subr.bf16.mxu0 0
        %1250 = vmatpush1.bf16.msra.mxu0 %v1233
        %1251 = vmatprep.subr.bf16.mxu0 0
        %1252 = vmatpush1.bf16.msra.mxu0 %v1234
        %1253 = vmatprep.subr.bf16.mxu0 0
        %1254 = vmatpush1.bf16.msra.mxu0 %v1235
        %1255 = vmatprep.subr.bf16.mxu0 0
        %1256 = vmatpush1.bf16.msra.mxu0 %v1236
        %1257 = vmatprep.subr.bf16.mxu0 0
        %1258 = vmatpush1.bf16.msra.mxu0 %v1237
        %1259 = vmatprep.subr.bf16.mxu0 0
        %1260 = vmatpush1.bf16.msra.mxu0 %v1238
        %1261 = vmatprep.subr.bf16.mxu0 0
        %1262 = vmatpush1.bf16.msra.mxu0 %v1239
        %1263 = vmatprep.subr.bf16.mxu0 0
        %1264 = vmatpush1.bf16.msra.mxu0 %v1240
        %1265 = vmatprep.subr.bf16.mxu0 0
        %1266 = vmatpush1.bf16.msra.mxu0 0
        %1267 = vmatprep.subr.bf16.mxu0 0
        %1268 = vmatpush1.bf16.msra.mxu0 0
        %1269 = vmatprep.subr.bf16.mxu0 0
        %1270 = vmatpush1.bf16.msra.mxu0 0
        %1271 = vmatprep.subr.bf16.mxu0 0
        %1272 = vmatpush1.bf16.msra.mxu0 0
        %1273 = vmatprep.subr.bf16.mxu0 0
        %1274 = vmatpush1.bf16.msra.mxu0 0
        %1275 = vmatprep.subr.bf16.mxu0 0
        %1276 = vmatpush1.bf16.msra.mxu0 0
        %1277 = vmatprep.subr.bf16.mxu0 0
        %1278 = vmatpush1.bf16.msra.mxu0 0
        %1279 = vmatprep.subr.bf16.mxu0 0
        %1280 = vmatpush1.bf16.msra.mxu0 0
        %1281 = vmatprep.mubr.bf16.mxu0 0
        %1282 = vmatmul.mubr.bf16.gmra.mrb[0].mxu0 %v1177
        %v1283 = vpop.f32.mrb[0].mxu0
        %v1284 = vadd.f32 0.0, %v1283
        %v1285 = vpop.f32.mrb[0].mxu0
        %v1286 = vpop.f32.mrb[0].mxu0
        %v1287 = vadd.f32 0.0, %v1286
        %v1288 = vpop.f32.mrb[0].mxu0
        %1289 = vmatprep.mubr.bf16.mxu0 0
        %1290 = vmatmul.mubr.bf16.gmra.mrb[0].mxu0 %v1178
        %v1291 = vpop.f32.mrb[0].mxu0
        %v1292 = vadd.f32 0.0, %v1291
        %v1293 = vpop.f32.mrb[0].mxu0
        %v1294 = vpop.f32.mrb[0].mxu0
        %v1295 = vadd.f32 0.0, %v1294
        %v1296 = vpop.f32.mrb[0].mxu0
        %1297 = vmatprep.mubr.bf16.mxu0 0
        %1298 = vmatmul.mubr.bf16.gmra.mrb[0].mxu0 %v1179
        %v1299 = vpop.f32.mrb[0].mxu0
        %v1300 = vadd.f32 0.0, %v1299
        %v1301 = vpop.f32.mrb[0].mxu0
        %v1302 = vpop.f32.mrb[0].mxu0
        %v1303 = vadd.f32 0.0, %v1302
        %v1304 = vpop.f32.mrb[0].mxu0
        %1305 = vmatprep.mubr.bf16.mxu0 0
        %1306 = vmatmul.mubr.bf16.gmra.mrb[0].mxu0 %v1180
        %v1307 = vpop.f32.mrb[0].mxu0
        %v1308 = vadd.f32 0.0, %v1307
        %v1309 = vpop.f32.mrb[0].mxu0
        %v1310 = vpop.f32.mrb[0].mxu0
        %v1311 = vadd.f32 0.0, %v1310
        %v1312 = vpop.f32.mrb[0].mxu0
        %1313 = vmatprep.mubr.bf16.mxu0 0
        %1314 = vmatmul.mubr.bf16.gmra.mrb[0].mxu0 %v1181
        %v1315 = vpop.f32.mrb[0].mxu0
        %v1316 = vadd.f32 0.0, %v1315
        %v1317 = vpop.f32.mrb[0].mxu0
        %v1318 = vpop.f32.mrb[0].mxu0
        %v1319 = vadd.f32 0.0, %v1318
        %v1320 = vpop.f32.mrb[0].mxu0
        %1321 = vmatprep.mubr.bf16.mxu0 0
        %1322 = vmatmul.mubr.bf16.gmra.mrb[0].mxu0 %v1182
        %v1323 = vpop.f32.mrb[0].mxu0
        %v1324 = vadd.f32 0.0, %v1323
        %v1325 = vpop.f32.mrb[0].mxu0
        %v1326 = vpop.f32.mrb[0].mxu0
        %v1327 = vadd.f32 0.0, %v1326
        %v1328 = vpop.f32.mrb[0].mxu0
        %1329 = vmatprep.mubr.bf16.mxu0 0
        %1330 = vmatmul.mubr.bf16.gmra.mrb[0].mxu0 %v1183
        %v1331 = vpop.f32.mrb[0].mxu0
        %v1332 = vadd.f32 0.0, %v1331
        %v1333 = vpop.f32.mrb[0].mxu0
        %v1334 = vpop.f32.mrb[0].mxu0
        %v1335 = vadd.f32 0.0, %v1334
        %v1336 = vpop.f32.mrb[0].mxu0
        %1337 = vmatprep.mubr.bf16.mxu0 0
        %1338 = vmatmul.mubr.bf16.gmra.mrb[0].mxu0 %v1184
        %v1339 = vpop.f32.mrb[0].mxu0
        %v1340 = vadd.f32 0.0, %v1339
        %v1341 = vpop.f32.mrb[0].mxu0
        %v1342 = vpop.f32.mrb[0].mxu0
        %v1343 = vadd.f32 0.0, %v1342
        %v1344 = vpop.f32.mrb[0].mxu0
        %1345 = vdwg.mxu0
        %v1346 = vld [vmem:[%s3] sm:$0xf]
        %v1347 = vld [vmem:[%s3 + $0x4] sm:$0xf]
        %v1348 = vld [vmem:[%s3 + $0x8] sm:$0xf]
        %v1349 = vld [vmem:[%s3 + $0xc] sm:$0xf]
        %v1350 = vld [vmem:[%s3 + $0x10] sm:$0xf]
        %v1351 = vld [vmem:[%s3 + $0x14] sm:$0xf]
        %v1352 = vld [vmem:[%s3 + $0x18] sm:$0xf]
        %v1353 = vld [vmem:[%s3 + $0x1c] sm:$0xf]
        %v1354 = vld [vmem:[%s3 + $0x20] sm:$0xf]
        %v1355 = vld [vmem:[%s3 + $0x24] sm:$0xf]
        %v1356 = vld [vmem:[%s3 + $0x28] sm:$0xf]
        %v1357 = vld [vmem:[%s3 + $0x2c] sm:$0xf]
        %v1358 = vld [vmem:[%s3 + $0x30] sm:$0xf]
        %v1359 = vld [vmem:[%s3 + $0x34] sm:$0xf]
        %v1360 = vld [vmem:[%s3 + $0x38] sm:$0xf]
        %v1361 = vld [vmem:[%s3 + $0x3c] sm:$0xf]
        %v1378 = vunpack.c.l.b16 %v1346
        %v1379 = vunpack.c.l.b16 %v1347
        %v1380 = vunpack.c.l.b16 %v1348
        %v1381 = vunpack.c.l.b16 %v1349
        %v1382 = vunpack.c.l.b16 %v1350
        %v1383 = vunpack.c.l.b16 %v1351
        %v1384 = vunpack.c.l.b16 %v1352
        %v1385 = vunpack.c.l.b16 %v1353
        %v1386 = vunpack.c.l.b16 %v1354
        %v1387 = vunpack.c.l.b16 %v1355
        %v1388 = vunpack.c.l.b16 %v1356
        %v1389 = vunpack.c.l.b16 %v1357
        %v1390 = vunpack.c.l.b16 %v1358
        %v1391 = vunpack.c.l.b16 %v1359
        %v1392 = vunpack.c.l.b16 %v1360
        %v1393 = vunpack.c.l.b16 %v1361
        %v1394 = vpack.c.b16 %v1379, %v1378
        %v1395 = vpack.c.b16 %v1381, %v1380
        %v1396 = vpack.c.b16 %v1383, %v1382
        %v1397 = vpack.c.b16 %v1385, %v1384
        %v1398 = vpack.c.b16 %v1387, %v1386
        %v1399 = vpack.c.b16 %v1389, %v1388
        %v1400 = vpack.c.b16 %v1391, %v1390
        %v1401 = vpack.c.b16 %v1393, %v1392
        %1410 = vmatprep.subr.bf16.mxu0 0
        %1411 = vmatpush1.bf16.msra.mxu0 %v1394
        %1412 = vmatprep.subr.bf16.mxu0 0
        %1413 = vmatpush1.bf16.msra.mxu0 %v1395
        %1414 = vmatprep.subr.bf16.mxu0 0
        %1415 = vmatpush1.bf16.msra.mxu0 %v1396
        %1416 = vmatprep.subr.bf16.mxu0 0
        %1417 = vmatpush1.bf16.msra.mxu0 %v1397
        %1418 = vmatprep.subr.bf16.mxu0 0
        %1419 = vmatpush1.bf16.msra.mxu0 %v1398
        %1420 = vmatprep.subr.bf16.mxu0 0
        %1421 = vmatpush1.bf16.msra.mxu0 %v1399
        %1422 = vmatprep.subr.bf16.mxu0 0
        %1423 = vmatpush1.bf16.msra.mxu0 %v1400
        %1424 = vmatprep.subr.bf16.mxu0 0
        %1425 = vmatpush1.bf16.msra.mxu0 %v1401
        %1426 = vmatprep.subr.bf16.mxu0 0
        %1427 = vmatpush1.bf16.msra.mxu0 0
        %1428 = vmatprep.subr.bf16.mxu0 0
        %1429 = vmatpush1.bf16.msra.mxu0 0
        %1430 = vmatprep.subr.bf16.mxu0 0
        %1431 = vmatpush1.bf16.msra.mxu0 0
        %1432 = vmatprep.subr.bf16.mxu0 0
        %1433 = vmatpush1.bf16.msra.mxu0 0
        %1434 = vmatprep.subr.bf16.mxu0 0
        %1435 = vmatpush1.bf16.msra.mxu0 0
        %1436 = vmatprep.subr.bf16.mxu0 0
        %1437 = vmatpush1.bf16.msra.mxu0 0
        %1438 = vmatprep.subr.bf16.mxu0 0
        %1439 = vmatpush1.bf16.msra.mxu0 0
        %1440 = vmatprep.subr.bf16.mxu0 0
        %1441 = vmatpush1.bf16.msra.mxu0 0
        %1442 = vmatprep.mubr.bf16.mxu0 0
        %1443 = vmatmul.mubr.bf16.gmra.mrb[0].mxu0 %v1177
        %v1444 = vpop.f32.mrb[0].mxu0
        %v1445 = vadd.f32 0.0, %v1444
        %v1446 = vpop.f32.mrb[0].mxu0
        %v1447 = vpop.f32.mrb[0].mxu0
        %v1448 = vadd.f32 0.0, %v1447
        %v1449 = vpop.f32.mrb[0].mxu0
        %1450 = vmatprep.mubr.bf16.mxu0 0
        %1451 = vmatmul.mubr.bf16.gmra.mrb[0].mxu0 %v1178
        %v1452 = vpop.f32.mrb[0].mxu0
        %v1453 = vadd.f32 0.0, %v1452
        %v1454 = vpop.f32.mrb[0].mxu0
        %v1455 = vpop.f32.mrb[0].mxu0
        %v1456 = vadd.f32 0.0, %v1455
        %v1457 = vpop.f32.mrb[0].mxu0
        %1458 = vmatprep.mubr.bf16.mxu0 0
        %1459 = vmatmul.mubr.bf16.gmra.mrb[0].mxu0 %v1179
        %v1460 = vpop.f32.mrb[0].mxu0
        %v1461 = vadd.f32 0.0, %v1460
        %v1462 = vpop.f32.mrb[0].mxu0
        %v1463 = vpop.f32.mrb[0].mxu0
        %v1464 = vadd.f32 0.0, %v1463
        %v1465 = vpop.f32.mrb[0].mxu0
        %1466 = vmatprep.mubr.bf16.mxu0 0
        %1467 = vmatmul.mubr.bf16.gmra.mrb[0].mxu0 %v1180
        %v1468 = vpop.f32.mrb[0].mxu0
        %v1469 = vadd.f32 0.0, %v1468
        %v1470 = vpop.f32.mrb[0].mxu0
        %v1471 = vpop.f32.mrb[0].mxu0
        %v1472 = vadd.f32 0.0, %v1471
        %v1473 = vpop.f32.mrb[0].mxu0
        %1474 = vmatprep.mubr.bf16.mxu0 0
        %1475 = vmatmul.mubr.bf16.gmra.mrb[0].mxu0 %v1181
        %v1476 = vpop.f32.mrb[0].mxu0
        %v1477 = vadd.f32 0.0, %v1476
        %v1478 = vpop.f32.mrb[0].mxu0
        %v1479 = vpop.f32.mrb[0].mxu0
        %v1480 = vadd.f32 0.0, %v1479
        %v1481 = vpop.f32.mrb[0].mxu0
        %1482 = vmatprep.mubr.bf16.mxu0 0
        %1483 = vmatmul.mubr.bf16.gmra.mrb[0].mxu0 %v1182
        %v1484 = vpop.f32.mrb[0].mxu0
        %v1485 = vadd.f32 0.0, %v1484
        %v1486 = vpop.f32.mrb[0].mxu0
        %v1487 = vpop.f32.mrb[0].mxu0
        %v1488 = vadd.f32 0.0, %v1487
        %v1489 = vpop.f32.mrb[0].mxu0
        %1490 = vmatprep.mubr.bf16.mxu0 0
        %1491 = vmatmul.mubr.bf16.gmra.mrb[0].mxu0 %v1183
        %v1492 = vpop.f32.mrb[0].mxu0
        %v1493 = vadd.f32 0.0, %v1492
        %v1494 = vpop.f32.mrb[0].mxu0
        %v1495 = vpop.f32.mrb[0].mxu0
        %v1496 = vadd.f32 0.0, %v1495
        %v1497 = vpop.f32.mrb[0].mxu0
        %1498 = vmatprep.mubr.bf16.mxu0 0
        %1499 = vmatmul.mubr.bf16.gmra.mrb[0].mxu0 %v1184
        %v1500 = vpop.f32.mrb[0].mxu0
        %v1501 = vadd.f32 0.0, %v1500
        %v1502 = vpop.f32.mrb[0].mxu0
        %v1503 = vpop.f32.mrb[0].mxu0
        %v1504 = vadd.f32 0.0, %v1503
        %v1505 = vpop.f32.mrb[0].mxu0
        %1506 = vdwg.mxu0
        %v1507 = vld [vmem:[%s4] sm:$0xf]
        %v1508 = vld [vmem:[%s4 + $0x4] sm:$0xf]
        %v1509 = vld [vmem:[%s4 + $0x8] sm:$0xf]
        %v1510 = vld [vmem:[%s4 + $0xc] sm:$0xf]
        %v1511 = vld [vmem:[%s4 + $0x10] sm:$0xf]
        %v1512 = vld [vmem:[%s4 + $0x14] sm:$0xf]
        %v1513 = vld [vmem:[%s4 + $0x18] sm:$0xf]
        %v1514 = vld [vmem:[%s4 + $0x1c] sm:$0xf]
        %v1515 = vld [vmem:[%s4 + $0x20] sm:$0xf]
        %v1516 = vld [vmem:[%s4 + $0x24] sm:$0xf]
        %v1517 = vld [vmem:[%s4 + $0x28] sm:$0xf]
        %v1518 = vld [vmem:[%s4 + $0x2c] sm:$0xf]
        %v1519 = vld [vmem:[%s4 + $0x30] sm:$0xf]
        %v1520 = vld [vmem:[%s4 + $0x34] sm:$0xf]
        %v1521 = vld [vmem:[%s4 + $0x38] sm:$0xf]
        %v1522 = vld [vmem:[%s4 + $0x3c] sm:$0xf]
        %v1539 = vunpack.c.l.b16 %v1507
        %v1540 = vunpack.c.l.b16 %v1508
        %v1541 = vunpack.c.l.b16 %v1509
        %v1542 = vunpack.c.l.b16 %v1510
        %v1543 = vunpack.c.l.b16 %v1511
        %v1544 = vunpack.c.l.b16 %v1512
        %v1545 = vunpack.c.l.b16 %v1513
        %v1546 = vunpack.c.l.b16 %v1514
        %v1547 = vunpack.c.l.b16 %v1515
        %v1548 = vunpack.c.l.b16 %v1516
        %v1549 = vunpack.c.l.b16 %v1517
        %v1550 = vunpack.c.l.b16 %v1518
        %v1551 = vunpack.c.l.b16 %v1519
        %v1552 = vunpack.c.l.b16 %v1520
        %v1553 = vunpack.c.l.b16 %v1521
        %v1554 = vunpack.c.l.b16 %v1522
        %v1555 = vpack.c.b16 %v1540, %v1539
        %v1556 = vpack.c.b16 %v1542, %v1541
        %v1557 = vpack.c.b16 %v1544, %v1543
        %v1558 = vpack.c.b16 %v1546, %v1545
        %v1559 = vpack.c.b16 %v1548, %v1547
        %v1560 = vpack.c.b16 %v1550, %v1549
        %v1561 = vpack.c.b16 %v1552, %v1551
        %v1562 = vpack.c.b16 %v1554, %v1553
        %1571 = vmatprep.subr.bf16.mxu0 0
        %1572 = vmatpush1.bf16.msra.mxu0 %v1555
        %1573 = vmatprep.subr.bf16.mxu0 0
        %1574 = vmatpush1.bf16.msra.mxu0 %v1556
        %1575 = vmatprep.subr.bf16.mxu0 0
        %1576 = vmatpush1.bf16.msra.mxu0 %v1557
        %1577 = vmatprep.subr.bf16.mxu0 0
        %1578 = vmatpush1.bf16.msra.mxu0 %v1558
        %1579 = vmatprep.subr.bf16.mxu0 0
        %1580 = vmatpush1.bf16.msra.mxu0 %v1559
        %1581 = vmatprep.subr.bf16.mxu0 0
        %1582 = vmatpush1.bf16.msra.mxu0 %v1560
        %1583 = vmatprep.subr.bf16.mxu0 0
        %1584 = vmatpush1.bf16.msra.mxu0 %v1561
        %1585 = vmatprep.subr.bf16.mxu0 0
        %1586 = vmatpush1.bf16.msra.mxu0 %v1562
        %1587 = vmatprep.subr.bf16.mxu0 0
        %1588 = vmatpush1.bf16.msra.mxu0 0
        %1589 = vmatprep.subr.bf16.mxu0 0
        %1590 = vmatpush1.bf16.msra.mxu0 0
        %1591 = vmatprep.subr.bf16.mxu0 0
        %1592 = vmatpush1.bf16.msra.mxu0 0
        %1593 = vmatprep.subr.bf16.mxu0 0
        %1594 = vmatpush1.bf16.msra.mxu0 0
        %1595 = vmatprep.subr.bf16.mxu0 0
        %1596 = vmatpush1.bf16.msra.mxu0 0
        %1597 = vmatprep.subr.bf16.mxu0 0
        %1598 = vmatpush1.bf16.msra.mxu0 0
        %1599 = vmatprep.subr.bf16.mxu0 0
        %1600 = vmatpush1.bf16.msra.mxu0 0
        %1601 = vmatprep.subr.bf16.mxu0 0
        %1602 = vmatpush1.bf16.msra.mxu0 0
        %1603 = vmatprep.mubr.bf16.mxu0 0
        %1604 = vmatmul.mubr.bf16.gmra.mrb[0].mxu0 %v1177
        %v1605 = vpop.f32.mrb[0].mxu0
        %v1606 = vadd.f32 0.0, %v1605
        %v1607 = vpop.f32.mrb[0].mxu0
        %v1608 = vpop.f32.mrb[0].mxu0
        %v1609 = vadd.f32 0.0, %v1608
        %v1610 = vpop.f32.mrb[0].mxu0
        %1611 = vmatprep.mubr.bf16.mxu0 0
        %1612 = vmatmul.mubr.bf16.gmra.mrb[0].mxu0 %v1178
        %v1613 = vpop.f32.mrb[0].mxu0
        %v1614 = vadd.f32 0.0, %v1613
        %v1615 = vpop.f32.mrb[0].mxu0
        %v1616 = vpop.f32.mrb[0].mxu0
        %v1617 = vadd.f32 0.0, %v1616
        %v1618 = vpop.f32.mrb[0].mxu0
        %1619 = vmatprep.mubr.bf16.mxu0 0
        %1620 = vmatmul.mubr.bf16.gmra.mrb[0].mxu0 %v1179
        %v1621 = vpop.f32.mrb[0].mxu0
        %v1622 = vadd.f32 0.0, %v1621
        %v1623 = vpop.f32.mrb[0].mxu0
        %v1624 = vpop.f32.mrb[0].mxu0
        %v1625 = vadd.f32 0.0, %v1624
        %v1626 = vpop.f32.mrb[0].mxu0
        %1627 = vmatprep.mubr.bf16.mxu0 0
        %1628 = vmatmul.mubr.bf16.gmra.mrb[0].mxu0 %v1180
        %v1629 = vpop.f32.mrb[0].mxu0
        %v1630 = vadd.f32 0.0, %v1629
        %v1631 = vpop.f32.mrb[0].mxu0
        %v1632 = vpop.f32.mrb[0].mxu0
        %v1633 = vadd.f32 0.0, %v1632
        %v1634 = vpop.f32.mrb[0].mxu0
        %1635 = vmatprep.mubr.bf16.mxu0 0
        %1636 = vmatmul.mubr.bf16.gmra.mrb[0].mxu0 %v1181
        %v1637 = vpop.f32.mrb[0].mxu0
        %v1638 = vadd.f32 0.0, %v1637
        %v1639 = vpop.f32.mrb[0].mxu0
        %v1640 = vpop.f32.mrb[0].mxu0
        %v1641 = vadd.f32 0.0, %v1640
        %v1642 = vpop.f32.mrb[0].mxu0
        %1643 = vmatprep.mubr.bf16.mxu0 0
        %1644 = vmatmul.mubr.bf16.gmra.mrb[0].mxu0 %v1182
        %v1645 = vpop.f32.mrb[0].mxu0
        %v1646 = vadd.f32 0.0, %v1645
        %v1647 = vpop.f32.mrb[0].mxu0
        %v1648 = vpop.f32.mrb[0].mxu0
        %v1649 = vadd.f32 0.0, %v1648
        %v1650 = vpop.f32.mrb[0].mxu0
        %1651 = vmatprep.mubr.bf16.mxu0 0
        %1652 = vmatmul.mubr.bf16.gmra.mrb[0].mxu0 %v1183
        %v1653 = vpop.f32.mrb[0].mxu0
        %v1654 = vadd.f32 0.0, %v1653
        %v1655 = vpop.f32.mrb[0].mxu0
        %v1656 = vpop.f32.mrb[0].mxu0
        %v1657 = vadd.f32 0.0, %v1656
        %v1658 = vpop.f32.mrb[0].mxu0
        %1659 = vmatprep.mubr.bf16.mxu0 0
        %1660 = vmatmul.mubr.bf16.gmra.mrb[0].mxu0 %v1184
        %v1661 = vpop.f32.mrb[0].mxu0
        %v1662 = vadd.f32 0.0, %v1661
        %v1663 = vpop.f32.mrb[0].mxu0
        %v1664 = vpop.f32.mrb[0].mxu0
        %v1665 = vadd.f32 0.0, %v1664
        %v1666 = vpop.f32.mrb[0].mxu0
        %1667 = vdwg.mxu0
        %v1668 = vpack.c.bf16 %v1287, %v1284
        %v1669 = vpack.c.bf16 %v1295, %v1292
        %v1670 = vpack.c.bf16 %v1303, %v1300
        %v1671 = vpack.c.bf16 %v1311, %v1308
        %v1672 = vpack.c.bf16 %v1319, %v1316
        %v1673 = vpack.c.bf16 %v1327, %v1324
        %v1674 = vpack.c.bf16 %v1335, %v1332
        %v1675 = vpack.c.bf16 %v1343, %v1340
        %v1676 = vpack.c.bf16 %v1448, %v1445
        %v1677 = vpack.c.bf16 %v1456, %v1453
        %v1678 = vpack.c.bf16 %v1464, %v1461
        %v1679 = vpack.c.bf16 %v1472, %v1469
        %v1680 = vpack.c.bf16 %v1480, %v1477
        %v1681 = vpack.c.bf16 %v1488, %v1485
        %v1682 = vpack.c.bf16 %v1496, %v1493
        %v1683 = vpack.c.bf16 %v1504, %v1501
        %1684 = vmatprep.subr.bf16.mxu0 0
        %1685 = vmatpush1.bf16.xpose.msra.mxu0 %v1676
        %1686 = vmatprep.subr.bf16.mxu0 0
        %1687 = vmatpush1.bf16.xpose.msra.mxu0 %v1677
        %1688 = vmatprep.subr.bf16.mxu0 0
        %1689 = vmatpush1.bf16.xpose.msra.mxu0 %v1678
        %1690 = vmatprep.subr.bf16.mxu0 0
        %1691 = vmatpush1.bf16.xpose.msra.mxu0 %v1679
        %1692 = vmatprep.subr.bf16.mxu0 0
        %1693 = vmatpush1.bf16.xpose.msra.mxu0 %v1680
        %1694 = vmatprep.subr.bf16.mxu0 0
        %1695 = vmatpush1.bf16.xpose.msra.mxu0 %v1681
        %1696 = vmatprep.subr.bf16.mxu0 0
        %1697 = vmatpush1.bf16.xpose.msra.mxu0 %v1682
        %1698 = vmatprep.subr.bf16.mxu0 0
        %1699 = vmatpush1.bf16.xpose.msra.mxu0 %v1683
        %1700 = vmatprep.subr.bf16.mxu0 0
        %1701 = vmatpush1.bf16.xpose.msra.mxu0 0
        %1702 = vmatprep.subr.bf16.mxu0 0
        %1703 = vmatpush1.bf16.xpose.msra.mxu0 0
        %1704 = vmatprep.subr.bf16.mxu0 0
        %1705 = vmatpush1.bf16.xpose.msra.mxu0 0
        %1706 = vmatprep.subr.bf16.mxu0 0
        %1707 = vmatpush1.bf16.xpose.msra.mxu0 0
        %1708 = vmatprep.subr.bf16.mxu0 0
        %1709 = vmatpush1.bf16.xpose.msra.mxu0 0
        %1710 = vmatprep.subr.bf16.mxu0 0
        %1711 = vmatpush1.bf16.xpose.msra.mxu0 0
        %1712 = vmatprep.subr.bf16.mxu0 0
        %1713 = vmatpush1.bf16.xpose.msra.mxu0 0
        %1714 = vmatprep.subr.bf16.mxu0 0
        %1715 = vmatpush1.bf16.xpose.msra.mxu0 0
        %1716 = vmatprep.mubr.bf16.mxu0 0
        %1717 = vmatmul.mubr.bf16.gmra.mrb[0].mxu0 %v1668
        %v1718 = vpop.f32.mrb[0].mxu0
        %v1719 = vadd.f32 0.0, %v1718
        %v1720 = vpop.f32.mrb[0].mxu0
        %v1721 = vpop.f32.mrb[0].mxu0
        %v1722 = vadd.f32 0.0, %v1721
        %v1723 = vpop.f32.mrb[0].mxu0
        %1724 = vmatprep.mubr.bf16.mxu0 0
        %1725 = vmatmul.mubr.bf16.gmra.mrb[0].mxu0 %v1669
        %v1726 = vpop.f32.mrb[0].mxu0
        %v1727 = vadd.f32 0.0, %v1726
        %v1728 = vpop.f32.mrb[0].mxu0
        %v1729 = vpop.f32.mrb[0].mxu0
        %v1730 = vadd.f32 0.0, %v1729
        %v1731 = vpop.f32.mrb[0].mxu0
        %1732 = vmatprep.mubr.bf16.mxu0 0
        %1733 = vmatmul.mubr.bf16.gmra.mrb[0].mxu0 %v1670
        %v1734 = vpop.f32.mrb[0].mxu0
        %v1735 = vadd.f32 0.0, %v1734
        %v1736 = vpop.f32.mrb[0].mxu0
        %v1737 = vpop.f32.mrb[0].mxu0
        %v1738 = vadd.f32 0.0, %v1737
        %v1739 = vpop.f32.mrb[0].mxu0
        %1740 = vmatprep.mubr.bf16.mxu0 0
        %1741 = vmatmul.mubr.bf16.gmra.mrb[0].mxu0 %v1671
        %v1742 = vpop.f32.mrb[0].mxu0
        %v1743 = vadd.f32 0.0, %v1742
        %v1744 = vpop.f32.mrb[0].mxu0
        %v1745 = vpop.f32.mrb[0].mxu0
        %v1746 = vadd.f32 0.0, %v1745
        %v1747 = vpop.f32.mrb[0].mxu0
        %1748 = vmatprep.mubr.bf16.mxu0 0
        %1749 = vmatmul.mubr.bf16.gmra.mrb[0].mxu0 %v1672
        %v1750 = vpop.f32.mrb[0].mxu0
        %v1751 = vadd.f32 0.0, %v1750
        %v1752 = vpop.f32.mrb[0].mxu0
        %v1753 = vpop.f32.mrb[0].mxu0
        %v1754 = vadd.f32 0.0, %v1753
        %v1755 = vpop.f32.mrb[0].mxu0
        %1756 = vmatprep.mubr.bf16.mxu0 0
        %1757 = vmatmul.mubr.bf16.gmra.mrb[0].mxu0 %v1673
        %v1758 = vpop.f32.mrb[0].mxu0
        %v1759 = vadd.f32 0.0, %v1758
        %v1760 = vpop.f32.mrb[0].mxu0
        %v1761 = vpop.f32.mrb[0].mxu0
        %v1762 = vadd.f32 0.0, %v1761
        %v1763 = vpop.f32.mrb[0].mxu0
        %1764 = vmatprep.mubr.bf16.mxu0 0
        %1765 = vmatmul.mubr.bf16.gmra.mrb[0].mxu0 %v1674
        %v1766 = vpop.f32.mrb[0].mxu0
        %v1767 = vadd.f32 0.0, %v1766
        %v1768 = vpop.f32.mrb[0].mxu0
        %v1769 = vpop.f32.mrb[0].mxu0
        %v1770 = vadd.f32 0.0, %v1769
        %v1771 = vpop.f32.mrb[0].mxu0
        %1772 = vmatprep.mubr.bf16.mxu0 0
        %1773 = vmatmul.mubr.bf16.gmra.mrb[0].mxu0 %v1675
        %v1774 = vpop.f32.mrb[0].mxu0
        %v1775 = vadd.f32 0.0, %v1774
        %v1776 = vpop.f32.mrb[0].mxu0
        %v1777 = vpop.f32.mrb[0].mxu0
        %v1778 = vadd.f32 0.0, %v1777
        %v1779 = vpop.f32.mrb[0].mxu0
        %1780 = vdwg.mxu0
        %v1781 = vmul.f32 %v1719, 0.088388346
        %v1782 = vmul.f32 %v1722, 0.088388346
        %v1783 = vmul.f32 %v1727, 0.088388346
        %v1784 = vmul.f32 %v1730, 0.088388346
        %v1785 = vmul.f32 %v1735, 0.088388346
        %v1786 = vmul.f32 %v1738, 0.088388346
        %v1787 = vmul.f32 %v1743, 0.088388346
        %v1788 = vmul.f32 %v1746, 0.088388346
        %v1789 = vmul.f32 %v1751, 0.088388346
        %v1790 = vmul.f32 %v1754, 0.088388346
        %v1791 = vmul.f32 %v1759, 0.088388346
        %v1792 = vmul.f32 %v1762, 0.088388346
        %v1793 = vmul.f32 %v1767, 0.088388346
        %v1794 = vmul.f32 %v1770, 0.088388346
        %v1795 = vmul.f32 %v1775, 0.088388346
        %v1796 = vmul.f32 %v1778, 0.088388346
        %1797 = vmax.xlane.f32.xlu0 %v1781
        %v1798 = vpop.xlane.xlu0 %1797
        %1799 = vmax.xlane.f32.xlu0 %v1782
        %v1800 = vpop.xlane.xlu0 %1799
        %1801 = vmax.xlane.f32.xlu0 %v1783
        %v1802 = vpop.xlane.xlu0 %1801
        %1803 = vmax.xlane.f32.xlu0 %v1784
        %v1804 = vpop.xlane.xlu0 %1803
        %1805 = vmax.xlane.f32.xlu0 %v1785
        %v1806 = vpop.xlane.xlu0 %1805
        %1807 = vmax.xlane.f32.xlu0 %v1786
        %v1808 = vpop.xlane.xlu0 %1807
        %1809 = vmax.xlane.f32.xlu0 %v1787
        %v1810 = vpop.xlane.xlu0 %1809
        %1811 = vmax.xlane.f32.xlu0 %v1788
        %v1812 = vpop.xlane.xlu0 %1811
        %1813 = vmax.xlane.f32.xlu0 %v1789
        %v1814 = vpop.xlane.xlu0 %1813
        %1815 = vmax.xlane.f32.xlu0 %v1790
        %v1816 = vpop.xlane.xlu0 %1815
        %1817 = vmax.xlane.f32.xlu0 %v1791
        %v1818 = vpop.xlane.xlu0 %1817
        %1819 = vmax.xlane.f32.xlu0 %v1792
        %v1820 = vpop.xlane.xlu0 %1819
        %1821 = vmax.xlane.f32.xlu0 %v1793
        %v1822 = vpop.xlane.xlu0 %1821
        %1823 = vmax.xlane.f32.xlu0 %v1794
        %v1824 = vpop.xlane.xlu0 %1823
        %1825 = vmax.xlane.f32.xlu0 %v1795
        %v1826 = vpop.xlane.xlu0 %1825
        %1827 = vmax.xlane.f32.xlu0 %v1796
        %v1828 = vpop.xlane.xlu0 %1827
        %v1829 = vsub.f32 %v1781, %v1798
        %v1830 = vsub.f32 %v1782, %v1800
        %v1831 = vsub.f32 %v1783, %v1802
        %v1832 = vsub.f32 %v1784, %v1804
        %v1833 = vsub.f32 %v1785, %v1806
        %v1834 = vsub.f32 %v1786, %v1808
        %v1835 = vsub.f32 %v1787, %v1810
        %v1836 = vsub.f32 %v1788, %v1812
        %v1837 = vsub.f32 %v1789, %v1814
        %v1838 = vsub.f32 %v1790, %v1816
        %v1839 = vsub.f32 %v1791, %v1818
        %v1840 = vsub.f32 %v1792, %v1820
        %v1841 = vsub.f32 %v1793, %v1822
        %v1842 = vsub.f32 %v1794, %v1824
        %v1843 = vsub.f32 %v1795, %v1826
        %v1844 = vsub.f32 %v1796, %v1828
        %v1845 = vmul.f32 %v1829, 1.442695
        %v1846 = vpow.pop %v1845
        %v1847 = vmul.f32 %v1830, 1.442695
        %v1848 = vpow.pop %v1847
        %v1849 = vmul.f32 %v1831, 1.442695
        %v1850 = vpow.pop %v1849
        %v1851 = vmul.f32 %v1832, 1.442695
        %v1852 = vpow.pop %v1851
        %v1853 = vmul.f32 %v1833, 1.442695
        %v1854 = vpow.pop %v1853
        %v1855 = vmul.f32 %v1834, 1.442695
        %v1856 = vpow.pop %v1855
        %v1857 = vmul.f32 %v1835, 1.442695
        %v1858 = vpow.pop %v1857
        %v1859 = vmul.f32 %v1836, 1.442695
        %v1860 = vpow.pop %v1859
        %v1861 = vmul.f32 %v1837, 1.442695
        %v1862 = vpow.pop %v1861
        %v1863 = vmul.f32 %v1838, 1.442695
        %v1864 = vpow.pop %v1863
        %v1865 = vmul.f32 %v1839, 1.442695
        %v1866 = vpow.pop %v1865
        %v1867 = vmul.f32 %v1840, 1.442695
        %v1868 = vpow.pop %v1867
        %v1869 = vmul.f32 %v1841, 1.442695
        %v1870 = vpow.pop %v1869
        %v1871 = vmul.f32 %v1842, 1.442695
        %v1872 = vpow.pop %v1871
        %v1873 = vmul.f32 %v1843, 1.442695
        %v1874 = vpow.pop %v1873
        %v1875 = vmul.f32 %v1844, 1.442695
        %v1876 = vpow.pop %v1875
        %1877 = vadd.xlane.f32.xlu0 %v1846
        %v1878 = vpop.xlane.xlu0 %1877
        %1879 = vadd.xlane.f32.xlu0 %v1848
        %v1880 = vpop.xlane.xlu0 %1879
        %1881 = vadd.xlane.f32.xlu0 %v1850
        %v1882 = vpop.xlane.xlu0 %1881
        %1883 = vadd.xlane.f32.xlu0 %v1852
        %v1884 = vpop.xlane.xlu0 %1883
        %1885 = vadd.xlane.f32.xlu0 %v1854
        %v1886 = vpop.xlane.xlu0 %1885
        %1887 = vadd.xlane.f32.xlu0 %v1856
        %v1888 = vpop.xlane.xlu0 %1887
        %1889 = vadd.xlane.f32.xlu0 %v1858
        %v1890 = vpop.xlane.xlu0 %1889
        %1891 = vadd.xlane.f32.xlu0 %v1860
        %v1892 = vpop.xlane.xlu0 %1891
        %1893 = vadd.xlane.f32.xlu0 %v1862
        %v1894 = vpop.xlane.xlu0 %1893
        %1895 = vadd.xlane.f32.xlu0 %v1864
        %v1896 = vpop.xlane.xlu0 %1895
        %1897 = vadd.xlane.f32.xlu0 %v1866
        %v1898 = vpop.xlane.xlu0 %1897
        %1899 = vadd.xlane.f32.xlu0 %v1868
        %v1900 = vpop.xlane.xlu0 %1899
        %1901 = vadd.xlane.f32.xlu0 %v1870
        %v1902 = vpop.xlane.xlu0 %1901
        %1903 = vadd.xlane.f32.xlu0 %v1872
        %v1904 = vpop.xlane.xlu0 %1903
        %1905 = vadd.xlane.f32.xlu0 %v1874
        %v1906 = vpop.xlane.xlu0 %1905
        %1907 = vadd.xlane.f32.xlu0 %v1876
        %v1908 = vpop.xlane.xlu0 %1907
        %v1909 = vrcp.pop %v1878
        %v1910 = vrcp.pop %v1880
        %v1911 = vrcp.pop %v1882
        %v1912 = vrcp.pop %v1884
        %v1913 = vrcp.pop %v1886
        %v1914 = vrcp.pop %v1888
        %v1915 = vrcp.pop %v1890
        %v1916 = vrcp.pop %v1892
        %v1917 = vrcp.pop %v1894
        %v1918 = vrcp.pop %v1896
        %v1919 = vrcp.pop %v1898
        %v1920 = vrcp.pop %v1900
        %v1921 = vrcp.pop %v1902
        %v1922 = vrcp.pop %v1904
        %v1923 = vrcp.pop %v1906
        %v1924 = vrcp.pop %v1908
        %v1925 = vmul.f32 %v1846, %v1909
        %v1926 = vmul.f32 %v1848, %v1910
        %v1927 = vmul.f32 %v1850, %v1911
        %v1928 = vmul.f32 %v1852, %v1912
        %v1929 = vmul.f32 %v1854, %v1913
        %v1930 = vmul.f32 %v1856, %v1914
        %v1931 = vmul.f32 %v1858, %v1915
        %v1932 = vmul.f32 %v1860, %v1916
        %v1933 = vmul.f32 %v1862, %v1917
        %v1934 = vmul.f32 %v1864, %v1918
        %v1935 = vmul.f32 %v1866, %v1919
        %v1936 = vmul.f32 %v1868, %v1920
        %v1937 = vmul.f32 %v1870, %v1921
        %v1938 = vmul.f32 %v1872, %v1922
        %v1939 = vmul.f32 %v1874, %v1923
        %v1940 = vmul.f32 %v1876, %v1924
        %v1941 = vpack.c.bf16 %v1926, %v1925
        %v1942 = vpack.c.bf16 %v1928, %v1927
        %v1943 = vpack.c.bf16 %v1930, %v1929
        %v1944 = vpack.c.bf16 %v1932, %v1931
        %v1945 = vpack.c.bf16 %v1934, %v1933
        %v1946 = vpack.c.bf16 %v1936, %v1935
        %v1947 = vpack.c.bf16 %v1938, %v1937
        %v1948 = vpack.c.bf16 %v1940, %v1939
        %v1949 = vpack.c.bf16 %v1609, %v1606
        %v1950 = vpack.c.bf16 %v1617, %v1614
        %v1951 = vpack.c.bf16 %v1625, %v1622
        %v1952 = vpack.c.bf16 %v1633, %v1630
        %v1953 = vpack.c.bf16 %v1641, %v1638
        %v1954 = vpack.c.bf16 %v1649, %v1646
        %v1955 = vpack.c.bf16 %v1657, %v1654
        %v1956 = vpack.c.bf16 %v1665, %v1662
        %1957 = vmatprep.subr.bf16.mxu0 0
        %1958 = vmatpush1.bf16.msra.mxu0 %v1949
        %1959 = vmatprep.subr.bf16.mxu0 0
        %1960 = vmatpush1.bf16.msra.mxu0 %v1950
        %1961 = vmatprep.subr.bf16.mxu0 0
        %1962 = vmatpush1.bf16.msra.mxu0 %v1951
        %1963 = vmatprep.subr.bf16.mxu0 0
        %1964 = vmatpush1.bf16.msra.mxu0 %v1952
        %1965 = vmatprep.subr.bf16.mxu0 0
        %1966 = vmatpush1.bf16.msra.mxu0 %v1953
        %1967 = vmatprep.subr.bf16.mxu0 0
        %1968 = vmatpush1.bf16.msra.mxu0 %v1954
        %1969 = vmatprep.subr.bf16.mxu0 0
        %1970 = vmatpush1.bf16.msra.mxu0 %v1955
        %1971 = vmatprep.subr.bf16.mxu0 0
        %1972 = vmatpush1.bf16.msra.mxu0 %v1956
        %1973 = vmatprep.subr.bf16.mxu0 0
        %1974 = vmatpush1.bf16.msra.mxu0 0
        %1975 = vmatprep.subr.bf16.mxu0 0
        %1976 = vmatpush1.bf16.msra.mxu0 0
        %1977 = vmatprep.subr.bf16.mxu0 0
        %1978 = vmatpush1.bf16.msra.mxu0 0
        %1979 = vmatprep.subr.bf16.mxu0 0
        %1980 = vmatpush1.bf16.msra.mxu0 0
        %1981 = vmatprep.subr.bf16.mxu0 0
        %1982 = vmatpush1.bf16.msra.mxu0 0
        %1983 = vmatprep.subr.bf16.mxu0 0
        %1984 = vmatpush1.bf16.msra.mxu0 0
        %1985 = vmatprep.subr.bf16.mxu0 0
        %1986 = vmatpush1.bf16.msra.mxu0 0
        %1987 = vmatprep.subr.bf16.mxu0 0
        %1988 = vmatpush1.bf16.msra.mxu0 0
        %1989 = vmatprep.mubr.bf16.mxu0 0
        %1990 = vmatmul.mubr.bf16.gmra.mrb[0].mxu0 %v1941
        %v1991 = vpop.f32.mrb[0].mxu0
        %v1992 = vadd.f32 0.0, %v1991
        %v1993 = vpop.f32.mrb[0].mxu0
        %v1994 = vpop.f32.mrb[0].mxu0
        %v1995 = vadd.f32 0.0, %v1994
        %v1996 = vpop.f32.mrb[0].mxu0
        %1997 = vmatprep.mubr.bf16.mxu0 0
        %1998 = vmatmul.mubr.bf16.gmra.mrb[0].mxu0 %v1942
        %v1999 = vpop.f32.mrb[0].mxu0
        %v2000 = vadd.f32 0.0, %v1999
        %v2001 = vpop.f32.mrb[0].mxu0
        %v2002 = vpop.f32.mrb[0].mxu0
        %v2003 = vadd.f32 0.0, %v2002
        %v2004 = vpop.f32.mrb[0].mxu0
        %2005 = vmatprep.mubr.bf16.mxu0 0
        %2006 = vmatmul.mubr.bf16.gmra.mrb[0].mxu0 %v1943
        %v2007 = vpop.f32.mrb[0].mxu0
        %v2008 = vadd.f32 0.0, %v2007
        %v2009 = vpop.f32.mrb[0].mxu0
        %v2010 = vpop.f32.mrb[0].mxu0
        %v2011 = vadd.f32 0.0, %v2010
        %v2012 = vpop.f32.mrb[0].mxu0
        %2013 = vmatprep.mubr.bf16.mxu0 0
        %2014 = vmatmul.mubr.bf16.gmra.mrb[0].mxu0 %v1944
        %v2015 = vpop.f32.mrb[0].mxu0
        %v2016 = vadd.f32 0.0, %v2015
        %v2017 = vpop.f32.mrb[0].mxu0
        %v2018 = vpop.f32.mrb[0].mxu0
        %v2019 = vadd.f32 0.0, %v2018
        %v2020 = vpop.f32.mrb[0].mxu0
        %2021 = vmatprep.mubr.bf16.mxu0 0
        %2022 = vmatmul.mubr.bf16.gmra.mrb[0].mxu0 %v1945
        %v2023 = vpop.f32.mrb[0].mxu0
        %v2024 = vadd.f32 0.0, %v2023
        %v2025 = vpop.f32.mrb[0].mxu0
        %v2026 = vpop.f32.mrb[0].mxu0
        %v2027 = vadd.f32 0.0, %v2026
        %v2028 = vpop.f32.mrb[0].mxu0
        %2029 = vmatprep.mubr.bf16.mxu0 0
        %2030 = vmatmul.mubr.bf16.gmra.mrb[0].mxu0 %v1946
        %v2031 = vpop.f32.mrb[0].mxu0
        %v2032 = vadd.f32 0.0, %v2031
        %v2033 = vpop.f32.mrb[0].mxu0
        %v2034 = vpop.f32.mrb[0].mxu0
        %v2035 = vadd.f32 0.0, %v2034
        %v2036 = vpop.f32.mrb[0].mxu0
        %2037 = vmatprep.mubr.bf16.mxu0 0
        %2038 = vmatmul.mubr.bf16.gmra.mrb[0].mxu0 %v1947
        %v2039 = vpop.f32.mrb[0].mxu0
        %v2040 = vadd.f32 0.0, %v2039
        %v2041 = vpop.f32.mrb[0].mxu0
        %v2042 = vpop.f32.mrb[0].mxu0
        %v2043 = vadd.f32 0.0, %v2042
        %v2044 = vpop.f32.mrb[0].mxu0
        %2045 = vmatprep.mubr.bf16.mxu0 0
        %2046 = vmatmul.mubr.bf16.gmra.mrb[0].mxu0 %v1948
        %v2047 = vpop.f32.mrb[0].mxu0
        %v2048 = vadd.f32 0.0, %v2047
        %v2049 = vpop.f32.mrb[0].mxu0
        %v2050 = vpop.f32.mrb[0].mxu0
        %v2051 = vadd.f32 0.0, %v2050
        %v2052 = vpop.f32.mrb[0].mxu0
        %2053 = vdwg.mxu0
        %v2054 = vpack.c.bf16 %v1995, %v1992
        %v2055 = vpack.c.bf16 %v2003, %v2000
        %v2056 = vpack.c.bf16 %v2011, %v2008
        %v2057 = vpack.c.bf16 %v2019, %v2016
        %v2058 = vpack.c.bf16 %v2027, %v2024
        %v2059 = vpack.c.bf16 %v2035, %v2032
        %v2060 = vpack.c.bf16 %v2043, %v2040
        %v2061 = vpack.c.bf16 %v2051, %v2048
        %v2062 = vld [vmem:[%s5] sm:$0xf]
        %v2063 = vld [vmem:[%s5 + $0x4] sm:$0xf]
        %v2064 = vld [vmem:[%s5 + $0x8] sm:$0xf]
        %v2065 = vld [vmem:[%s5 + $0xc] sm:$0xf]
        %v2066 = vld [vmem:[%s5 + $0x10] sm:$0xf]
        %v2067 = vld [vmem:[%s5 + $0x14] sm:$0xf]
        %v2068 = vld [vmem:[%s5 + $0x18] sm:$0xf]
        %v2069 = vld [vmem:[%s5 + $0x1c] sm:$0xf]
        %v2070 = vld [vmem:[%s5 + $0x20] sm:$0xf]
        %v2071 = vld [vmem:[%s5 + $0x24] sm:$0xf]
        %v2072 = vld [vmem:[%s5 + $0x28] sm:$0xf]
        %v2073 = vld [vmem:[%s5 + $0x2c] sm:$0xf]
        %v2074 = vld [vmem:[%s5 + $0x30] sm:$0xf]
        %v2075 = vld [vmem:[%s5 + $0x34] sm:$0xf]
        %v2076 = vld [vmem:[%s5 + $0x38] sm:$0xf]
        %v2077 = vld [vmem:[%s5 + $0x3c] sm:$0xf]
        %v2094 = vunpack.c.l.b16 %v2062
        %v2095 = vunpack.c.l.b16 %v2063
        %v2096 = vunpack.c.l.b16 %v2064
        %v2097 = vunpack.c.l.b16 %v2065
        %v2098 = vunpack.c.l.b16 %v2066
        %v2099 = vunpack.c.l.b16 %v2067
        %v2100 = vunpack.c.l.b16 %v2068
        %v2101 = vunpack.c.l.b16 %v2069
        %v2102 = vunpack.c.l.b16 %v2070
        %v2103 = vunpack.c.l.b16 %v2071
        %v2104 = vunpack.c.l.b16 %v2072
        %v2105 = vunpack.c.l.b16 %v2073
        %v2106 = vunpack.c.l.b16 %v2074
        %v2107 = vunpack.c.l.b16 %v2075
        %v2108 = vunpack.c.l.b16 %v2076
        %v2109 = vunpack.c.l.b16 %v2077
        %v2110 = vpack.c.b16 %v2095, %v2094
        %v2111 = vpack.c.b16 %v2097, %v2096
        %v2112 = vpack.c.b16 %v2099, %v2098
        %v2113 = vpack.c.b16 %v2101, %v2100
        %v2114 = vpack.c.b16 %v2103, %v2102
        %v2115 = vpack.c.b16 %v2105, %v2104
        %v2116 = vpack.c.b16 %v2107, %v2106
        %v2117 = vpack.c.b16 %v2109, %v2108
        %2126 = vmatprep.subr.bf16.mxu0 0
        %2127 = vmatpush1.bf16.msra.mxu0 %v2110
        %2128 = vmatprep.subr.bf16.mxu0 0
        %2129 = vmatpush1.bf16.msra.mxu0 %v2111
        %2130 = vmatprep.subr.bf16.mxu0 0
        %2131 = vmatpush1.bf16.msra.mxu0 %v2112
        %2132 = vmatprep.subr.bf16.mxu0 0
        %2133 = vmatpush1.bf16.msra.mxu0 %v2113
        %2134 = vmatprep.subr.bf16.mxu0 0
        %2135 = vmatpush1.bf16.msra.mxu0 %v2114
        %2136 = vmatprep.subr.bf16.mxu0 0
        %2137 = vmatpush1.bf16.msra.mxu0 %v2115
        %2138 = vmatprep.subr.bf16.mxu0 0
        %2139 = vmatpush1.bf16.msra.mxu0 %v2116
        %2140 = vmatprep.subr.bf16.mxu0 0
        %2141 = vmatpush1.bf16.msra.mxu0 %v2117
        %2142 = vmatprep.subr.bf16.mxu0 0
        %2143 = vmatpush1.bf16.msra.mxu0 0
        %2144 = vmatprep.subr.bf16.mxu0 0
        %2145 = vmatpush1.bf16.msra.mxu0 0
        %2146 = vmatprep.subr.bf16.mxu0 0
        %2147 = vmatpush1.bf16.msra.mxu0 0
        %2148 = vmatprep.subr.bf16.mxu0 0
        %2149 = vmatpush1.bf16.msra.mxu0 0
        %2150 = vmatprep.subr.bf16.mxu0 0
        %2151 = vmatpush1.bf16.msra.mxu0 0
        %2152 = vmatprep.subr.bf16.mxu0 0
        %2153 = vmatpush1.bf16.msra.mxu0 0
        %2154 = vmatprep.subr.bf16.mxu0 0
        %2155 = vmatpush1.bf16.msra.mxu0 0
        %2156 = vmatprep.subr.bf16.mxu0 0
        %2157 = vmatpush1.bf16.msra.mxu0 0
        %2158 = vmatprep.mubr.bf16.mxu0 0
        %2159 = vmatmul.mubr.bf16.gmra.mrb[0].mxu0 %v2054
        %v2160 = vpop.f32.mrb[0].mxu0
        %v2161 = vadd.f32 0.0, %v2160
        %v2162 = vpop.f32.mrb[0].mxu0
        %v2163 = vpop.f32.mrb[0].mxu0
        %v2164 = vadd.f32 0.0, %v2163
        %v2165 = vpop.f32.mrb[0].mxu0
        %2166 = vmatprep.mubr.bf16.mxu0 0
        %2167 = vmatmul.mubr.bf16.gmra.mrb[0].mxu0 %v2055
        %v2168 = vpop.f32.mrb[0].mxu0
        %v2169 = vadd.f32 0.0, %v2168
        %v2170 = vpop.f32.mrb[0].mxu0
        %v2171 = vpop.f32.mrb[0].mxu0
        %v2172 = vadd.f32 0.0, %v2171
        %v2173 = vpop.f32.mrb[0].mxu0
        %2174 = vmatprep.mubr.bf16.mxu0 0
        %2175 = vmatmul.mubr.bf16.gmra.mrb[0].mxu0 %v2056
        %v2176 = vpop.f32.mrb[0].mxu0
        %v2177 = vadd.f32 0.0, %v2176
        %v2178 = vpop.f32.mrb[0].mxu0
        %v2179 = vpop.f32.mrb[0].mxu0
        %v2180 = vadd.f32 0.0, %v2179
        %v2181 = vpop.f32.mrb[0].mxu0
        %2182 = vmatprep.mubr.bf16.mxu0 0
        %2183 = vmatmul.mubr.bf16.gmra.mrb[0].mxu0 %v2057
        %v2184 = vpop.f32.mrb[0].mxu0
        %v2185 = vadd.f32 0.0, %v2184
        %v2186 = vpop.f32.mrb[0].mxu0
        %v2187 = vpop.f32.mrb[0].mxu0
        %v2188 = vadd.f32 0.0, %v2187
        %v2189 = vpop.f32.mrb[0].mxu0
        %2190 = vmatprep.mubr.bf16.mxu0 0
        %2191 = vmatmul.mubr.bf16.gmra.mrb[0].mxu0 %v2058
        %v2192 = vpop.f32.mrb[0].mxu0
        %v2193 = vadd.f32 0.0, %v2192
        %v2194 = vpop.f32.mrb[0].mxu0
        %v2195 = vpop.f32.mrb[0].mxu0
        %v2196 = vadd.f32 0.0, %v2195
        %v2197 = vpop.f32.mrb[0].mxu0
        %2198 = vmatprep.mubr.bf16.mxu0 0
        %2199 = vmatmul.mubr.bf16.gmra.mrb[0].mxu0 %v2059
        %v2200 = vpop.f32.mrb[0].mxu0
        %v2201 = vadd.f32 0.0, %v2200
        %v2202 = vpop.f32.mrb[0].mxu0
        %v2203 = vpop.f32.mrb[0].mxu0
        %v2204 = vadd.f32 0.0, %v2203
        %v2205 = vpop.f32.mrb[0].mxu0
        %2206 = vmatprep.mubr.bf16.mxu0 0
        %2207 = vmatmul.mubr.bf16.gmra.mrb[0].mxu0 %v2060
        %v2208 = vpop.f32.mrb[0].mxu0
        %v2209 = vadd.f32 0.0, %v2208
        %v2210 = vpop.f32.mrb[0].mxu0
        %v2211 = vpop.f32.mrb[0].mxu0
        %v2212 = vadd.f32 0.0, %v2211
        %v2213 = vpop.f32.mrb[0].mxu0
        %2214 = vmatprep.mubr.bf16.mxu0 0
        %2215 = vmatmul.mubr.bf16.gmra.mrb[0].mxu0 %v2061
        %v2216 = vpop.f32.mrb[0].mxu0
        %v2217 = vadd.f32 0.0, %v2216
        %v2218 = vpop.f32.mrb[0].mxu0
        %v2219 = vpop.f32.mrb[0].mxu0
        %v2220 = vadd.f32 0.0, %v2219
        %v2221 = vpop.f32.mrb[0].mxu0
        %2222 = vdwg.mxu0
        %v2223 = vadd.f32 %v920, %v2161
        %v2224 = vadd.f32 %v921, %v2164
        %v2225 = vadd.f32 %v922, %v2169
        %v2226 = vadd.f32 %v923, %v2172
        %v2227 = vadd.f32 %v924, %v2177
        %v2228 = vadd.f32 %v925, %v2180
        %v2229 = vadd.f32 %v926, %v2185
        %v2230 = vadd.f32 %v927, %v2188
        %v2231 = vadd.f32 %v928, %v2193
        %v2232 = vadd.f32 %v929, %v2196
        %v2233 = vadd.f32 %v930, %v2201
        %v2234 = vadd.f32 %v931, %v2204
        %v2235 = vadd.f32 %v932, %v2209
        %v2236 = vadd.f32 %v933, %v2212
        %v2237 = vadd.f32 %v934, %v2217
        %v2238 = vadd.f32 %v935, %v2220
        %2239 = vadd.xlane.f32.xlu0 %v2223
        %v2240 = vpop.xlane.xlu0 %2239
        %2241 = vadd.xlane.f32.xlu0 %v2224
        %v2242 = vpop.xlane.xlu0 %2241
        %2243 = vadd.xlane.f32.xlu0 %v2225
        %v2244 = vpop.xlane.xlu0 %2243
        %2245 = vadd.xlane.f32.xlu0 %v2226
        %v2246 = vpop.xlane.xlu0 %2245
        %2247 = vadd.xlane.f32.xlu0 %v2227
        %v2248 = vpop.xlane.xlu0 %2247
        %2249 = vadd.xlane.f32.xlu0 %v2228
        %v2250 = vpop.xlane.xlu0 %2249
        %2251 = vadd.xlane.f32.xlu0 %v2229
        %v2252 = vpop.xlane.xlu0 %2251
        %2253 = vadd.xlane.f32.xlu0 %v2230
        %v2254 = vpop.xlane.xlu0 %2253
        %2255 = vadd.xlane.f32.xlu0 %v2231
        %v2256 = vpop.xlane.xlu0 %2255
        %2257 = vadd.xlane.f32.xlu0 %v2232
        %v2258 = vpop.xlane.xlu0 %2257
        %2259 = vadd.xlane.f32.xlu0 %v2233
        %v2260 = vpop.xlane.xlu0 %2259
        %2261 = vadd.xlane.f32.xlu0 %v2234
        %v2262 = vpop.xlane.xlu0 %2261
        %2263 = vadd.xlane.f32.xlu0 %v2235
        %v2264 = vpop.xlane.xlu0 %2263
        %2265 = vadd.xlane.f32.xlu0 %v2236
        %v2266 = vpop.xlane.xlu0 %2265
        %2267 = vadd.xlane.f32.xlu0 %v2237
        %v2268 = vpop.xlane.xlu0 %2267
        %2269 = vadd.xlane.f32.xlu0 %v2238
        %v2270 = vpop.xlane.xlu0 %2269
        %v2271 = vmul.f32 %v2240, %v968
        %v2272 = vmul.f32 %v2242, %v968
        %v2273 = vmul.f32 %v2244, %v968
        %v2274 = vmul.f32 %v2246, %v968
        %v2275 = vmul.f32 %v2248, %v968
        %v2276 = vmul.f32 %v2250, %v968
        %v2277 = vmul.f32 %v2252, %v968
        %v2278 = vmul.f32 %v2254, %v968
        %v2279 = vmul.f32 %v2256, %v968
        %v2280 = vmul.f32 %v2258, %v968
        %v2281 = vmul.f32 %v2260, %v968
        %v2282 = vmul.f32 %v2262, %v968
        %v2283 = vmul.f32 %v2264, %v968
        %v2284 = vmul.f32 %v2266, %v968
        %v2285 = vmul.f32 %v2268, %v968
        %v2286 = vmul.f32 %v2270, %v968
        %v2287 = vmul.f32 %v2223, %v2223
        %v2288 = vmul.f32 %v2224, %v2224
        %v2289 = vmul.f32 %v2225, %v2225
        %v2290 = vmul.f32 %v2226, %v2226
        %v2291 = vmul.f32 %v2227, %v2227
        %v2292 = vmul.f32 %v2228, %v2228
        %v2293 = vmul.f32 %v2229, %v2229
        %v2294 = vmul.f32 %v2230, %v2230
        %v2295 = vmul.f32 %v2231, %v2231
        %v2296 = vmul.f32 %v2232, %v2232
        %v2297 = vmul.f32 %v2233, %v2233
        %v2298 = vmul.f32 %v2234, %v2234
        %v2299 = vmul.f32 %v2235, %v2235
        %v2300 = vmul.f32 %v2236, %v2236
        %v2301 = vmul.f32 %v2237, %v2237
        %v2302 = vmul.f32 %v2238, %v2238
        %2303 = vadd.xlane.f32.xlu0 %v2287
        %v2304 = vpop.xlane.xlu0 %2303
        %2305 = vadd.xlane.f32.xlu0 %v2288
        %v2306 = vpop.xlane.xlu0 %2305
        %2307 = vadd.xlane.f32.xlu0 %v2289
        %v2308 = vpop.xlane.xlu0 %2307
        %2309 = vadd.xlane.f32.xlu0 %v2290
        %v2310 = vpop.xlane.xlu0 %2309
        %2311 = vadd.xlane.f32.xlu0 %v2291
        %v2312 = vpop.xlane.xlu0 %2311
        %2313 = vadd.xlane.f32.xlu0 %v2292
        %v2314 = vpop.xlane.xlu0 %2313
        %2315 = vadd.xlane.f32.xlu0 %v2293
        %v2316 = vpop.xlane.xlu0 %2315
        %2317 = vadd.xlane.f32.xlu0 %v2294
        %v2318 = vpop.xlane.xlu0 %2317
        %2319 = vadd.xlane.f32.xlu0 %v2295
        %v2320 = vpop.xlane.xlu0 %2319
        %2321 = vadd.xlane.f32.xlu0 %v2296
        %v2322 = vpop.xlane.xlu0 %2321
        %2323 = vadd.xlane.f32.xlu0 %v2297
        %v2324 = vpop.xlane.xlu0 %2323
        %2325 = vadd.xlane.f32.xlu0 %v2298
        %v2326 = vpop.xlane.xlu0 %2325
        %2327 = vadd.xlane.f32.xlu0 %v2299
        %v2328 = vpop.xlane.xlu0 %2327
        %2329 = vadd.xlane.f32.xlu0 %v2300
        %v2330 = vpop.xlane.xlu0 %2329
        %2331 = vadd.xlane.f32.xlu0 %v2301
        %v2332 = vpop.xlane.xlu0 %2331
        %2333 = vadd.xlane.f32.xlu0 %v2302
        %v2334 = vpop.xlane.xlu0 %2333
        %v2335 = vmul.f32 %v2304, %v968
        %v2336 = vmul.f32 %v2306, %v968
        %v2337 = vmul.f32 %v2308, %v968
        %v2338 = vmul.f32 %v2310, %v968
        %v2339 = vmul.f32 %v2312, %v968
        %v2340 = vmul.f32 %v2314, %v968
        %v2341 = vmul.f32 %v2316, %v968
        %v2342 = vmul.f32 %v2318, %v968
        %v2343 = vmul.f32 %v2320, %v968
        %v2344 = vmul.f32 %v2322, %v968
        %v2345 = vmul.f32 %v2324, %v968
        %v2346 = vmul.f32 %v2326, %v968
        %v2347 = vmul.f32 %v2328, %v968
        %v2348 = vmul.f32 %v2330, %v968
        %v2349 = vmul.f32 %v2332, %v968
        %v2350 = vmul.f32 %v2334, %v968
        %v2351 = vsub.f32 %v2223, %v2271
        %v2352 = vsub.f32 %v2224, %v2272
        %v2353 = vsub.f32 %v2225, %v2273
        %v2354 = vsub.f32 %v2226, %v2274
        %v2355 = vsub.f32 %v2227, %v2275
        %v2356 = vsub.f32 %v2228, %v2276
        %v2357 = vsub.f32 %v2229, %v2277
        %v2358 = vsub.f32 %v2230, %v2278
        %v2359 = vsub.f32 %v2231, %v2279
        %v2360 = vsub.f32 %v2232, %v2280
        %v2361 = vsub.f32 %v2233, %v2281
        %v2362 = vsub.f32 %v2234, %v2282
        %v2363 = vsub.f32 %v2235, %v2283
        %v2364 = vsub.f32 %v2236, %v2284
        %v2365 = vsub.f32 %v2237, %v2285
        %v2366 = vsub.f32 %v2238, %v2286
        %v2367 = vmul.f32 %v2271, %v2271
        %v2368 = vmul.f32 %v2272, %v2272
        %v2369 = vmul.f32 %v2273, %v2273
        %v2370 = vmul.f32 %v2274, %v2274
        %v2371 = vmul.f32 %v2275, %v2275
        %v2372 = vmul.f32 %v2276, %v2276
        %v2373 = vmul.f32 %v2277, %v2277
        %v2374 = vmul.f32 %v2278, %v2278
        %v2375 = vmul.f32 %v2279, %v2279
        %v2376 = vmul.f32 %v2280, %v2280
        %v2377 = vmul.f32 %v2281, %v2281
        %v2378 = vmul.f32 %v2282, %v2282
        %v2379 = vmul.f32 %v2283, %v2283
        %v2380 = vmul.f32 %v2284, %v2284
        %v2381 = vmul.f32 %v2285, %v2285
        %v2382 = vmul.f32 %v2286, %v2286
        %v2383 = vsub.f32 %v2335, %v2367
        %v2384 = vsub.f32 %v2336, %v2368
        %v2385 = vsub.f32 %v2337, %v2369
        %v2386 = vsub.f32 %v2338, %v2370
        %v2387 = vsub.f32 %v2339, %v2371
        %v2388 = vsub.f32 %v2340, %v2372
        %v2389 = vsub.f32 %v2341, %v2373
        %v2390 = vsub.f32 %v2342, %v2374
        %v2391 = vsub.f32 %v2343, %v2375
        %v2392 = vsub.f32 %v2344, %v2376
        %v2393 = vsub.f32 %v2345, %v2377
        %v2394 = vsub.f32 %v2346, %v2378
        %v2395 = vsub.f32 %v2347, %v2379
        %v2396 = vsub.f32 %v2348, %v2380
        %v2397 = vsub.f32 %v2349, %v2381
        %v2398 = vsub.f32 %v2350, %v2382
        %v2399 = vadd.f32 %v2383, 1e-05
        %v2400 = vadd.f32 %v2384, 1e-05
        %v2401 = vadd.f32 %v2385, 1e-05
        %v2402 = vadd.f32 %v2386, 1e-05
        %v2403 = vadd.f32 %v2387, 1e-05
        %v2404 = vadd.f32 %v2388, 1e-05
        %v2405 = vadd.f32 %v2389, 1e-05
        %v2406 = vadd.f32 %v2390, 1e-05
        %v2407 = vadd.f32 %v2391, 1e-05
        %v2408 = vadd.f32 %v2392, 1e-05
        %v2409 = vadd.f32 %v2393, 1e-05
        %v2410 = vadd.f32 %v2394, 1e-05
        %v2411 = vadd.f32 %v2395, 1e-05
        %v2412 = vadd.f32 %v2396, 1e-05
        %v2413 = vadd.f32 %v2397, 1e-05
        %v2414 = vadd.f32 %v2398, 1e-05
        %v2415 = vrsqrt.pop %v2399
        %v2416 = vrsqrt.pop %v2400
        %v2417 = vrsqrt.pop %v2401
        %v2418 = vrsqrt.pop %v2402
        %v2419 = vrsqrt.pop %v2403
        %v2420 = vrsqrt.pop %v2404
        %v2421 = vrsqrt.pop %v2405
        %v2422 = vrsqrt.pop %v2406
        %v2423 = vrsqrt.pop %v2407
        %v2424 = vrsqrt.pop %v2408
        %v2425 = vrsqrt.pop %v2409
        %v2426 = vrsqrt.pop %v2410
        %v2427 = vrsqrt.pop %v2411
        %v2428 = vrsqrt.pop %v2412
        %v2429 = vrsqrt.pop %v2413
        %v2430 = vrsqrt.pop %v2414
        %v2431 = vmul.f32 %v2351, %v2415
        %v2432 = vmul.f32 %v2352, %v2416
        %v2433 = vmul.f32 %v2353, %v2417
        %v2434 = vmul.f32 %v2354, %v2418
        %v2435 = vmul.f32 %v2355, %v2419
        %v2436 = vmul.f32 %v2356, %v2420
        %v2437 = vmul.f32 %v2357, %v2421
        %v2438 = vmul.f32 %v2358, %v2422
        %v2439 = vmul.f32 %v2359, %v2423
        %v2440 = vmul.f32 %v2360, %v2424
        %v2441 = vmul.f32 %v2361, %v2425
        %v2442 = vmul.f32 %v2362, %v2426
        %v2443 = vmul.f32 %v2363, %v2427
        %v2444 = vmul.f32 %v2364, %v2428
        %v2445 = vmul.f32 %v2365, %v2429
        %v2446 = vmul.f32 %v2366, %v2430
        %v2447 = vmul.f32 %v2431, %v415
        %v2448 = vmul.f32 %v2432, %v415
        %v2449 = vmul.f32 %v2433, %v415
        %v2450 = vmul.f32 %v2434, %v415
        %v2451 = vmul.f32 %v2435, %v415
        %v2452 = vmul.f32 %v2436, %v415
        %v2453 = vmul.f32 %v2437, %v415
        %v2454 = vmul.f32 %v2438, %v415
        %v2455 = vmul.f32 %v2439, %v415
        %v2456 = vmul.f32 %v2440, %v415
        %v2457 = vmul.f32 %v2441, %v415
        %v2458 = vmul.f32 %v2442, %v415
        %v2459 = vmul.f32 %v2443, %v415
        %v2460 = vmul.f32 %v2444, %v415
        %v2461 = vmul.f32 %v2445, %v415
        %v2462 = vmul.f32 %v2446, %v415
        %v2463 = vadd.f32 %v2447, %v416
        %v2464 = vadd.f32 %v2448, %v416
        %v2465 = vadd.f32 %v2449, %v416
        %v2466 = vadd.f32 %v2450, %v416
        %v2467 = vadd.f32 %v2451, %v416
        %v2468 = vadd.f32 %v2452, %v416
        %v2469 = vadd.f32 %v2453, %v416
        %v2470 = vadd.f32 %v2454, %v416
        %v2471 = vadd.f32 %v2455, %v416
        %v2472 = vadd.f32 %v2456, %v416
        %v2473 = vadd.f32 %v2457, %v416
        %v2474 = vadd.f32 %v2458, %v416
        %v2475 = vadd.f32 %v2459, %v416
        %v2476 = vadd.f32 %v2460, %v416
        %v2477 = vadd.f32 %v2461, %v416
        %v2478 = vadd.f32 %v2462, %v416
        %v2479 = vpack.c.bf16 %v2464, %v2463
        %v2480 = vpack.c.bf16 %v2466, %v2465
        %v2481 = vpack.c.bf16 %v2468, %v2467
        %v2482 = vpack.c.bf16 %v2470, %v2469
        %v2483 = vpack.c.bf16 %v2472, %v2471
        %v2484 = vpack.c.bf16 %v2474, %v2473
        %v2485 = vpack.c.bf16 %v2476, %v2475
        %v2486 = vpack.c.bf16 %v2478, %v2477
        %v2487 = vld [vmem:[%s6] sm:$0xff]
        %v2488 = vld [vmem:[%s6 + $0x8] sm:$0xff]
        %v2489 = vld [vmem:[%s6 + $0x10] sm:$0xff]
        %v2490 = vld [vmem:[%s6 + $0x18] sm:$0xff]
        %v2491 = vld [vmem:[%s6 + $0x20] sm:$0xff]
        %v2492 = vld [vmem:[%s6 + $0x28] sm:$0xff]
        %v2493 = vld [vmem:[%s6 + $0x30] sm:$0xff]
        %v2494 = vld [vmem:[%s6 + $0x38] sm:$0xff]
        %v2495 = vld [vmem:[%s6 + $0x40] sm:$0xff]
        %v2496 = vld [vmem:[%s6 + $0x48] sm:$0xff]
        %v2497 = vld [vmem:[%s6 + $0x50] sm:$0xff]
        %v2498 = vld [vmem:[%s6 + $0x58] sm:$0xff]
        %v2499 = vld [vmem:[%s6 + $0x60] sm:$0xff]
        %v2500 = vld [vmem:[%s6 + $0x68] sm:$0xff]
        %v2501 = vld [vmem:[%s6 + $0x70] sm:$0xff]
        %v2502 = vld [vmem:[%s6 + $0x78] sm:$0xff]
        %v2504 = vlaneseq
        %v2505 = vshrl.u32 %v2504, 7
        %v2506 = vsub.s32 0, %v2505
        %v2507 = vrot.slane %v420, %v2506
        %v2508 = vlaneseq
        %v2509 = vshrl.u32 %v2508, 7
        %v2510 = vsub.s32 1, %v2509
        %v2511 = vrot.slane %v420, %v2510
        %v2530 = vunpack.c.l.b16 %v2487
        %v2531 = vunpack.c.h.b16 %v2487
        %v2532 = vunpack.c.l.b16 %v2488
        %v2533 = vunpack.c.h.b16 %v2488
        %v2534 = vunpack.c.l.b16 %v2489
        %v2535 = vunpack.c.h.b16 %v2489
        %v2536 = vunpack.c.l.b16 %v2490
        %v2537 = vunpack.c.h.b16 %v2490
        %v2538 = vunpack.c.l.b16 %v2491
        %v2539 = vunpack.c.h.b16 %v2491
        %v2540 = vunpack.c.l.b16 %v2492
        %v2541 = vunpack.c.h.b16 %v2492
        %v2542 = vunpack.c.l.b16 %v2493
        %v2543 = vunpack.c.h.b16 %v2493
        %v2544 = vunpack.c.l.b16 %v2494
        %v2545 = vunpack.c.h.b16 %v2494
        %v2546 = vunpack.c.l.b16 %v2495
        %v2547 = vunpack.c.h.b16 %v2495
        %v2548 = vunpack.c.l.b16 %v2496
        %v2549 = vunpack.c.h.b16 %v2496
        %v2550 = vunpack.c.l.b16 %v2497
        %v2551 = vunpack.c.h.b16 %v2497
        %v2552 = vunpack.c.l.b16 %v2498
        %v2553 = vunpack.c.h.b16 %v2498
        %v2554 = vunpack.c.l.b16 %v2499
        %v2555 = vunpack.c.h.b16 %v2499
        %v2556 = vunpack.c.l.b16 %v2500
        %v2557 = vunpack.c.h.b16 %v2500
        %v2558 = vunpack.c.l.b16 %v2501
        %v2559 = vunpack.c.h.b16 %v2501
        %v2560 = vunpack.c.l.b16 %v2502
        %v2561 = vunpack.c.h.b16 %v2502
        %v2562 = vpack.c.b16 %v2532, %v2530
        %v2563 = vpack.c.b16 %v2533, %v2531
        %v2564 = vpack.c.b16 %v2536, %v2534
        %v2565 = vpack.c.b16 %v2537, %v2535
        %v2566 = vpack.c.b16 %v2540, %v2538
        %v2567 = vpack.c.b16 %v2541, %v2539
        %v2568 = vpack.c.b16 %v2544, %v2542
        %v2569 = vpack.c.b16 %v2545, %v2543
        %v2570 = vpack.c.b16 %v2548, %v2546
        %v2571 = vpack.c.b16 %v2549, %v2547
        %v2572 = vpack.c.b16 %v2552, %v2550
        %v2573 = vpack.c.b16 %v2553, %v2551
        %v2574 = vpack.c.b16 %v2556, %v2554
        %v2575 = vpack.c.b16 %v2557, %v2555
        %v2576 = vpack.c.b16 %v2560, %v2558
        %v2577 = vpack.c.b16 %v2561, %v2559
        %2594 = vmatprep.subr.bf16.mxu0 %v2563
        %2595 = vmatpush1.bf16.msra.mxu0 %v2562
        %2596 = vmatprep.subr.bf16.mxu0 %v2565
        %2597 = vmatpush1.bf16.msra.mxu0 %v2564
        %2598 = vmatprep.subr.bf16.mxu0 %v2567
        %2599 = vmatpush1.bf16.msra.mxu0 %v2566
        %2600 = vmatprep.subr.bf16.mxu0 %v2569
        %2601 = vmatpush1.bf16.msra.mxu0 %v2568
        %2602 = vmatprep.subr.bf16.mxu0 %v2571
        %2603 = vmatpush1.bf16.msra.mxu0 %v2570
        %2604 = vmatprep.subr.bf16.mxu0 %v2573
        %2605 = vmatpush1.bf16.msra.mxu0 %v2572
        %2606 = vmatprep.subr.bf16.mxu0 %v2575
        %2607 = vmatpush1.bf16.msra.mxu0 %v2574
        %2608 = vmatprep.subr.bf16.mxu0 %v2577
        %2609 = vmatpush1.bf16.msra.mxu0 %v2576
        %2610 = vmatprep.subr.bf16.mxu0 0
        %2611 = vmatpush1.bf16.msra.mxu0 0
        %2612 = vmatprep.subr.bf16.mxu0 0
        %2613 = vmatpush1.bf16.msra.mxu0 0
        %2614 = vmatprep.subr.bf16.mxu0 0
        %2615 = vmatpush1.bf16.msra.mxu0 0
        %2616 = vmatprep.subr.bf16.mxu0 0
        %2617 = vmatpush1.bf16.msra.mxu0 0
        %2618 = vmatprep.subr.bf16.mxu0 0
        %2619 = vmatpush1.bf16.msra.mxu0 0
        %2620 = vmatprep.subr.bf16.mxu0 0
        %2621 = vmatpush1.bf16.msra.mxu0 0
        %2622 = vmatprep.subr.bf16.mxu0 0
        %2623 = vmatpush1.bf16.msra.mxu0 0
        %2624 = vmatprep.subr.bf16.mxu0 0
        %2625 = vmatpush1.bf16.msra.mxu0 0
        %2626 = vmatprep.mubr.bf16.mxu0 0
        %2627 = vmatmul.mubr.bf16.gmra.mrb[0].mxu0 %v2479
        %v2628 = vpop.f32.mrb[0].mxu0
        %v2629 = vadd.f32 %v2507, %v2628
        %v2630 = vpop.f32.mrb[0].mxu0
        %v2631 = vadd.f32 %v2511, %v2630
        %v2632 = vpop.f32.mrb[0].mxu0
        %v2633 = vadd.f32 %v2507, %v2632
        %v2634 = vpop.f32.mrb[0].mxu0
        %v2635 = vadd.f32 %v2511, %v2634
        %2636 = vmatprep.mubr.bf16.mxu0 0
        %2637 = vmatmul.mubr.bf16.gmra.mrb[0].mxu0 %v2480
        %v2638 = vpop.f32.mrb[0].mxu0
        %v2639 = vadd.f32 %v2507, %v2638
        %v2640 = vpop.f32.mrb[0].mxu0
        %v2641 = vadd.f32 %v2511, %v2640
        %v2642 = vpop.f32.mrb[0].mxu0
        %v2643 = vadd.f32 %v2507, %v2642
        %v2644 = vpop.f32.mrb[0].mxu0
        %v2645 = vadd.f32 %v2511, %v2644
        %2646 = vmatprep.mubr.bf16.mxu0 0
        %2647 = vmatmul.mubr.bf16.gmra.mrb[0].mxu0 %v2481
        %v2648 = vpop.f32.mrb[0].mxu0
        %v2649 = vadd.f32 %v2507, %v2648
        %v2650 = vpop.f32.mrb[0].mxu0
        %v2651 = vadd.f32 %v2511, %v2650
        %v2652 = vpop.f32.mrb[0].mxu0
        %v2653 = vadd.f32 %v2507, %v2652
        %v2654 = vpop.f32.mrb[0].mxu0
        %v2655 = vadd.f32 %v2511, %v2654
        %2656 = vmatprep.mubr.bf16.mxu0 0
        %2657 = vmatmul.mubr.bf16.gmra.mrb[0].mxu0 %v2482
        %v2658 = vpop.f32.mrb[0].mxu0
        %v2659 = vadd.f32 %v2507, %v2658
        %v2660 = vpop.f32.mrb[0].mxu0
        %v2661 = vadd.f32 %v2511, %v2660
        %v2662 = vpop.f32.mrb[0].mxu0
        %v2663 = vadd.f32 %v2507, %v2662
        %v2664 = vpop.f32.mrb[0].mxu0
        %v2665 = vadd.f32 %v2511, %v2664
        %2666 = vmatprep.mubr.bf16.mxu0 0
        %2667 = vmatmul.mubr.bf16.gmra.mrb[0].mxu0 %v2483
        %v2668 = vpop.f32.mrb[0].mxu0
        %v2669 = vadd.f32 %v2507, %v2668
        %v2670 = vpop.f32.mrb[0].mxu0
        %v2671 = vadd.f32 %v2511, %v2670
        %v2672 = vpop.f32.mrb[0].mxu0
        %v2673 = vadd.f32 %v2507, %v2672
        %v2674 = vpop.f32.mrb[0].mxu0
        %v2675 = vadd.f32 %v2511, %v2674
        %2676 = vmatprep.mubr.bf16.mxu0 0
        %2677 = vmatmul.mubr.bf16.gmra.mrb[0].mxu0 %v2484
        %v2678 = vpop.f32.mrb[0].mxu0
        %v2679 = vadd.f32 %v2507, %v2678
        %v2680 = vpop.f32.mrb[0].mxu0
        %v2681 = vadd.f32 %v2511, %v2680
        %v2682 = vpop.f32.mrb[0].mxu0
        %v2683 = vadd.f32 %v2507, %v2682
        %v2684 = vpop.f32.mrb[0].mxu0
        %v2685 = vadd.f32 %v2511, %v2684
        %2686 = vmatprep.mubr.bf16.mxu0 0
        %2687 = vmatmul.mubr.bf16.gmra.mrb[0].mxu0 %v2485
        %v2688 = vpop.f32.mrb[0].mxu0
        %v2689 = vadd.f32 %v2507, %v2688
        %v2690 = vpop.f32.mrb[0].mxu0
        %v2691 = vadd.f32 %v2511, %v2690
        %v2692 = vpop.f32.mrb[0].mxu0
        %v2693 = vadd.f32 %v2507, %v2692
        %v2694 = vpop.f32.mrb[0].mxu0
        %v2695 = vadd.f32 %v2511, %v2694
        %2696 = vmatprep.mubr.bf16.mxu0 0
        %2697 = vmatmul.mubr.bf16.gmra.mrb[0].mxu0 %v2486
        %v2698 = vpop.f32.mrb[0].mxu0
        %v2699 = vadd.f32 %v2507, %v2698
        %v2700 = vpop.f32.mrb[0].mxu0
        %v2701 = vadd.f32 %v2511, %v2700
        %v2702 = vpop.f32.mrb[0].mxu0
        %v2703 = vadd.f32 %v2507, %v2702
        %v2704 = vpop.f32.mrb[0].mxu0
        %v2705 = vadd.f32 %v2511, %v2704
        %2706 = vdwg.mxu0
        %v2707 = vmax.f32 %v2629, 0.0
        %v2708 = vmax.f32 %v2631, 0.0
        %v2709 = vmax.f32 %v2633, 0.0
        %v2710 = vmax.f32 %v2635, 0.0
        %v2711 = vmax.f32 %v2639, 0.0
        %v2712 = vmax.f32 %v2641, 0.0
        %v2713 = vmax.f32 %v2643, 0.0
        %v2714 = vmax.f32 %v2645, 0.0
        %v2715 = vmax.f32 %v2649, 0.0
        %v2716 = vmax.f32 %v2651, 0.0
        %v2717 = vmax.f32 %v2653, 0.0
        %v2718 = vmax.f32 %v2655, 0.0
        %v2719 = vmax.f32 %v2659, 0.0
        %v2720 = vmax.f32 %v2661, 0.0
        %v2721 = vmax.f32 %v2663, 0.0
        %v2722 = vmax.f32 %v2665, 0.0
        %v2723 = vmax.f32 %v2669, 0.0
        %v2724 = vmax.f32 %v2671, 0.0
        %v2725 = vmax.f32 %v2673, 0.0
        %v2726 = vmax.f32 %v2675, 0.0
        %v2727 = vmax.f32 %v2679, 0.0
        %v2728 = vmax.f32 %v2681, 0.0
        %v2729 = vmax.f32 %v2683, 0.0
        %v2730 = vmax.f32 %v2685, 0.0
        %v2731 = vmax.f32 %v2689, 0.0
        %v2732 = vmax.f32 %v2691, 0.0
        %v2733 = vmax.f32 %v2693, 0.0
        %v2734 = vmax.f32 %v2695, 0.0
        %v2735 = vmax.f32 %v2699, 0.0
        %v2736 = vmax.f32 %v2701, 0.0
        %v2737 = vmax.f32 %v2703, 0.0
        %v2738 = vmax.f32 %v2705, 0.0
        %v2739 = vpack.c.bf16 %v2709, %v2707
        %v2740 = vpack.c.bf16 %v2710, %v2708
        %v2741 = vpack.c.bf16 %v2713, %v2711
        %v2742 = vpack.c.bf16 %v2714, %v2712
        %v2743 = vpack.c.bf16 %v2717, %v2715
        %v2744 = vpack.c.bf16 %v2718, %v2716
        %v2745 = vpack.c.bf16 %v2721, %v2719
        %v2746 = vpack.c.bf16 %v2722, %v2720
        %v2747 = vpack.c.bf16 %v2725, %v2723
        %v2748 = vpack.c.bf16 %v2726, %v2724
        %v2749 = vpack.c.bf16 %v2729, %v2727
        %v2750 = vpack.c.bf16 %v2730, %v2728
        %v2751 = vpack.c.bf16 %v2733, %v2731
        %v2752 = vpack.c.bf16 %v2734, %v2732
        %v2753 = vpack.c.bf16 %v2737, %v2735
        %v2754 = vpack.c.bf16 %v2738, %v2736
        %v2755 = vld [vmem:[%s7] sm:$0xf]
        %v2756 = vld [vmem:[%s7 + $0x4] sm:$0xf]
        %v2757 = vld [vmem:[%s7 + $0x8] sm:$0xf]
        %v2758 = vld [vmem:[%s7 + $0xc] sm:$0xf]
        %v2759 = vld [vmem:[%s7 + $0x10] sm:$0xf]
        %v2760 = vld [vmem:[%s7 + $0x14] sm:$0xf]
        %v2761 = vld [vmem:[%s7 + $0x18] sm:$0xf]
        %v2762 = vld [vmem:[%s7 + $0x1c] sm:$0xf]
        %v2763 = vld [vmem:[%s7 + $0x20] sm:$0xf]
        %v2764 = vld [vmem:[%s7 + $0x24] sm:$0xf]
        %v2765 = vld [vmem:[%s7 + $0x28] sm:$0xf]
        %v2766 = vld [vmem:[%s7 + $0x2c] sm:$0xf]
        %v2767 = vld [vmem:[%s7 + $0x30] sm:$0xf]
        %v2768 = vld [vmem:[%s7 + $0x34] sm:$0xf]
        %v2769 = vld [vmem:[%s7 + $0x38] sm:$0xf]
        %v2770 = vld [vmem:[%s7 + $0x3c] sm:$0xf]
        %v2771 = vld [vmem:[%s7 + $0x40] sm:$0xf]
        %v2772 = vld [vmem:[%s7 + $0x44] sm:$0xf]
        %v2773 = vld [vmem:[%s7 + $0x48] sm:$0xf]
        %v2774 = vld [vmem:[%s7 + $0x4c] sm:$0xf]
        %v2775 = vld [vmem:[%s7 + $0x50] sm:$0xf]
        %v2776 = vld [vmem:[%s7 + $0x54] sm:$0xf]
        %v2777 = vld [vmem:[%s7 + $0x58] sm:$0xf]
        %v2778 = vld [vmem:[%s7 + $0x5c] sm:$0xf]
        %v2779 = vld [vmem:[%s7 + $0x60] sm:$0xf]
        %v2780 = vld [vmem:[%s7 + $0x64] sm:$0xf]
        %v2781 = vld [vmem:[%s7 + $0x68] sm:$0xf]
        %v2782 = vld [vmem:[%s7 + $0x6c] sm:$0xf]
        %v2783 = vld [vmem:[%s7 + $0x70] sm:$0xf]
        %v2784 = vld [vmem:[%s7 + $0x74] sm:$0xf]
        %v2785 = vld [vmem:[%s7 + $0x78] sm:$0xf]
        %v2786 = vld [vmem:[%s7 + $0x7c] sm:$0xf]
        %v2819 = vunpack.c.l.b16 %v2755
        %v2820 = vunpack.c.l.b16 %v2756
        %v2821 = vunpack.c.l.b16 %v2757
        %v2822 = vunpack.c.l.b16 %v2758
        %v2823 = vunpack.c.l.b16 %v2759
        %v2824 = vunpack.c.l.b16 %v2760
        %v2825 = vunpack.c.l.b16 %v2761
        %v2826 = vunpack.c.l.b16 %v2762
        %v2827 = vunpack.c.l.b16 %v2763
        %v2828 = vunpack.c.l.b16 %v2764
        %v2829 = vunpack.c.l.b16 %v2765
        %v2830 = vunpack.c.l.b16 %v2766
        %v2831 = vunpack.c.l.b16 %v2767
        %v2832 = vunpack.c.l.b16 %v2768
        %v2833 = vunpack.c.l.b16 %v2769
        %v2834 = vunpack.c.l.b16 %v2770
        %v2835 = vunpack.c.l.b16 %v2771
        %v2836 = vunpack.c.l.b16 %v2772
        %v2837 = vunpack.c.l.b16 %v2773
        %v2838 = vunpack.c.l.b16 %v2774
        %v2839 = vunpack.c.l.b16 %v2775
        %v2840 = vunpack.c.l.b16 %v2776
        %v2841 = vunpack.c.l.b16 %v2777
        %v2842 = vunpack.c.l.b16 %v2778
        %v2843 = vunpack.c.l.b16 %v2779
        %v2844 = vunpack.c.l.b16 %v2780
        %v2845 = vunpack.c.l.b16 %v2781
        %v2846 = vunpack.c.l.b16 %v2782
        %v2847 = vunpack.c.l.b16 %v2783
        %v2848 = vunpack.c.l.b16 %v2784
        %v2849 = vunpack.c.l.b16 %v2785
        %v2850 = vunpack.c.l.b16 %v2786
        %v2851 = vpack.c.b16 %v2820, %v2819
        %v2852 = vpack.c.b16 %v2822, %v2821
        %v2853 = vpack.c.b16 %v2824, %v2823
        %v2854 = vpack.c.b16 %v2826, %v2825
        %v2855 = vpack.c.b16 %v2828, %v2827
        %v2856 = vpack.c.b16 %v2830, %v2829
        %v2857 = vpack.c.b16 %v2832, %v2831
        %v2858 = vpack.c.b16 %v2834, %v2833
        %v2859 = vpack.c.b16 %v2836, %v2835
        %v2860 = vpack.c.b16 %v2838, %v2837
        %v2861 = vpack.c.b16 %v2840, %v2839
        %v2862 = vpack.c.b16 %v2842, %v2841
        %v2863 = vpack.c.b16 %v2844, %v2843
        %v2864 = vpack.c.b16 %v2846, %v2845
        %v2865 = vpack.c.b16 %v2848, %v2847
        %v2866 = vpack.c.b16 %v2850, %v2849
        %2883 = vmatprep.subr.bf16.mxu0 0
        %2884 = vmatpush1.bf16.msra.mxu0 %v2851
        %2885 = vmatprep.subr.bf16.mxu0 0
        %2886 = vmatpush1.bf16.msra.mxu0 %v2852
        %2887 = vmatprep.subr.bf16.mxu0 0
        %2888 = vmatpush1.bf16.msra.mxu0 %v2853
        %2889 = vmatprep.subr.bf16.mxu0 0
        %2890 = vmatpush1.bf16.msra.mxu0 %v2854
        %2891 = vmatprep.subr.bf16.mxu0 0
        %2892 = vmatpush1.bf16.msra.mxu0 %v2855
        %2893 = vmatprep.subr.bf16.mxu0 0
        %2894 = vmatpush1.bf16.msra.mxu0 %v2856
        %2895 = vmatprep.subr.bf16.mxu0 0
        %2896 = vmatpush1.bf16.msra.mxu0 %v2857
        %2897 = vmatprep.subr.bf16.mxu0 0
        %2898 = vmatpush1.bf16.msra.mxu0 %v2858
        %2899 = vmatprep.subr.bf16.mxu0 0
        %2900 = vmatpush1.bf16.msra.mxu0 %v2859
        %2901 = vmatprep.subr.bf16.mxu0 0
        %2902 = vmatpush1.bf16.msra.mxu0 %v2860
        %2903 = vmatprep.subr.bf16.mxu0 0
        %2904 = vmatpush1.bf16.msra.mxu0 %v2861
        %2905 = vmatprep.subr.bf16.mxu0 0
        %2906 = vmatpush1.bf16.msra.mxu0 %v2862
        %2907 = vmatprep.subr.bf16.mxu0 0
        %2908 = vmatpush1.bf16.msra.mxu0 %v2863
        %2909 = vmatprep.subr.bf16.mxu0 0
        %2910 = vmatpush1.bf16.msra.mxu0 %v2864
        %2911 = vmatprep.subr.bf16.mxu0 0
        %2912 = vmatpush1.bf16.msra.mxu0 %v2865
        %2913 = vmatprep.subr.bf16.mxu0 0
        %2914 = vmatpush1.bf16.msra.mxu0 %v2866
        %2915 = vmatprep.mubr.bf16.mxu0 %v2740
        %2916 = vmatmul.mubr.bf16.gmra.mrb[0].mxu0 %v2739
        %v2917 = vpop.f32.mrb[0].mxu0
        %v2918 = vadd.f32 %v417, %v2917
        %v2919 = vpop.f32.mrb[0].mxu0
        %v2920 = vpop.f32.mrb[0].mxu0
        %v2921 = vadd.f32 %v417, %v2920
        %v2922 = vpop.f32.mrb[0].mxu0
        %2923 = vmatprep.mubr.bf16.mxu0 %v2742
        %2924 = vmatmul.mubr.bf16.gmra.mrb[0].mxu0 %v2741
        %v2925 = vpop.f32.mrb[0].mxu0
        %v2926 = vadd.f32 %v417, %v2925
        %v2927 = vpop.f32.mrb[0].mxu0
        %v2928 = vpop.f32.mrb[0].mxu0
        %v2929 = vadd.f32 %v417, %v2928
        %v2930 = vpop.f32.mrb[0].mxu0
        %2931 = vmatprep.mubr.bf16.mxu0 %v2744
        %2932 = vmatmul.mubr.bf16.gmra.mrb[0].mxu0 %v2743
        %v2933 = vpop.f32.mrb[0].mxu0
        %v2934 = vadd.f32 %v417, %v2933
        %v2935 = vpop.f32.mrb[0].mxu0
        %v2936 = vpop.f32.mrb[0].mxu0
        %v2937 = vadd.f32 %v417, %v2936
        %v2938 = vpop.f32.mrb[0].mxu0
        %2939 = vmatprep.mubr.bf16.mxu0 %v2746
        %2940 = vmatmul.mubr.bf16.gmra.mrb[0].mxu0 %v2745
        %v2941 = vpop.f32.mrb[0].mxu0
        %v2942 = vadd.f32 %v417, %v2941
        %v2943 = vpop.f32.mrb[0].mxu0
        %v2944 = vpop.f32.mrb[0].mxu0
        %v2945 = vadd.f32 %v417, %v2944
        %v2946 = vpop.f32.mrb[0].mxu0
        %2947 = vmatprep.mubr.bf16.mxu0 %v2748
        %2948 = vmatmul.mubr.bf16.gmra.mrb[0].mxu0 %v2747
        %v2949 = vpop.f32.mrb[0].mxu0
        %v2950 = vadd.f32 %v417, %v2949
        %v2951 = vpop.f32.mrb[0].mxu0
        %v2952 = vpop.f32.mrb[0].mxu0
        %v2953 = vadd.f32 %v417, %v2952
        %v2954 = vpop.f32.mrb[0].mxu0
        %2955 = vmatprep.mubr.bf16.mxu0 %v2750
        %2956 = vmatmul.mubr.bf16.gmra.mrb[0].mxu0 %v2749
        %v2957 = vpop.f32.mrb[0].mxu0
        %v2958 = vadd.f32 %v417, %v2957
        %v2959 = vpop.f32.mrb[0].mxu0
        %v2960 = vpop.f32.mrb[0].mxu0
        %v2961 = vadd.f32 %v417, %v2960
        %v2962 = vpop.f32.mrb[0].mxu0
        %2963 = vmatprep.mubr.bf16.mxu0 %v2752
        %2964 = vmatmul.mubr.bf16.gmra.mrb[0].mxu0 %v2751
        %v2965 = vpop.f32.mrb[0].mxu0
        %v2966 = vadd.f32 %v417, %v2965
        %v2967 = vpop.f32.mrb[0].mxu0
        %v2968 = vpop.f32.mrb[0].mxu0
        %v2969 = vadd.f32 %v417, %v2968
        %v2970 = vpop.f32.mrb[0].mxu0
        %2971 = vmatprep.mubr.bf16.mxu0 %v2754
        %2972 = vmatmul.mubr.bf16.gmra.mrb[0].mxu0 %v2753
        %v2973 = vpop.f32.mrb[0].mxu0
        %v2974 = vadd.f32 %v417, %v2973
        %v2975 = vpop.f32.mrb[0].mxu0
        %v2976 = vpop.f32.mrb[0].mxu0
        %v2977 = vadd.f32 %v417, %v2976
        %v2978 = vpop.f32.mrb[0].mxu0
        %2979 = vdwg.mxu0
        %v2980 = vadd.f32 %v2223, %v2918
        %v2981 = vadd.f32 %v2224, %v2921
        %v2982 = vadd.f32 %v2225, %v2926
        %v2983 = vadd.f32 %v2226, %v2929
        %v2984 = vadd.f32 %v2227, %v2934
        %v2985 = vadd.f32 %v2228, %v2937
        %v2986 = vadd.f32 %v2229, %v2942
        %v2987 = vadd.f32 %v2230, %v2945
        %v2988 = vadd.f32 %v2231, %v2950
        %v2989 = vadd.f32 %v2232, %v2953
        %v2990 = vadd.f32 %v2233, %v2958
        %v2991 = vadd.f32 %v2234, %v2961
        %v2992 = vadd.f32 %v2235, %v2966
        %v2993 = vadd.f32 %v2236, %v2969
        %v2994 = vadd.f32 %v2237, %v2974
        %v2995 = vadd.f32 %v2238, %v2977
        %v2996 = vpack.c.bf16 %v2981, %v2980
        %v2997 = vpack.c.bf16 %v2983, %v2982
        %v2998 = vpack.c.bf16 %v2985, %v2984
        %v2999 = vpack.c.bf16 %v2987, %v2986
        %v3000 = vpack.c.bf16 %v2989, %v2988
        %v3001 = vpack.c.bf16 %v2991, %v2990
        %v3002 = vpack.c.bf16 %v2993, %v2992
        %v3003 = vpack.c.bf16 %v2995, %v2994
        %v3004 = vld [vmem:[#allocation2] sm:$0xf]
        %v3005 = vld [vmem:[#allocation2 + $0x4] sm:$0xf]
        %v3006 = vld [vmem:[#allocation2 + $0x8] sm:$0xf]
        %v3007 = vld [vmem:[#allocation2 + $0xc] sm:$0xf]
        %v3008 = vld [vmem:[#allocation2 + $0x10] sm:$0xf]
        %v3009 = vld [vmem:[#allocation2 + $0x14] sm:$0xf]
        %v3010 = vld [vmem:[#allocation2 + $0x18] sm:$0xf]
        %v3011 = vld [vmem:[#allocation2 + $0x1c] sm:$0xf]
        %v3012 = vld [vmem:[#allocation2 + $0x20] sm:$0xf]
        %v3013 = vld [vmem:[#allocation2 + $0x24] sm:$0xf]
        %v3014 = vld [vmem:[#allocation2 + $0x28] sm:$0xf]
        %v3015 = vld [vmem:[#allocation2 + $0x2c] sm:$0xf]
        %v3016 = vld [vmem:[#allocation2 + $0x30] sm:$0xf]
        %v3017 = vld [vmem:[#allocation2 + $0x34] sm:$0xf]
        %v3018 = vld [vmem:[#allocation2 + $0x38] sm:$0xf]
        %v3019 = vld [vmem:[#allocation2 + $0x3c] sm:$0xf]
        %v3036 = vunpack.c.l.b16 %v3004
        %v3037 = vunpack.c.l.b16 %v3005
        %v3038 = vunpack.c.l.b16 %v3006
        %v3039 = vunpack.c.l.b16 %v3007
        %v3040 = vunpack.c.l.b16 %v3008
        %v3041 = vunpack.c.l.b16 %v3009
        %v3042 = vunpack.c.l.b16 %v3010
        %v3043 = vunpack.c.l.b16 %v3011
        %v3044 = vunpack.c.l.b16 %v3012
        %v3045 = vunpack.c.l.b16 %v3013
        %v3046 = vunpack.c.l.b16 %v3014
        %v3047 = vunpack.c.l.b16 %v3015
        %v3048 = vunpack.c.l.b16 %v3016
        %v3049 = vunpack.c.l.b16 %v3017
        %v3050 = vunpack.c.l.b16 %v3018
        %v3051 = vunpack.c.l.b16 %v3019
        %v3052 = vpack.c.b16 %v3037, %v3036
        %v3053 = vpack.c.b16 %v3039, %v3038
        %v3054 = vpack.c.b16 %v3041, %v3040
        %v3055 = vpack.c.b16 %v3043, %v3042
        %v3056 = vpack.c.b16 %v3045, %v3044
        %v3057 = vpack.c.b16 %v3047, %v3046
        %v3058 = vpack.c.b16 %v3049, %v3048
        %v3059 = vpack.c.b16 %v3051, %v3050
        %3068 = vmatprep.subr.bf16.mxu0 0
        %3069 = vmatpush1.bf16.msra.mxu0 %v3052
        %3070 = vmatprep.subr.bf16.mxu0 0
        %3071 = vmatpush1.bf16.msra.mxu0 %v3053
        %3072 = vmatprep.subr.bf16.mxu0 0
        %3073 = vmatpush1.bf16.msra.mxu0 %v3054
        %3074 = vmatprep.subr.bf16.mxu0 0
        %3075 = vmatpush1.bf16.msra.mxu0 %v3055
        %3076 = vmatprep.subr.bf16.mxu0 0
        %3077 = vmatpush1.bf16.msra.mxu0 %v3056
        %3078 = vmatprep.subr.bf16.mxu0 0
        %3079 = vmatpush1.bf16.msra.mxu0 %v3057
        %3080 = vmatprep.subr.bf16.mxu0 0
        %3081 = vmatpush1.bf16.msra.mxu0 %v3058
        %3082 = vmatprep.subr.bf16.mxu0 0
        %3083 = vmatpush1.bf16.msra.mxu0 %v3059
        %3084 = vmatprep.subr.bf16.mxu0 0
        %3085 = vmatpush1.bf16.msra.mxu0 0
        %3086 = vmatprep.subr.bf16.mxu0 0
        %3087 = vmatpush1.bf16.msra.mxu0 0
        %3088 = vmatprep.subr.bf16.mxu0 0
        %3089 = vmatpush1.bf16.msra.mxu0 0
        %3090 = vmatprep.subr.bf16.mxu0 0
        %3091 = vmatpush1.bf16.msra.mxu0 0
        %3092 = vmatprep.subr.bf16.mxu0 0
        %3093 = vmatpush1.bf16.msra.mxu0 0
        %3094 = vmatprep.subr.bf16.mxu0 0
        %3095 = vmatpush1.bf16.msra.mxu0 0
        %3096 = vmatprep.subr.bf16.mxu0 0
        %3097 = vmatpush1.bf16.msra.mxu0 0
        %3098 = vmatprep.subr.bf16.mxu0 0
        %3099 = vmatpush1.bf16.msra.mxu0 0
        %3100 = vmatprep.mubr.bf16.mxu0 0
        %3101 = vmatmul.mubr.bf16.gmra.mrb[0].mxu0 %v2996
        %v3102 = vpop.f32.mrb[0].mxu0
        %v3103 = vadd.f32 %v418, %v3102
        %v3104 = vpop.f32.mrb[0].mxu0
        %v3105 = vpop.f32.mrb[0].mxu0
        %v3106 = vadd.f32 %v418, %v3105
        %v3107 = vpop.f32.mrb[0].mxu0
        %3108 = vmatprep.mubr.bf16.mxu0 0
        %3109 = vmatmul.mubr.bf16.gmra.mrb[0].mxu0 %v2997
        %v3110 = vpop.f32.mrb[0].mxu0
        %v3111 = vadd.f32 %v418, %v3110
        %v3112 = vpop.f32.mrb[0].mxu0
        %v3113 = vpop.f32.mrb[0].mxu0
        %v3114 = vadd.f32 %v418, %v3113
        %v3115 = vpop.f32.mrb[0].mxu0
        %3116 = vmatprep.mubr.bf16.mxu0 0
        %3117 = vmatmul.mubr.bf16.gmra.mrb[0].mxu0 %v2998
        %v3118 = vpop.f32.mrb[0].mxu0
        %v3119 = vadd.f32 %v418, %v3118
        %v3120 = vpop.f32.mrb[0].mxu0
        %v3121 = vpop.f32.mrb[0].mxu0
        %v3122 = vadd.f32 %v418, %v3121
        %v3123 = vpop.f32.mrb[0].mxu0
        %3124 = vmatprep.mubr.bf16.mxu0 0
        %3125 = vmatmul.mubr.bf16.gmra.mrb[0].mxu0 %v2999
        %v3126 = vpop.f32.mrb[0].mxu0
        %v3127 = vadd.f32 %v418, %v3126
        %v3128 = vpop.f32.mrb[0].mxu0
        %v3129 = vpop.f32.mrb[0].mxu0
        %v3130 = vadd.f32 %v418, %v3129
        %v3131 = vpop.f32.mrb[0].mxu0
        %3132 = vmatprep.mubr.bf16.mxu0 0
        %3133 = vmatmul.mubr.bf16.gmra.mrb[0].mxu0 %v3000
        %v3134 = vpop.f32.mrb[0].mxu0
        %v3135 = vadd.f32 %v418, %v3134
        %v3136 = vpop.f32.mrb[0].mxu0
        %v3137 = vpop.f32.mrb[0].mxu0
        %v3138 = vadd.f32 %v418, %v3137
        %v3139 = vpop.f32.mrb[0].mxu0
        %3140 = vmatprep.mubr.bf16.mxu0 0
        %3141 = vmatmul.mubr.bf16.gmra.mrb[0].mxu0 %v3001
        %v3142 = vpop.f32.mrb[0].mxu0
        %v3143 = vadd.f32 %v418, %v3142
        %v3144 = vpop.f32.mrb[0].mxu0
        %v3145 = vpop.f32.mrb[0].mxu0
        %v3146 = vadd.f32 %v418, %v3145
        %v3147 = vpop.f32.mrb[0].mxu0
        %3148 = vmatprep.mubr.bf16.mxu0 0
        %3149 = vmatmul.mubr.bf16.gmra.mrb[0].mxu0 %v3002
        %v3150 = vpop.f32.mrb[0].mxu0
        %v3151 = vadd.f32 %v418, %v3150
        %v3152 = vpop.f32.mrb[0].mxu0
        %v3153 = vpop.f32.mrb[0].mxu0
        %v3154 = vadd.f32 %v418, %v3153
        %v3155 = vpop.f32.mrb[0].mxu0
        %3156 = vmatprep.mubr.bf16.mxu0 0
        %3157 = vmatmul.mubr.bf16.gmra.mrb[0].mxu0 %v3003
        %v3158 = vpop.f32.mrb[0].mxu0
        %v3159 = vadd.f32 %v418, %v3158
        %v3160 = vpop.f32.mrb[0].mxu0
        %v3161 = vpop.f32.mrb[0].mxu0
        %v3162 = vadd.f32 %v418, %v3161
        %v3163 = vpop.f32.mrb[0].mxu0
        %3164 = vdwg.mxu0
        %3165 = vmax.xlane.f32.xlu0 %v3103
        %v3166 = vpop.xlane.xlu0 %3165
        %3167 = vmax.xlane.f32.xlu0 %v3106
        %v3168 = vpop.xlane.xlu0 %3167
        %3169 = vmax.xlane.f32.xlu0 %v3111
        %v3170 = vpop.xlane.xlu0 %3169
        %3171 = vmax.xlane.f32.xlu0 %v3114
        %v3172 = vpop.xlane.xlu0 %3171
        %3173 = vmax.xlane.f32.xlu0 %v3119
        %v3174 = vpop.xlane.xlu0 %3173
        %3175 = vmax.xlane.f32.xlu0 %v3122
        %v3176 = vpop.xlane.xlu0 %3175
        %3177 = vmax.xlane.f32.xlu0 %v3127
        %v3178 = vpop.xlane.xlu0 %3177
        %3179 = vmax.xlane.f32.xlu0 %v3130
        %v3180 = vpop.xlane.xlu0 %3179
        %3181 = vmax.xlane.f32.xlu0 %v3135
        %v3182 = vpop.xlane.xlu0 %3181
        %3183 = vmax.xlane.f32.xlu0 %v3138
        %v3184 = vpop.xlane.xlu0 %3183
        %3185 = vmax.xlane.f32.xlu0 %v3143
        %v3186 = vpop.xlane.xlu0 %3185
        %3187 = vmax.xlane.f32.xlu0 %v3146
        %v3188 = vpop.xlane.xlu0 %3187
        %3189 = vmax.xlane.f32.xlu0 %v3151
        %v3190 = vpop.xlane.xlu0 %3189
        %3191 = vmax.xlane.f32.xlu0 %v3154
        %v3192 = vpop.xlane.xlu0 %3191
        %3193 = vmax.xlane.f32.xlu0 %v3159
        %v3194 = vpop.xlane.xlu0 %3193
        %3195 = vmax.xlane.f32.xlu0 %v3162
        %v3196 = vpop.xlane.xlu0 %3195
        %v3197 = vsub.f32 %v3103, %v3166
        %v3198 = vsub.f32 %v3106, %v3168
        %v3199 = vsub.f32 %v3111, %v3170
        %v3200 = vsub.f32 %v3114, %v3172
        %v3201 = vsub.f32 %v3119, %v3174
        %v3202 = vsub.f32 %v3122, %v3176
        %v3203 = vsub.f32 %v3127, %v3178
        %v3204 = vsub.f32 %v3130, %v3180
        %v3205 = vsub.f32 %v3135, %v3182
        %v3206 = vsub.f32 %v3138, %v3184
        %v3207 = vsub.f32 %v3143, %v3186
        %v3208 = vsub.f32 %v3146, %v3188
        %v3209 = vsub.f32 %v3151, %v3190
        %v3210 = vsub.f32 %v3154, %v3192
        %v3211 = vsub.f32 %v3159, %v3194
        %v3212 = vsub.f32 %v3162, %v3196
        %v3213 = vmul.f32 %v3197, 1.442695
        %v3214 = vpow.pop %v3213
        %v3215 = vmul.f32 %v3198, 1.442695
        %v3216 = vpow.pop %v3215
        %v3217 = vmul.f32 %v3199, 1.442695
        %v3218 = vpow.pop %v3217
        %v3219 = vmul.f32 %v3200, 1.442695
        %v3220 = vpow.pop %v3219
        %v3221 = vmul.f32 %v3201, 1.442695
        %v3222 = vpow.pop %v3221
        %v3223 = vmul.f32 %v3202, 1.442695
        %v3224 = vpow.pop %v3223
        %v3225 = vmul.f32 %v3203, 1.442695
        %v3226 = vpow.pop %v3225
        %v3227 = vmul.f32 %v3204, 1.442695
        %v3228 = vpow.pop %v3227
        %v3229 = vmul.f32 %v3205, 1.442695
        %v3230 = vpow.pop %v3229
        %v3231 = vmul.f32 %v3206, 1.442695
        %v3232 = vpow.pop %v3231
        %v3233 = vmul.f32 %v3207, 1.442695
        %v3234 = vpow.pop %v3233
        %v3235 = vmul.f32 %v3208, 1.442695
        %v3236 = vpow.pop %v3235
        %v3237 = vmul.f32 %v3209, 1.442695
        %v3238 = vpow.pop %v3237
        %v3239 = vmul.f32 %v3210, 1.442695
        %v3240 = vpow.pop %v3239
        %v3241 = vmul.f32 %v3211, 1.442695
        %v3242 = vpow.pop %v3241
        %v3243 = vmul.f32 %v3212, 1.442695
        %v3244 = vpow.pop %v3243
        %3245 = vadd.xlane.f32.xlu0 %v3214
        %v3246 = vpop.xlane.xlu0 %3245
        %3247 = vadd.xlane.f32.xlu0 %v3216
        %v3248 = vpop.xlane.xlu0 %3247
        %3249 = vadd.xlane.f32.xlu0 %v3218
        %v3250 = vpop.xlane.xlu0 %3249
        %3251 = vadd.xlane.f32.xlu0 %v3220
        %v3252 = vpop.xlane.xlu0 %3251
        %3253 = vadd.xlane.f32.xlu0 %v3222
        %v3254 = vpop.xlane.xlu0 %3253
        %3255 = vadd.xlane.f32.xlu0 %v3224
        %v3256 = vpop.xlane.xlu0 %3255
        %3257 = vadd.xlane.f32.xlu0 %v3226
        %v3258 = vpop.xlane.xlu0 %3257
        %3259 = vadd.xlane.f32.xlu0 %v3228
        %v3260 = vpop.xlane.xlu0 %3259
        %3261 = vadd.xlane.f32.xlu0 %v3230
        %v3262 = vpop.xlane.xlu0 %3261
        %3263 = vadd.xlane.f32.xlu0 %v3232
        %v3264 = vpop.xlane.xlu0 %3263
        %3265 = vadd.xlane.f32.xlu0 %v3234
        %v3266 = vpop.xlane.xlu0 %3265
        %3267 = vadd.xlane.f32.xlu0 %v3236
        %v3268 = vpop.xlane.xlu0 %3267
        %3269 = vadd.xlane.f32.xlu0 %v3238
        %v3270 = vpop.xlane.xlu0 %3269
        %3271 = vadd.xlane.f32.xlu0 %v3240
        %v3272 = vpop.xlane.xlu0 %3271
        %3273 = vadd.xlane.f32.xlu0 %v3242
        %v3274 = vpop.xlane.xlu0 %3273
        %3275 = vadd.xlane.f32.xlu0 %v3244
        %v3276 = vpop.xlane.xlu0 %3275
        %v3277 = vlog2.pop %v3246
        %v3278 = vmul.f32 %v3277, 0.6931472
        %v3279 = vlog2.pop %v3248
        %v3280 = vmul.f32 %v3279, 0.6931472
        %v3281 = vlog2.pop %v3250
        %v3282 = vmul.f32 %v3281, 0.6931472
        %v3283 = vlog2.pop %v3252
        %v3284 = vmul.f32 %v3283, 0.6931472
        %v3285 = vlog2.pop %v3254
        %v3286 = vmul.f32 %v3285, 0.6931472
        %v3287 = vlog2.pop %v3256
        %v3288 = vmul.f32 %v3287, 0.6931472
        %v3289 = vlog2.pop %v3258
        %v3290 = vmul.f32 %v3289, 0.6931472
        %v3291 = vlog2.pop %v3260
        %v3292 = vmul.f32 %v3291, 0.6931472
        %v3293 = vlog2.pop %v3262
        %v3294 = vmul.f32 %v3293, 0.6931472
        %v3295 = vlog2.pop %v3264
        %v3296 = vmul.f32 %v3295, 0.6931472
        %v3297 = vlog2.pop %v3266
        %v3298 = vmul.f32 %v3297, 0.6931472
        %v3299 = vlog2.pop %v3268
        %v3300 = vmul.f32 %v3299, 0.6931472
        %v3301 = vlog2.pop %v3270
        %v3302 = vmul.f32 %v3301, 0.6931472
        %v3303 = vlog2.pop %v3272
        %v3304 = vmul.f32 %v3303, 0.6931472
        %v3305 = vlog2.pop %v3274
        %v3306 = vmul.f32 %v3305, 0.6931472
        %v3307 = vlog2.pop %v3276
        %v3308 = vmul.f32 %v3307, 0.6931472
        %v3309 = vsub.f32 %v3197, %v3278
        %v3310 = vsub.f32 %v3198, %v3280
        %v3311 = vsub.f32 %v3199, %v3282
        %v3312 = vsub.f32 %v3200, %v3284
        %v3313 = vsub.f32 %v3201, %v3286
        %v3314 = vsub.f32 %v3202, %v3288
        %v3315 = vsub.f32 %v3203, %v3290
        %v3316 = vsub.f32 %v3204, %v3292
        %v3317 = vsub.f32 %v3205, %v3294
        %v3318 = vsub.f32 %v3206, %v3296
        %v3319 = vsub.f32 %v3207, %v3298
        %v3320 = vsub.f32 %v3208, %v3300
        %v3321 = vsub.f32 %v3209, %v3302
        %v3322 = vsub.f32 %v3210, %v3304
        %v3323 = vsub.f32 %v3211, %v3306
        %v3324 = vsub.f32 %v3212, %v3308
        %3325 = vst [vmem:[%s370] sm:$0xff] %v3309
        %3326 = vst [vmem:[%s370 + $0x8] sm:$0xff] %v3310
        %3327 = vst [vmem:[%s370 + $0x10] sm:$0xff] %v3311
        %3328 = vst [vmem:[%s370 + $0x18] sm:$0xff] %v3312
        %3329 = vst [vmem:[%s370 + $0x20] sm:$0xff] %v3313
        %3330 = vst [vmem:[%s370 + $0x28] sm:$0xff] %v3314
        %3331 = vst [vmem:[%s370 + $0x30] sm:$0xff] %v3315
        %3332 = vst [vmem:[%s370 + $0x38] sm:$0xff] %v3316
        %3333 = vst [vmem:[%s370 + $0x40] sm:$0xff] %v3317
        %3334 = vst [vmem:[%s370 + $0x48] sm:$0xff] %v3318
        %3335 = vst [vmem:[%s370 + $0x50] sm:$0xff] %v3319
        %3336 = vst [vmem:[%s370 + $0x58] sm:$0xff] %v3320
        %3337 = vst [vmem:[%s370 + $0x60] sm:$0xff] %v3321
        %3338 = vst [vmem:[%s370 + $0x68] sm:$0xff] %v3322
        %3339 = vst [vmem:[%s370 + $0x70] sm:$0xff] %v3323
        %3340 = vst [vmem:[%s370 + $0x78] sm:$0xff] %v3324
        %s3341 = sand.u32 %s248, 1
        %s3342 = scalar_lea.sflag [#allocation4], %s3341
        %s3343 = sand.u32 %s248, 1
        %s3344 = smul.addr %s3343, 128
        %s3345 = scalar_lea.vmem [#allocation5], %s3344
        // Predicated region
        $region65: #{tpu_custom_call.1} parent=59 // pred_check
          %p3346 = pneg %p258
        $region66: #{tpu_custom_call.1} parent=59 // pred_check_branch
          %3348 = sbr.rel (%p3346) target = $region68
        $region67: #{tpu_custom_call.1} parent=59 // pred_region
          %s3349 = smul.u32 16, %s25
          %s3351 = ssub.s32 2048, 2048
          %3352 = vsyncadd %s3342, %s3351
          %s3353 = smul.addr %s3349, 128
          %s3354 = scalar_lea.hbm %s10, %s3353
          %s3355 = sshll.u32 %s3345, 4
          %s3356 = int_to_ptr.vmem [resolvable:$true] %s3355
          %3361 = dma.vmem_to_hbm [thread:$0]  %s3356, 2048, %s3354, %s3342, 128, 128, 8
        $region68: #{tpu_custom_call.1} parent=59 // pred_fallthru
          _
      $region60: #{tpu_custom_call.1} parent=5 // pred_fallthru
        _
      %p3362 = scmp.le.s32.totalorder 2, %s20
      // Predicated region
      $region69: #{tpu_custom_call.1} parent=5 // pred_check
        %p3363 = pneg %p3362
      $region70: #{tpu_custom_call.1} parent=5 // pred_check_branch
        %3365 = sbr.rel (%p3363) target = $region72
      $region71: #{tpu_custom_call.1} parent=5 // pred_region
        %s3366 = ssub.s32 %s20, 2
        // Predicated region
        $region73: #{tpu_custom_call.1} parent=71 // pred_check
          %p3367 = pneg %p264
        $region74: #{tpu_custom_call.1} parent=71 // pred_check_branch
          %3369 = sbr.rel (%p3367) target = $region76
        $region75: #{tpu_custom_call.1} parent=71 // pred_region
          %s3370 = sand.u32 %s249, 1
          %s3371 = scalar_lea.sflag [#allocation4], %s3370
          %s3372 = sand.u32 %s249, 1
          %s3373 = smul.addr %s3372, 128
          %s3374 = scalar_lea.vmem [#allocation5], %s3373
          %3375 = dma.done %s3371, 2048
        $region76: #{tpu_custom_call.1} parent=71 // pred_fallthru
          _
      $region72: #{tpu_custom_call.1} parent=5 // pred_fallthru
        _
    $region6: #{tpu_custom_call.1} parent=1 // loop_footer
      %s24 = sadd.s32 1, %s20
    $region7: #{tpu_custom_call.1} parent=1 // loop_footer_branch
      %19 = sbr.rel target = $region3
    $region8: #{tpu_custom_call.1} parent=1 // loop_exit
      _
    %3376 = vsyncpa [#allocation3], 1
    %s3377 = scalar_lea.sflag [#allocation3], 1
    %3378 = vsyncpa %s3377, 1
    %3379 = vsyncpa [#allocation4], 1
    %s3380 = scalar_lea.sflag [#allocation4], 1
    %3381 = vsyncpa %s3380, 1

</llo_original>
